<compile_context>
chip_gen: v7x
topology: tpu7x:2x2x1
jax: 0.10.0
libtpu: 0.0.40
codegen_flags: <defaults>
</compile_context>

<pallas_src>
import math
import functools

import jax
import jax.numpy as jnp
from jax.experimental import pallas as pl
from jax.experimental.pallas import tpu as pltpu


def _pos_embed_kernel(emb_ref, o_ref, *, num_pos_feats, temperature):
    """emb_ref: (2, L) f32 — row 0 = y_embed, row 1 = x_embed (flattened h*W+w).
       o_ref:   (2, F, L) f32 — [0] = pos_y channels, [1] = pos_x channels."""
    F = num_pos_feats

    # ---- per-channel constants, shape (F, 1): tiny, hoisted off the hot path.
    j = jax.lax.broadcasted_iota(jnp.int32, (F, 1), 0)
    j_odd = j & 1                                       # 0 for even, 1 for odd
    # dim_t[j] = temperature ** (2*(j//2)/F); 2*(j//2) == j - (j & 1) (int ops).
    exponent = (j - j_odd).astype(jnp.float32) * (1.0 / float(F))
    # pow via exp/log (Mosaic-safe); reciprocal once so the hot path multiplies.
    # Note: vs the reference's "pow then divide" this is <= a few ulp of phase
    # error; only visible for very large un-normalized coordinates.
    dim_t = jnp.exp(exponent * jnp.float32(math.log(float(temperature))))
    inv_dim_t = 1.0 / dim_t                             # (F, 1)
    # interleaved sin/cos: even channel -> sin, odd -> cos == sin(x + pi/2)
    phase_off = j_odd.astype(jnp.float32) * jnp.float32(0.5 * math.pi)  # (F, 1)

    emb = emb_ref[...]                                  # (2, L), tiny load
    y_embed = emb[0:1, :]                               # (1, L)
    x_embed = emb[1:2, :]                               # (1, L)

    # ---- hot path: one mul + one add + one sin per output element.
    o_ref[0] = jnp.sin(y_embed * inv_dim_t + phase_off)
    o_ref[1] = jnp.sin(x_embed * inv_dim_t + phase_off)


def _pick_lane_tile(HW, C):
    """Largest multiple-of-128 divisor of HW whose (C, tile) f32 block <= ~4 MiB."""
    if HW % 128 != 0:
        return HW                    # block equals full extent (always legal)
    budget = max(128, (4 << 20) // (C * 4))
    best = 128
    for t in range(128, min(HW, budget) + 1, 128):
        if HW % t == 0:
            best = t
    return best


def position_embedding_sine(x, num_pos_feats=64, temperature=10000,
                            normalize=False, scale=None):
    """Returns pos of shape (B, 2*num_pos_feats, H, W), float32 (NCHW)."""
    if scale is not None and normalize is False:
        raise ValueError("normalize should be True if scale is passed")
    if scale is None:
        scale = 2 * math.pi

    B = x.shape[0]
    H, W = x.shape[-2], x.shape[-1]
    F = num_pos_feats
    C = 2 * F
    HW = H * W

    # Row/col "cumsum of the all-ones mask" embeddings, built exactly as the
    # reference (cumsum + divide by last element), flattened to a (2, H*W)
    # vector input (~1.5% of output bytes).  Keeps per-lane integer div/mod
    # out of the kernel and keeps the real normalize semantics.
    # TODO(synk): thread a real padding mask through here if one is ever added.
    ones = jnp.ones((H, W), jnp.float32)
    y_embed = jnp.cumsum(ones, axis=0)
    x_embed = jnp.cumsum(ones, axis=1)
    if normalize:
        eps = 1e-6
        y_embed = y_embed / (y_embed[-1:, :] + eps) * scale
        x_embed = x_embed / (x_embed[:, -1:] + eps) * scale
    emb = jnp.stack([y_embed.reshape(HW), x_embed.reshape(HW)], axis=0)  # (2, HW)

    lane_tile = _pick_lane_tile(HW, C)
    grid = (HW // lane_tile,)

    kernel = functools.partial(_pos_embed_kernel,
                               num_pos_feats=F, temperature=temperature)

    slab = pl.pallas_call(
        kernel,
        out_shape=jax.ShapeDtypeStruct((2, F, HW), jnp.float32),
        grid_spec=pltpu.PrefetchScalarGridSpec(
            num_scalar_prefetch=0,
            grid=grid,
            in_specs=[pl.BlockSpec((2, lane_tile), lambda i: (0, i))],
            out_specs=pl.BlockSpec((2, F, lane_tile), lambda i: (0, 0, i)),
        ),
        compiler_params=pltpu.CompilerParams(
            dimension_semantics=("parallel",)),
    )(emb)

    # (2, F, HW) -> (C, H, W): contiguous reshape (pos_y channels then pos_x),
    # then broadcast over the identical batch entries (fuses into consumers).
    pos = slab.reshape(C, H, W)
    return jnp.broadcast_to(pos[None], (B, C, H, W))


def _reference_jax(x, num_pos_feats=64, temperature=10000,
                   normalize=False, scale=None):
    """Pure-JAX reference mirroring the PyTorch forward, for correctness check."""
    if scale is None:
        scale = 2 * math.pi
    B = x.shape[0]
    H, W = x.shape[-2], x.shape[-1]
    not_mask = jnp.ones((B, H, W), jnp.float32)
    y_embed = jnp.cumsum(not_mask, axis=1)
    x_embed = jnp.cumsum(not_mask, axis=2)
    if normalize:
        eps = 1e-6
        y_embed = y_embed / (y_embed[:, -1:, :] + eps) * scale
        x_embed = x_embed / (x_embed[:, :, -1:] + eps) * scale
    dim_t = jnp.arange(num_pos_feats, dtype=jnp.float32)
    dim_t = temperature ** (2 * jnp.floor(dim_t / 2) / num_pos_feats)
    pos_x = x_embed[:, :, :, None] / dim_t
    pos_y = y_embed[:, :, :, None] / dim_t
    pos_x = jnp.stack((jnp.sin(pos_x[..., 0::2]), jnp.cos(pos_x[..., 1::2])),
                      axis=4).reshape(B, H, W, num_pos_feats)
    pos_y = jnp.stack((jnp.sin(pos_y[..., 0::2]), jnp.cos(pos_y[..., 1::2])),
                      axis=4).reshape(B, H, W, num_pos_feats)
    pos = jnp.concatenate((pos_y, pos_x), axis=3)
    return jnp.transpose(pos, (0, 3, 1, 2))


if __name__ == "__main__":
    key = jax.random.PRNGKey(0)
    # x: NCHW input; only its shape is consumed by the module.
    x = jax.random.normal(key, (2, 4, 16, 16), dtype=jnp.float32)

    pos = position_embedding_sine(x, num_pos_feats=64, temperature=10000,
                                  normalize=False)
    pos = jax.block_until_ready(pos)
    ref = _reference_jax(x, num_pos_feats=64, temperature=10000, normalize=False)
    assert pos.shape == (2, 128, 16, 16), pos.shape
    assert jnp.allclose(pos, ref, atol=1e-5, rtol=1e-5)

    # also check the normalize=True path
    pos_n = jax.block_until_ready(
        position_embedding_sine(x, num_pos_feats=64, normalize=True))
    ref_n = _reference_jax(x, num_pos_feats=64, normalize=True)
    assert jnp.allclose(pos_n, ref_n, atol=1e-5, rtol=1e-5)

    print("KERNEL_OK")
</pallas_src>

<mosaic_0001>
module attributes {stable_mosaic.version = 11 : i64} {
  func.func @_pos_embed_kernel(%arg0: i32, %arg1: memref<2x256xf32, #tpu.memory_space<vmem>>, %arg2: memref<2x64x256xf32, #tpu.memory_space<vmem>>) attributes {dimension_semantics = [#tpu.dimension_semantics<parallel>], iteration_bounds = array<i64: 1>, scalar_prefetch = 0 : i64, scratch_operands = 0 : i64, tpu.core_type = #tpu.core_type<tc>, window_params = [{transform_indices = @transform_0, window_bounds = array<i64: 2, 256>}, {transform_indices = @transform_1, window_bounds = array<i64: 2, 64, 256>}]} {
    %0 = tpu.iota {dimensions = array<i32: 0>} : vector<64x1xi32>
    %c1_i32 = arith.constant 1 : i32
    %1 = vector.broadcast %c1_i32 : i32 to vector<64x1xi32>
    %2 = arith.andi %0, %1 : vector<64x1xi32>
    %3 = arith.subi %0, %2 : vector<64x1xi32>
    %4 = arith.sitofp %3 : vector<64x1xi32> to vector<64x1xf32>
    %cst = arith.constant 1.562500e-02 : f32
    %5 = vector.broadcast %cst : f32 to vector<64x1xf32>
    %6 = arith.mulf %4, %5 : vector<64x1xf32>
    %cst_0 = arith.constant 9.21034049 : f32
    %7 = vector.broadcast %cst_0 : f32 to vector<64x1xf32>
    %8 = arith.mulf %6, %7 : vector<64x1xf32>
    %9 = math.exp %8 : vector<64x1xf32>
    %cst_1 = arith.constant 1.000000e+00 : f32
    %10 = vector.broadcast %cst_1 : f32 to vector<64x1xf32>
    %11 = arith.divf %10, %9 : vector<64x1xf32>
    %12 = arith.sitofp %2 : vector<64x1xi32> to vector<64x1xf32>
    %cst_2 = arith.constant 1.57079637 : f32
    %13 = vector.broadcast %cst_2 : f32 to vector<64x1xf32>
    %14 = arith.mulf %12, %13 : vector<64x1xf32>
    %c0 = arith.constant 0 : index
    %c0_3 = arith.constant 0 : index
    %15 = vector.load %arg1[%c0, %c0_3] : memref<2x256xf32, #tpu.memory_space<vmem>>, vector<2x256xf32>
    %16 = vector.extract_strided_slice %15 {offsets = [0, 0], sizes = [1, 256], strides = [1, 1]} : vector<2x256xf32> to vector<1x256xf32>
    %17 = vector.extract_strided_slice %15 {offsets = [1, 0], sizes = [1, 256], strides = [1, 1]} : vector<2x256xf32> to vector<1x256xf32>
    %18 = vector.broadcast %16 : vector<1x256xf32> to vector<64x256xf32>
    %19 = vector.broadcast %11 : vector<64x1xf32> to vector<64x256xf32>
    %20 = arith.mulf %18, %19 : vector<64x256xf32>
    %21 = vector.broadcast %14 : vector<64x1xf32> to vector<64x256xf32>
    %22 = arith.addf %20, %21 : vector<64x256xf32>
    %23 = math.sin %22 : vector<64x256xf32>
    %c0_4 = arith.constant 0 : index
    %c0_5 = arith.constant 0 : index
    %c0_6 = arith.constant 0 : index
    %24 = vector.load %arg2[%c0_4, %c0_5, %c0_6] : memref<2x64x256xf32, #tpu.memory_space<vmem>>, vector<1x64x256xf32>
    %25 = vector.shape_cast %24 : vector<1x64x256xf32> to vector<64x256xf32>
    %26 = vector.shape_cast %23 : vector<64x256xf32> to vector<1x64x256xf32>
    tpu.vector_store %arg2[%c0_4, %c0_5, %c0_6], %26 {strides = array<i32>} : memref<2x64x256xf32, #tpu.memory_space<vmem>>, vector<1x64x256xf32>,
    %27 = vector.broadcast %17 : vector<1x256xf32> to vector<64x256xf32>
    %28 = vector.broadcast %11 : vector<64x1xf32> to vector<64x256xf32>
    %29 = arith.mulf %27, %28 : vector<64x256xf32>
    %30 = vector.broadcast %14 : vector<64x1xf32> to vector<64x256xf32>
    %31 = arith.addf %29, %30 : vector<64x256xf32>
    %32 = math.sin %31 : vector<64x256xf32>
    %c1 = arith.constant 1 : index
    %c0_7 = arith.constant 0 : index
    %c0_8 = arith.constant 0 : index
    %33 = vector.load %arg2[%c1, %c0_7, %c0_8] : memref<2x64x256xf32, #tpu.memory_space<vmem>>, vector<1x64x256xf32>
    %34 = vector.shape_cast %33 : vector<1x64x256xf32> to vector<64x256xf32>
    %35 = vector.shape_cast %32 : vector<64x256xf32> to vector<1x64x256xf32>
    tpu.vector_store %arg2[%c1, %c0_7, %c0_8], %35 {strides = array<i32>} : memref<2x64x256xf32, #tpu.memory_space<vmem>>, vector<1x64x256xf32>,
    return
  }
  func.func @transform_0(%arg0: i32) -> (i32, i32) {
    %c0_i32 = arith.constant 0 : i32
    %c0_i32_0 = arith.constant 0 : i32
    return %c0_i32, %arg0 : i32, i32
  }
  func.func @transform_1(%arg0: i32) -> (i32, i32, i32) {
    %c0_i32 = arith.constant 0 : i32
    %c0_i32_0 = arith.constant 0 : i32
    %c0_i32_1 = arith.constant 0 : i32
    return %c0_i32, %c0_i32_0, %arg0 : i32, i32, i32
  }
}

</mosaic_0001>

<llo_original>
// kernel: tpu_custom_call.1
$region0: #{tpu_custom_call.1}
  #allocation0 [shape = 'u32[]', space=smem, size = 0x4, offset = 0x4, fixed_abs, tag = 'smem constant byte address 0x4 - core index']
  #allocation1 [shape = 'u32[144,128]{1,0:T(1,128)}', space=vmem, size = 0x12000, scoped, tag = 'internal scratch']
  %s0 = inlined_call_operand.hbm [shape: f32[2,256], index: 0, kind: input, shape index: {}]
  %s1 = inlined_call_operand.hbm [shape: f32[2,64,256], index: 1, kind: output, shape index: {}]
  %s2 = sld [smem:[#allocation0]]
  $region18: #{tpu_custom_call.1} parent=0
    _
  %s4 = ssub.s32 1, %s2
  %s5 = scalar_select 0, %s4, %s2
  $region1: #{tpu_custom_call.1} parent=0
    #allocation2 [shape = 'u8[2048]{0}', space=vmem, size = 0x800, scoped, tag = 'input window, operand 0, single buffered']
    #allocation3 [shape = 's32[1]{0}', space=sflag, size = 0x4, scoped, tag = 'scoped memory for tpu_custom_call.1']
    #allocation4 [shape = 's32[1]{0}', space=sflag, size = 0x4, scoped, tag = 'scoped memory for tpu_custom_call.1']
    #allocation5 [shape = 'u8[131072]{0}', space=vmem, size = 0x20000, scoped, tag = 'output window, operand 0, single buffered']
    %6 = vsyncpa [#allocation3], 0
    %7 = vsyncpa [#allocation4], 0
    // Predicated region
    $region2: #{tpu_custom_call.1} parent=1 // pred_check
      _
    $region3: #{tpu_custom_call.1} parent=1 // pred_check_branch
      %9 = sbr.rel (0) target = $region5
    $region4: #{tpu_custom_call.1} parent=1 // pred_region
      %s11 = ssub.s32 64, 64
      %12 = vsyncadd [#allocation3], %s11
      %s14 = sshll.u32 [#allocation2], 4
      %s15 = int_to_ptr.vmem [resolvable:$true] %s14
      %17 = dma.hbm_to_vmem [thread:$0]  %s0, 64, %s15, [#allocation3]
    $region5: #{tpu_custom_call.1} parent=1 // pred_fallthru
      _
    // Predicated region
    $region6: #{tpu_custom_call.1} parent=1 // pred_check
      _
    $region7: #{tpu_custom_call.1} parent=1 // pred_check_branch
      %19 = sbr.rel (0) target = $region9
    $region8: #{tpu_custom_call.1} parent=1 // pred_region
      %20 = dma.done [#allocation3], 64
    $region9: #{tpu_custom_call.1} parent=1 // pred_fallthru
      _
    %v21 = vlaneseq
    %v22 = vshrl.u32 %v21, 7
    %v23 = vadd.s32 %v22, 8
    %v24 = vadd.s32 %v22, 16
    %v25 = vadd.s32 %v22, 24
    %v26 = vadd.s32 %v22, 32
    %v27 = vadd.s32 %v22, 40
    %v28 = vadd.s32 %v22, 48
    %v29 = vadd.s32 %v22, 56
    %v30 = vand.u32 %v22, 1
    %v31 = vand.u32 %v23, 1
    %v32 = vand.u32 %v24, 1
    %v33 = vand.u32 %v25, 1
    %v34 = vand.u32 %v26, 1
    %v35 = vand.u32 %v27, 1
    %v36 = vand.u32 %v28, 1
    %v37 = vand.u32 %v29, 1
    %v38 = vsub.s32 %v22, %v30
    %v39 = vsub.s32 %v23, %v31
    %v40 = vsub.s32 %v24, %v32
    %v41 = vsub.s32 %v25, %v33
    %v42 = vsub.s32 %v26, %v34
    %v43 = vsub.s32 %v27, %v35
    %v44 = vsub.s32 %v28, %v36
    %v45 = vsub.s32 %v29, %v37
    %v46 = vcvt.s32.f32 %v38
    %v47 = vcvt.s32.f32 %v39
    %v48 = vcvt.s32.f32 %v40
    %v49 = vcvt.s32.f32 %v41
    %v50 = vcvt.s32.f32 %v42
    %v51 = vcvt.s32.f32 %v43
    %v52 = vcvt.s32.f32 %v44
    %v53 = vcvt.s32.f32 %v45
    %v54 = vmul.f32 %v46, 0.015625
    %v55 = vmul.f32 %v47, 0.015625
    %v56 = vmul.f32 %v48, 0.015625
    %v57 = vmul.f32 %v49, 0.015625
    %v58 = vmul.f32 %v50, 0.015625
    %v59 = vmul.f32 %v51, 0.015625
    %v60 = vmul.f32 %v52, 0.015625
    %v61 = vmul.f32 %v53, 0.015625
    %v62 = vmul.f32 %v54, 9.2103405
    %v63 = vmul.f32 %v55, 9.2103405
    %v64 = vmul.f32 %v56, 9.2103405
    %v65 = vmul.f32 %v57, 9.2103405
    %v66 = vmul.f32 %v58, 9.2103405
    %v67 = vmul.f32 %v59, 9.2103405
    %v68 = vmul.f32 %v60, 9.2103405
    %v69 = vmul.f32 %v61, 9.2103405
    %v70 = vmul.f32 %v62, 1.442695
    %v71 = vpow.pop %v70
    %v72 = vmul.f32 %v63, 1.442695
    %v73 = vpow.pop %v72
    %v74 = vmul.f32 %v64, 1.442695
    %v75 = vpow.pop %v74
    %v76 = vmul.f32 %v65, 1.442695
    %v77 = vpow.pop %v76
    %v78 = vmul.f32 %v66, 1.442695
    %v79 = vpow.pop %v78
    %v80 = vmul.f32 %v67, 1.442695
    %v81 = vpow.pop %v80
    %v82 = vmul.f32 %v68, 1.442695
    %v83 = vpow.pop %v82
    %v84 = vmul.f32 %v69, 1.442695
    %v85 = vpow.pop %v84
    %v86 = vrcp.pop %v71
    %v87 = vmul.f32 1.0, %v86
    %v88 = vrcp.pop %v73
    %v89 = vmul.f32 1.0, %v88
    %v90 = vrcp.pop %v75
    %v91 = vmul.f32 1.0, %v90
    %v92 = vrcp.pop %v77
    %v93 = vmul.f32 1.0, %v92
    %v94 = vrcp.pop %v79
    %v95 = vmul.f32 1.0, %v94
    %v96 = vrcp.pop %v81
    %v97 = vmul.f32 1.0, %v96
    %v98 = vrcp.pop %v83
    %v99 = vmul.f32 1.0, %v98
    %v100 = vrcp.pop %v85
    %v101 = vmul.f32 1.0, %v100
    %v102 = vcvt.s32.f32 %v30
    %v103 = vcvt.s32.f32 %v31
    %v104 = vcvt.s32.f32 %v32
    %v105 = vcvt.s32.f32 %v33
    %v106 = vcvt.s32.f32 %v34
    %v107 = vcvt.s32.f32 %v35
    %v108 = vcvt.s32.f32 %v36
    %v109 = vcvt.s32.f32 %v37
    %v110 = vmul.f32 %v102, 1.5707964
    %v111 = vmul.f32 %v103, 1.5707964
    %v112 = vmul.f32 %v104, 1.5707964
    %v113 = vmul.f32 %v105, 1.5707964
    %v114 = vmul.f32 %v106, 1.5707964
    %v115 = vmul.f32 %v107, 1.5707964
    %v116 = vmul.f32 %v108, 1.5707964
    %v117 = vmul.f32 %v109, 1.5707964
    %v118 = vld [vmem:[#allocation2] sm:$0xf]
    %v120 = vlaneseq
    %v121 = vshrl.u32 %v120, 7
    %v122 = vsub.s32 0, %v121
    %v123 = vrot.slane %v118, %v122
    %v124 = vlaneseq
    %v125 = vshrl.u32 %v124, 7
    %v126 = vsub.s32 2, %v125
    %v127 = vrot.slane %v118, %v126
    %v130 = vlaneseq
    %v131 = vshrl.u32 %v130, 7
    %v132 = vsub.s32 0, %v131
    %v133 = vrot.slane %v123, %v132
    %v134 = vlaneseq
    %v135 = vshrl.u32 %v134, 7
    %v136 = vsub.s32 0, %v135
    %v137 = vrot.slane %v127, %v136
    %v138 = vmul.f32 %v133, %v87
    %v139 = vmul.f32 %v137, %v87
    %v140 = vmul.f32 %v133, %v89
    %v141 = vmul.f32 %v137, %v89
    %v142 = vmul.f32 %v133, %v91
    %v143 = vmul.f32 %v137, %v91
    %v144 = vmul.f32 %v133, %v93
    %v145 = vmul.f32 %v137, %v93
    %v146 = vmul.f32 %v133, %v95
    %v147 = vmul.f32 %v137, %v95
    %v148 = vmul.f32 %v133, %v97
    %v149 = vmul.f32 %v137, %v97
    %v150 = vmul.f32 %v133, %v99
    %v151 = vmul.f32 %v137, %v99
    %v152 = vmul.f32 %v133, %v101
    %v153 = vmul.f32 %v137, %v101
    %v154 = vadd.f32 %v138, %v110
    %v155 = vadd.f32 %v139, %v110
    %v156 = vadd.f32 %v140, %v111
    %v157 = vadd.f32 %v141, %v111
    %v158 = vadd.f32 %v142, %v112
    %v159 = vadd.f32 %v143, %v112
    %v160 = vadd.f32 %v144, %v113
    %v161 = vadd.f32 %v145, %v113
    %v162 = vadd.f32 %v146, %v114
    %v163 = vadd.f32 %v147, %v114
    %v164 = vadd.f32 %v148, %v115
    %v165 = vadd.f32 %v149, %v115
    %v166 = vadd.f32 %v150, %v116
    %v167 = vadd.f32 %v151, %v116
    %v168 = vadd.f32 %v152, %v117
    %v169 = vadd.f32 %v153, %v117
    %v170 = vand.u32 2147483647, %v154
    %vm171 = vcmp.le.f32.partialorder %v170, 0.7853982
    %vm172 = vcmp.lt.s32.totalorder %v154, 0
    %v173 = vand.u32 %v154, 2139095040
    %v174 = vshrl.u32 %v173, 23
    %v175 = vsub.s32 %v174, 127
    %v176 = vand.u32 2147483647, %v154
    %v177 = vand.u32 %v176, 8388607
    %v178 = vor.u32 %v177, 8388608
    %v179 = vsub.s32 0, %v178
    %v180 = vadd.s32 %v175, 1
    %vm181 = vcmp.gt.s32.totalorder %v180, 0
    %v182 = vsel %vm181, %v180, 0
    %v183 = vshrl.u32 %v182, 5
    %v184 = vand.u32 %v182, 31
    %v185 = vsub.s32 32, %v184
    %v186 = vshrl.u32 683565275, %v185
    %v187 = vshll.u32 683565275, %v184
    %v188 = vshrl.u32 2475754826, %v185
    %v189 = vor.u32 %v187, %v188
    %v190 = vshll.u32 2475754826, %v184
    %v191 = vshrl.u32 2131351028, %v185
    %v192 = vor.u32 %v190, %v191
    %v193 = vshll.u32 2131351028, %v184
    %v194 = vshrl.u32 2102212464, %v185
    %v195 = vor.u32 %v193, %v194
    %v196 = vshll.u32 2102212464, %v184
    %v197 = vshrl.u32 920167782, %v185
    %v198 = vor.u32 %v196, %v197
    %v199 = vshll.u32 920167782, %v184
    %v200 = vshrl.u32 1326507024, %v185
    %v201 = vor.u32 %v199, %v200
    %vm202 = vcmp.lt.s32.totalorder %v183, 1
    %vm203 = vcmp.lt.s32.totalorder %v183, 2
    %vm204 = vcmp.lt.s32.totalorder %v183, 3
    %vm205 = vcmp.lt.s32.totalorder %v183, 4
    %v206 = vsel %vm202, %v186, %v189
    %v207 = vsel %vm205, %v195, 2102212464
    %v208 = vsel %vm204, %v192, %v207
    %v209 = vsel %vm203, %v206, %v208
    %v210 = vsel %vm202, %v189, %v192
    %v211 = vsel %vm205, %v198, 920167782
    %v212 = vsel %vm204, %v195, %v211
    %v213 = vsel %vm203, %v210, %v212
    %v214 = vsel %vm202, %v192, %v195
    %v215 = vsel %vm205, %v201, 1326507024
    %v216 = vsel %vm204, %v198, %v215
    %v217 = vsel %vm203, %v214, %v216
    %v218 = vshll.u32 %v178, 8
    %v219 = vmul.u32.u64.compose %v218, %v217
    %v220 = vextract.low.u32 %v219
    %v221 = vextract.high.u32 %v219
    %v222 = vmul.u32.u64.compose %v218, %v213
    %v223 = vextract.low.u32 %v222
    %v224 = vextract.high.u32 %v222
    %v225 = vmul.u32 %v218, %v209
    %v226 = vadd.s32 %v221, %v223
    %vm227 = vc.u32 %v221, %v223
    %v228 = vadd.s32 %v224, 1
    %v229 = vsel %vm227, %v228, %v224
    %v230 = vadd.s32 %v225, %v229
    %v231 = vadd.s32 %v230, 536870912
    %v232 = vshrl.u32 %v231, 30
    %v233 = vshll.u32 %v232, 30
    %v234 = vsub.s32 %v230, %v233
    %vm235 = vcmp.lt.s32.totalorder %v234, 0
    %v236 = vsub.s32 0, %v234
    %v237 = vsel %vm235, %v236, %v234
    %v238 = vclz %v237
    %v239 = vsub.s32 %v238, 2
    %vm240 = vcmp.gt.s32.totalorder 0, %v239
    %v241 = vsel %vm240, 0, %v239
    %v242 = vsub.s32 32, %v241
    %v243 = vshll.u32 %v234, %v241
    %v244 = vshrl.u32 %v226, %v242
    %v245 = vor.u32 %v243, %v244
    %v246 = vsub.s32 4294967266, %v241
    %v247 = vadd.s32 %v246, 127
    %v248 = vshll.u32 %v247, 23
    %v249 = vor.u32 4788187, %v248
    %v250 = vand.u32 2147483647, %v249
    %v252 = vcvt.s32.f32 %v245
    %v253 = vmul.f32 %v252, %v250
    %v254 = vxor.u32 %v253, 2147483648
    %v255 = vsel %vm172, %v254, %v253
    %v256 = vsub.s32 4, %v232
    %v257 = vsel %vm172, %v256, %v232
    %v258 = vsel %vm171, %v154, %v255
    %v259 = vsel %vm171, 0, %v257
    %v260 = vcosq.f32.pop %v258
    %v261 = vsinq.f32.pop %v258
    %vm262 = vweird.f32 %v154
    %v263 = vadd.s32 %v259, 3
    %v264 = vand.u32 %v263, 3
    %vm265 = vcmp.lt.s32.totalorder %v264, 2
    %vm266 = vcmp.eq.s32.totalorder %v264, 0
    %v267 = vxor.u32 %v261, 2147483648
    %v268 = vsel %vm266, %v260, %v267
    %vm269 = vcmp.eq.s32.totalorder %v264, 2
    %v270 = vxor.u32 %v260, 2147483648
    %v271 = vsel %vm269, %v270, %v261
    %v272 = vsel %vm265, %v268, %v271
    %v273 = vsel %vm262, nan, %v272
    %v274 = vand.u32 2147483647, %v155
    %vm275 = vcmp.le.f32.partialorder %v274, 0.7853982
    %vm276 = vcmp.lt.s32.totalorder %v155, 0
    %v277 = vand.u32 %v155, 2139095040
    %v278 = vshrl.u32 %v277, 23
    %v279 = vsub.s32 %v278, 127
    %v280 = vand.u32 2147483647, %v155
    %v281 = vand.u32 %v280, 8388607
    %v282 = vor.u32 %v281, 8388608
    %v283 = vsub.s32 0, %v282
    %v284 = vadd.s32 %v279, 1
    %vm285 = vcmp.gt.s32.totalorder %v284, 0
    %v286 = vsel %vm285, %v284, 0
    %v287 = vshrl.u32 %v286, 5
    %v288 = vand.u32 %v286, 31
    %v289 = vsub.s32 32, %v288
    %v290 = vshrl.u32 683565275, %v289
    %v291 = vshll.u32 683565275, %v288
    %v292 = vshrl.u32 2475754826, %v289
    %v293 = vor.u32 %v291, %v292
    %v294 = vshll.u32 2475754826, %v288
    %v295 = vshrl.u32 2131351028, %v289
    %v296 = vor.u32 %v294, %v295
    %v297 = vshll.u32 2131351028, %v288
    %v298 = vshrl.u32 2102212464, %v289
    %v299 = vor.u32 %v297, %v298
    %v300 = vshll.u32 2102212464, %v288
    %v301 = vshrl.u32 920167782, %v289
    %v302 = vor.u32 %v300, %v301
    %v303 = vshll.u32 920167782, %v288
    %v304 = vshrl.u32 1326507024, %v289
    %v305 = vor.u32 %v303, %v304
    %vm306 = vcmp.lt.s32.totalorder %v287, 1
    %vm307 = vcmp.lt.s32.totalorder %v287, 2
    %vm308 = vcmp.lt.s32.totalorder %v287, 3
    %vm309 = vcmp.lt.s32.totalorder %v287, 4
    %v310 = vsel %vm306, %v290, %v293
    %v311 = vsel %vm309, %v299, 2102212464
    %v312 = vsel %vm308, %v296, %v311
    %v313 = vsel %vm307, %v310, %v312
    %v314 = vsel %vm306, %v293, %v296
    %v315 = vsel %vm309, %v302, 920167782
    %v316 = vsel %vm308, %v299, %v315
    %v317 = vsel %vm307, %v314, %v316
    %v318 = vsel %vm306, %v296, %v299
    %v319 = vsel %vm309, %v305, 1326507024
    %v320 = vsel %vm308, %v302, %v319
    %v321 = vsel %vm307, %v318, %v320
    %v322 = vshll.u32 %v282, 8
    %v323 = vmul.u32.u64.compose %v322, %v321
    %v324 = vextract.low.u32 %v323
    %v325 = vextract.high.u32 %v323
    %v326 = vmul.u32.u64.compose %v322, %v317
    %v327 = vextract.low.u32 %v326
    %v328 = vextract.high.u32 %v326
    %v329 = vmul.u32 %v322, %v313
    %v330 = vadd.s32 %v325, %v327
    %vm331 = vc.u32 %v325, %v327
    %v332 = vadd.s32 %v328, 1
    %v333 = vsel %vm331, %v332, %v328
    %v334 = vadd.s32 %v329, %v333
    %v335 = vadd.s32 %v334, 536870912
    %v336 = vshrl.u32 %v335, 30
    %v337 = vshll.u32 %v336, 30
    %v338 = vsub.s32 %v334, %v337
    %vm339 = vcmp.lt.s32.totalorder %v338, 0
    %v340 = vsub.s32 0, %v338
    %v341 = vsel %vm339, %v340, %v338
    %v342 = vclz %v341
    %v343 = vsub.s32 %v342, 2
    %vm344 = vcmp.gt.s32.totalorder 0, %v343
    %v345 = vsel %vm344, 0, %v343
    %v346 = vsub.s32 32, %v345
    %v347 = vshll.u32 %v338, %v345
    %v348 = vshrl.u32 %v330, %v346
    %v349 = vor.u32 %v347, %v348
    %v350 = vsub.s32 4294967266, %v345
    %v351 = vadd.s32 %v350, 127
    %v352 = vshll.u32 %v351, 23
    %v353 = vor.u32 4788187, %v352
    %v354 = vand.u32 2147483647, %v353
    %v356 = vcvt.s32.f32 %v349
    %v357 = vmul.f32 %v356, %v354
    %v358 = vxor.u32 %v357, 2147483648
    %v359 = vsel %vm276, %v358, %v357
    %v360 = vsub.s32 4, %v336
    %v361 = vsel %vm276, %v360, %v336
    %v362 = vsel %vm275, %v155, %v359
    %v363 = vsel %vm275, 0, %v361
    %v364 = vcosq.f32.pop %v362
    %v365 = vsinq.f32.pop %v362
    %vm366 = vweird.f32 %v155
    %v367 = vadd.s32 %v363, 3
    %v368 = vand.u32 %v367, 3
    %vm369 = vcmp.lt.s32.totalorder %v368, 2
    %vm370 = vcmp.eq.s32.totalorder %v368, 0
    %v371 = vxor.u32 %v365, 2147483648
    %v372 = vsel %vm370, %v364, %v371
    %vm373 = vcmp.eq.s32.totalorder %v368, 2
    %v374 = vxor.u32 %v364, 2147483648
    %v375 = vsel %vm373, %v374, %v365
    %v376 = vsel %vm369, %v372, %v375
    %v377 = vsel %vm366, nan, %v376
    %v378 = vand.u32 2147483647, %v156
    %vm379 = vcmp.le.f32.partialorder %v378, 0.7853982
    %vm380 = vcmp.lt.s32.totalorder %v156, 0
    %v381 = vand.u32 %v156, 2139095040
    %v382 = vshrl.u32 %v381, 23
    %v383 = vsub.s32 %v382, 127
    %v384 = vand.u32 2147483647, %v156
    %v385 = vand.u32 %v384, 8388607
    %v386 = vor.u32 %v385, 8388608
    %v387 = vsub.s32 0, %v386
    %v388 = vadd.s32 %v383, 1
    %vm389 = vcmp.gt.s32.totalorder %v388, 0
    %v390 = vsel %vm389, %v388, 0
    %v391 = vshrl.u32 %v390, 5
    %v392 = vand.u32 %v390, 31
    %v393 = vsub.s32 32, %v392
    %v394 = vshrl.u32 683565275, %v393
    %v395 = vshll.u32 683565275, %v392
    %v396 = vshrl.u32 2475754826, %v393
    %v397 = vor.u32 %v395, %v396
    %v398 = vshll.u32 2475754826, %v392
    %v399 = vshrl.u32 2131351028, %v393
    %v400 = vor.u32 %v398, %v399
    %v401 = vshll.u32 2131351028, %v392
    %v402 = vshrl.u32 2102212464, %v393
    %v403 = vor.u32 %v401, %v402
    %v404 = vshll.u32 2102212464, %v392
    %v405 = vshrl.u32 920167782, %v393
    %v406 = vor.u32 %v404, %v405
    %v407 = vshll.u32 920167782, %v392
    %v408 = vshrl.u32 1326507024, %v393
    %v409 = vor.u32 %v407, %v408
    %vm410 = vcmp.lt.s32.totalorder %v391, 1
    %vm411 = vcmp.lt.s32.totalorder %v391, 2
    %vm412 = vcmp.lt.s32.totalorder %v391, 3
    %vm413 = vcmp.lt.s32.totalorder %v391, 4
    %v414 = vsel %vm410, %v394, %v397
    %v415 = vsel %vm413, %v403, 2102212464
    %v416 = vsel %vm412, %v400, %v415
    %v417 = vsel %vm411, %v414, %v416
    %v418 = vsel %vm410, %v397, %v400
    %v419 = vsel %vm413, %v406, 920167782
    %v420 = vsel %vm412, %v403, %v419
    %v421 = vsel %vm411, %v418, %v420
    %v422 = vsel %vm410, %v400, %v403
    %v423 = vsel %vm413, %v409, 1326507024
    %v424 = vsel %vm412, %v406, %v423
    %v425 = vsel %vm411, %v422, %v424
    %v426 = vshll.u32 %v386, 8
    %v427 = vmul.u32.u64.compose %v426, %v425
    %v428 = vextract.low.u32 %v427
    %v429 = vextract.high.u32 %v427
    %v430 = vmul.u32.u64.compose %v426, %v421
    %v431 = vextract.low.u32 %v430
    %v432 = vextract.high.u32 %v430
    %v433 = vmul.u32 %v426, %v417
    %v434 = vadd.s32 %v429, %v431
    %vm435 = vc.u32 %v429, %v431
    %v436 = vadd.s32 %v432, 1
    %v437 = vsel %vm435, %v436, %v432
    %v438 = vadd.s32 %v433, %v437
    %v439 = vadd.s32 %v438, 536870912
    %v440 = vshrl.u32 %v439, 30
    %v441 = vshll.u32 %v440, 30
    %v442 = vsub.s32 %v438, %v441
    %vm443 = vcmp.lt.s32.totalorder %v442, 0
    %v444 = vsub.s32 0, %v442
    %v445 = vsel %vm443, %v444, %v442
    %v446 = vclz %v445
    %v447 = vsub.s32 %v446, 2
    %vm448 = vcmp.gt.s32.totalorder 0, %v447
    %v449 = vsel %vm448, 0, %v447
    %v450 = vsub.s32 32, %v449
    %v451 = vshll.u32 %v442, %v449
    %v452 = vshrl.u32 %v434, %v450
    %v453 = vor.u32 %v451, %v452
    %v454 = vsub.s32 4294967266, %v449
    %v455 = vadd.s32 %v454, 127
    %v456 = vshll.u32 %v455, 23
    %v457 = vor.u32 4788187, %v456
    %v458 = vand.u32 2147483647, %v457
    %v460 = vcvt.s32.f32 %v453
    %v461 = vmul.f32 %v460, %v458
    %v462 = vxor.u32 %v461, 2147483648
    %v463 = vsel %vm380, %v462, %v461
    %v464 = vsub.s32 4, %v440
    %v465 = vsel %vm380, %v464, %v440
    %v466 = vsel %vm379, %v156, %v463
    %v467 = vsel %vm379, 0, %v465
    %v468 = vcosq.f32.pop %v466
    %v469 = vsinq.f32.pop %v466
    %vm470 = vweird.f32 %v156
    %v471 = vadd.s32 %v467, 3
    %v472 = vand.u32 %v471, 3
    %vm473 = vcmp.lt.s32.totalorder %v472, 2
    %vm474 = vcmp.eq.s32.totalorder %v472, 0
    %v475 = vxor.u32 %v469, 2147483648
    %v476 = vsel %vm474, %v468, %v475
    %vm477 = vcmp.eq.s32.totalorder %v472, 2
    %v478 = vxor.u32 %v468, 2147483648
    %v479 = vsel %vm477, %v478, %v469
    %v480 = vsel %vm473, %v476, %v479
    %v481 = vsel %vm470, nan, %v480
    %v482 = vand.u32 2147483647, %v157
    %vm483 = vcmp.le.f32.partialorder %v482, 0.7853982
    %vm484 = vcmp.lt.s32.totalorder %v157, 0
    %v485 = vand.u32 %v157, 2139095040
    %v486 = vshrl.u32 %v485, 23
    %v487 = vsub.s32 %v486, 127
    %v488 = vand.u32 2147483647, %v157
    %v489 = vand.u32 %v488, 8388607
    %v490 = vor.u32 %v489, 8388608
    %v491 = vsub.s32 0, %v490
    %v492 = vadd.s32 %v487, 1
    %vm493 = vcmp.gt.s32.totalorder %v492, 0
    %v494 = vsel %vm493, %v492, 0
    %v495 = vshrl.u32 %v494, 5
    %v496 = vand.u32 %v494, 31
    %v497 = vsub.s32 32, %v496
    %v498 = vshrl.u32 683565275, %v497
    %v499 = vshll.u32 683565275, %v496
    %v500 = vshrl.u32 2475754826, %v497
    %v501 = vor.u32 %v499, %v500
    %v502 = vshll.u32 2475754826, %v496
    %v503 = vshrl.u32 2131351028, %v497
    %v504 = vor.u32 %v502, %v503
    %v505 = vshll.u32 2131351028, %v496
    %v506 = vshrl.u32 2102212464, %v497
    %v507 = vor.u32 %v505, %v506
    %v508 = vshll.u32 2102212464, %v496
    %v509 = vshrl.u32 920167782, %v497
    %v510 = vor.u32 %v508, %v509
    %v511 = vshll.u32 920167782, %v496
    %v512 = vshrl.u32 1326507024, %v497
    %v513 = vor.u32 %v511, %v512
    %vm514 = vcmp.lt.s32.totalorder %v495, 1
    %vm515 = vcmp.lt.s32.totalorder %v495, 2
    %vm516 = vcmp.lt.s32.totalorder %v495, 3
    %vm517 = vcmp.lt.s32.totalorder %v495, 4
    %v518 = vsel %vm514, %v498, %v501
    %v519 = vsel %vm517, %v507, 2102212464
    %v520 = vsel %vm516, %v504, %v519
    %v521 = vsel %vm515, %v518, %v520
    %v522 = vsel %vm514, %v501, %v504
    %v523 = vsel %vm517, %v510, 920167782
    %v524 = vsel %vm516, %v507, %v523
    %v525 = vsel %vm515, %v522, %v524
    %v526 = vsel %vm514, %v504, %v507
    %v527 = vsel %vm517, %v513, 1326507024
    %v528 = vsel %vm516, %v510, %v527
    %v529 = vsel %vm515, %v526, %v528
    %v530 = vshll.u32 %v490, 8
    %v531 = vmul.u32.u64.compose %v530, %v529
    %v532 = vextract.low.u32 %v531
    %v533 = vextract.high.u32 %v531
    %v534 = vmul.u32.u64.compose %v530, %v525
    %v535 = vextract.low.u32 %v534
    %v536 = vextract.high.u32 %v534
    %v537 = vmul.u32 %v530, %v521
    %v538 = vadd.s32 %v533, %v535
    %vm539 = vc.u32 %v533, %v535
    %v540 = vadd.s32 %v536, 1
    %v541 = vsel %vm539, %v540, %v536
    %v542 = vadd.s32 %v537, %v541
    %v543 = vadd.s32 %v542, 536870912
    %v544 = vshrl.u32 %v543, 30
    %v545 = vshll.u32 %v544, 30
    %v546 = vsub.s32 %v542, %v545
    %vm547 = vcmp.lt.s32.totalorder %v546, 0
    %v548 = vsub.s32 0, %v546
    %v549 = vsel %vm547, %v548, %v546
    %v550 = vclz %v549
    %v551 = vsub.s32 %v550, 2
    %vm552 = vcmp.gt.s32.totalorder 0, %v551
    %v553 = vsel %vm552, 0, %v551
    %v554 = vsub.s32 32, %v553
    %v555 = vshll.u32 %v546, %v553
    %v556 = vshrl.u32 %v538, %v554
    %v557 = vor.u32 %v555, %v556
    %v558 = vsub.s32 4294967266, %v553
    %v559 = vadd.s32 %v558, 127
    %v560 = vshll.u32 %v559, 23
    %v561 = vor.u32 4788187, %v560
    %v562 = vand.u32 2147483647, %v561
    %v564 = vcvt.s32.f32 %v557
    %v565 = vmul.f32 %v564, %v562
    %v566 = vxor.u32 %v565, 2147483648
    %v567 = vsel %vm484, %v566, %v565
    %v568 = vsub.s32 4, %v544
    %v569 = vsel %vm484, %v568, %v544
    %v570 = vsel %vm483, %v157, %v567
    %v571 = vsel %vm483, 0, %v569
    %v572 = vcosq.f32.pop %v570
    %v573 = vsinq.f32.pop %v570
    %vm574 = vweird.f32 %v157
    %v575 = vadd.s32 %v571, 3
    %v576 = vand.u32 %v575, 3
    %vm577 = vcmp.lt.s32.totalorder %v576, 2
    %vm578 = vcmp.eq.s32.totalorder %v576, 0
    %v579 = vxor.u32 %v573, 2147483648
    %v580 = vsel %vm578, %v572, %v579
    %vm581 = vcmp.eq.s32.totalorder %v576, 2
    %v582 = vxor.u32 %v572, 2147483648
    %v583 = vsel %vm581, %v582, %v573
    %v584 = vsel %vm577, %v580, %v583
    %v585 = vsel %vm574, nan, %v584
    %v586 = vand.u32 2147483647, %v158
    %vm587 = vcmp.le.f32.partialorder %v586, 0.7853982
    %vm588 = vcmp.lt.s32.totalorder %v158, 0
    %v589 = vand.u32 %v158, 2139095040
    %v590 = vshrl.u32 %v589, 23
    %v591 = vsub.s32 %v590, 127
    %v592 = vand.u32 2147483647, %v158
    %v593 = vand.u32 %v592, 8388607
    %v594 = vor.u32 %v593, 8388608
    %v595 = vsub.s32 0, %v594
    %v596 = vadd.s32 %v591, 1
    %vm597 = vcmp.gt.s32.totalorder %v596, 0
    %v598 = vsel %vm597, %v596, 0
    %v599 = vshrl.u32 %v598, 5
    %v600 = vand.u32 %v598, 31
    %v601 = vsub.s32 32, %v600
    %v602 = vshrl.u32 683565275, %v601
    %v603 = vshll.u32 683565275, %v600
    %v604 = vshrl.u32 2475754826, %v601
    %v605 = vor.u32 %v603, %v604
    %v606 = vshll.u32 2475754826, %v600
    %v607 = vshrl.u32 2131351028, %v601
    %v608 = vor.u32 %v606, %v607
    %v609 = vshll.u32 2131351028, %v600
    %v610 = vshrl.u32 2102212464, %v601
    %v611 = vor.u32 %v609, %v610
    %v612 = vshll.u32 2102212464, %v600
    %v613 = vshrl.u32 920167782, %v601
    %v614 = vor.u32 %v612, %v613
    %v615 = vshll.u32 920167782, %v600
    %v616 = vshrl.u32 1326507024, %v601
    %v617 = vor.u32 %v615, %v616
    %vm618 = vcmp.lt.s32.totalorder %v599, 1
    %vm619 = vcmp.lt.s32.totalorder %v599, 2
    %vm620 = vcmp.lt.s32.totalorder %v599, 3
    %vm621 = vcmp.lt.s32.totalorder %v599, 4
    %v622 = vsel %vm618, %v602, %v605
    %v623 = vsel %vm621, %v611, 2102212464
    %v624 = vsel %vm620, %v608, %v623
    %v625 = vsel %vm619, %v622, %v624
    %v626 = vsel %vm618, %v605, %v608
    %v627 = vsel %vm621, %v614, 920167782
    %v628 = vsel %vm620, %v611, %v627
    %v629 = vsel %vm619, %v626, %v628
    %v630 = vsel %vm618, %v608, %v611
    %v631 = vsel %vm621, %v617, 1326507024
    %v632 = vsel %vm620, %v614, %v631
    %v633 = vsel %vm619, %v630, %v632
    %v634 = vshll.u32 %v594, 8
    %v635 = vmul.u32.u64.compose %v634, %v633
    %v636 = vextract.low.u32 %v635
    %v637 = vextract.high.u32 %v635
    %v638 = vmul.u32.u64.compose %v634, %v629
    %v639 = vextract.low.u32 %v638
    %v640 = vextract.high.u32 %v638
    %v641 = vmul.u32 %v634, %v625
    %v642 = vadd.s32 %v637, %v639
    %vm643 = vc.u32 %v637, %v639
    %v644 = vadd.s32 %v640, 1
    %v645 = vsel %vm643, %v644, %v640
    %v646 = vadd.s32 %v641, %v645
    %v647 = vadd.s32 %v646, 536870912
    %v648 = vshrl.u32 %v647, 30
    %v649 = vshll.u32 %v648, 30
    %v650 = vsub.s32 %v646, %v649
    %vm651 = vcmp.lt.s32.totalorder %v650, 0
    %v652 = vsub.s32 0, %v650
    %v653 = vsel %vm651, %v652, %v650
    %v654 = vclz %v653
    %v655 = vsub.s32 %v654, 2
    %vm656 = vcmp.gt.s32.totalorder 0, %v655
    %v657 = vsel %vm656, 0, %v655
    %v658 = vsub.s32 32, %v657
    %v659 = vshll.u32 %v650, %v657
    %v660 = vshrl.u32 %v642, %v658
    %v661 = vor.u32 %v659, %v660
    %v662 = vsub.s32 4294967266, %v657
    %v663 = vadd.s32 %v662, 127
    %v664 = vshll.u32 %v663, 23
    %v665 = vor.u32 4788187, %v664
    %v666 = vand.u32 2147483647, %v665
    %v668 = vcvt.s32.f32 %v661
    %v669 = vmul.f32 %v668, %v666
    %v670 = vxor.u32 %v669, 2147483648
    %v671 = vsel %vm588, %v670, %v669
    %v672 = vsub.s32 4, %v648
    %v673 = vsel %vm588, %v672, %v648
    %v674 = vsel %vm587, %v158, %v671
    %v675 = vsel %vm587, 0, %v673
    %v676 = vcosq.f32.pop %v674
    %v677 = vsinq.f32.pop %v674
    %vm678 = vweird.f32 %v158
    %v679 = vadd.s32 %v675, 3
    %v680 = vand.u32 %v679, 3
    %vm681 = vcmp.lt.s32.totalorder %v680, 2
    %vm682 = vcmp.eq.s32.totalorder %v680, 0
    %v683 = vxor.u32 %v677, 2147483648
    %v684 = vsel %vm682, %v676, %v683
    %vm685 = vcmp.eq.s32.totalorder %v680, 2
    %v686 = vxor.u32 %v676, 2147483648
    %v687 = vsel %vm685, %v686, %v677
    %v688 = vsel %vm681, %v684, %v687
    %v689 = vsel %vm678, nan, %v688
    %v690 = vand.u32 2147483647, %v159
    %vm691 = vcmp.le.f32.partialorder %v690, 0.7853982
    %vm692 = vcmp.lt.s32.totalorder %v159, 0
    %v693 = vand.u32 %v159, 2139095040
    %v694 = vshrl.u32 %v693, 23
    %v695 = vsub.s32 %v694, 127
    %v696 = vand.u32 2147483647, %v159
    %v697 = vand.u32 %v696, 8388607
    %v698 = vor.u32 %v697, 8388608
    %v699 = vsub.s32 0, %v698
    %v700 = vadd.s32 %v695, 1
    %vm701 = vcmp.gt.s32.totalorder %v700, 0
    %v702 = vsel %vm701, %v700, 0
    %v703 = vshrl.u32 %v702, 5
    %v704 = vand.u32 %v702, 31
    %v705 = vsub.s32 32, %v704
    %v706 = vshrl.u32 683565275, %v705
    %v707 = vshll.u32 683565275, %v704
    %v708 = vshrl.u32 2475754826, %v705
    %v709 = vor.u32 %v707, %v708
    %v710 = vshll.u32 2475754826, %v704
    %v711 = vshrl.u32 2131351028, %v705
    %v712 = vor.u32 %v710, %v711
    %v713 = vshll.u32 2131351028, %v704
    %v714 = vshrl.u32 2102212464, %v705
    %v715 = vor.u32 %v713, %v714
    %v716 = vshll.u32 2102212464, %v704
    %v717 = vshrl.u32 920167782, %v705
    %v718 = vor.u32 %v716, %v717
    %v719 = vshll.u32 920167782, %v704
    %v720 = vshrl.u32 1326507024, %v705
    %v721 = vor.u32 %v719, %v720
    %vm722 = vcmp.lt.s32.totalorder %v703, 1
    %vm723 = vcmp.lt.s32.totalorder %v703, 2
    %vm724 = vcmp.lt.s32.totalorder %v703, 3
    %vm725 = vcmp.lt.s32.totalorder %v703, 4
    %v726 = vsel %vm722, %v706, %v709
    %v727 = vsel %vm725, %v715, 2102212464
    %v728 = vsel %vm724, %v712, %v727
    %v729 = vsel %vm723, %v726, %v728
    %v730 = vsel %vm722, %v709, %v712
    %v731 = vsel %vm725, %v718, 920167782
    %v732 = vsel %vm724, %v715, %v731
    %v733 = vsel %vm723, %v730, %v732
    %v734 = vsel %vm722, %v712, %v715
    %v735 = vsel %vm725, %v721, 1326507024
    %v736 = vsel %vm724, %v718, %v735
    %v737 = vsel %vm723, %v734, %v736
    %v738 = vshll.u32 %v698, 8
    %v739 = vmul.u32.u64.compose %v738, %v737
    %v740 = vextract.low.u32 %v739
    %v741 = vextract.high.u32 %v739
    %v742 = vmul.u32.u64.compose %v738, %v733
    %v743 = vextract.low.u32 %v742
    %v744 = vextract.high.u32 %v742
    %v745 = vmul.u32 %v738, %v729
    %v746 = vadd.s32 %v741, %v743
    %vm747 = vc.u32 %v741, %v743
    %v748 = vadd.s32 %v744, 1
    %v749 = vsel %vm747, %v748, %v744
    %v750 = vadd.s32 %v745, %v749
    %v751 = vadd.s32 %v750, 536870912
    %v752 = vshrl.u32 %v751, 30
    %v753 = vshll.u32 %v752, 30
    %v754 = vsub.s32 %v750, %v753
    %vm755 = vcmp.lt.s32.totalorder %v754, 0
    %v756 = vsub.s32 0, %v754
    %v757 = vsel %vm755, %v756, %v754
    %v758 = vclz %v757
    %v759 = vsub.s32 %v758, 2
    %vm760 = vcmp.gt.s32.totalorder 0, %v759
    %v761 = vsel %vm760, 0, %v759
    %v762 = vsub.s32 32, %v761
    %v763 = vshll.u32 %v754, %v761
    %v764 = vshrl.u32 %v746, %v762
    %v765 = vor.u32 %v763, %v764
    %v766 = vsub.s32 4294967266, %v761
    %v767 = vadd.s32 %v766, 127
    %v768 = vshll.u32 %v767, 23
    %v769 = vor.u32 4788187, %v768
    %v770 = vand.u32 2147483647, %v769
    %v772 = vcvt.s32.f32 %v765
    %v773 = vmul.f32 %v772, %v770
    %v774 = vxor.u32 %v773, 2147483648
    %v775 = vsel %vm692, %v774, %v773
    %v776 = vsub.s32 4, %v752
    %v777 = vsel %vm692, %v776, %v752
    %v778 = vsel %vm691, %v159, %v775
    %v779 = vsel %vm691, 0, %v777
    %v780 = vcosq.f32.pop %v778
    %v781 = vsinq.f32.pop %v778
    %vm782 = vweird.f32 %v159
    %v783 = vadd.s32 %v779, 3
    %v784 = vand.u32 %v783, 3
    %vm785 = vcmp.lt.s32.totalorder %v784, 2
    %vm786 = vcmp.eq.s32.totalorder %v784, 0
    %v787 = vxor.u32 %v781, 2147483648
    %v788 = vsel %vm786, %v780, %v787
    %vm789 = vcmp.eq.s32.totalorder %v784, 2
    %v790 = vxor.u32 %v780, 2147483648
    %v791 = vsel %vm789, %v790, %v781
    %v792 = vsel %vm785, %v788, %v791
    %v793 = vsel %vm782, nan, %v792
    %v794 = vand.u32 2147483647, %v160
    %vm795 = vcmp.le.f32.partialorder %v794, 0.7853982
    %vm796 = vcmp.lt.s32.totalorder %v160, 0
    %v797 = vand.u32 %v160, 2139095040
    %v798 = vshrl.u32 %v797, 23
    %v799 = vsub.s32 %v798, 127
    %v800 = vand.u32 2147483647, %v160
    %v801 = vand.u32 %v800, 8388607
    %v802 = vor.u32 %v801, 8388608
    %v803 = vsub.s32 0, %v802
    %v804 = vadd.s32 %v799, 1
    %vm805 = vcmp.gt.s32.totalorder %v804, 0
    %v806 = vsel %vm805, %v804, 0
    %v807 = vshrl.u32 %v806, 5
    %v808 = vand.u32 %v806, 31
    %v809 = vsub.s32 32, %v808
    %v810 = vshrl.u32 683565275, %v809
    %v811 = vshll.u32 683565275, %v808
    %v812 = vshrl.u32 2475754826, %v809
    %v813 = vor.u32 %v811, %v812
    %v814 = vshll.u32 2475754826, %v808
    %v815 = vshrl.u32 2131351028, %v809
    %v816 = vor.u32 %v814, %v815
    %v817 = vshll.u32 2131351028, %v808
    %v818 = vshrl.u32 2102212464, %v809
    %v819 = vor.u32 %v817, %v818
    %v820 = vshll.u32 2102212464, %v808
    %v821 = vshrl.u32 920167782, %v809
    %v822 = vor.u32 %v820, %v821
    %v823 = vshll.u32 920167782, %v808
    %v824 = vshrl.u32 1326507024, %v809
    %v825 = vor.u32 %v823, %v824
    %vm826 = vcmp.lt.s32.totalorder %v807, 1
    %vm827 = vcmp.lt.s32.totalorder %v807, 2
    %vm828 = vcmp.lt.s32.totalorder %v807, 3
    %vm829 = vcmp.lt.s32.totalorder %v807, 4
    %v830 = vsel %vm826, %v810, %v813
    %v831 = vsel %vm829, %v819, 2102212464
    %v832 = vsel %vm828, %v816, %v831
    %v833 = vsel %vm827, %v830, %v832
    %v834 = vsel %vm826, %v813, %v816
    %v835 = vsel %vm829, %v822, 920167782
    %v836 = vsel %vm828, %v819, %v835
    %v837 = vsel %vm827, %v834, %v836
    %v838 = vsel %vm826, %v816, %v819
    %v839 = vsel %vm829, %v825, 1326507024
    %v840 = vsel %vm828, %v822, %v839
    %v841 = vsel %vm827, %v838, %v840
    %v842 = vshll.u32 %v802, 8
    %v843 = vmul.u32.u64.compose %v842, %v841
    %v844 = vextract.low.u32 %v843
    %v845 = vextract.high.u32 %v843
    %v846 = vmul.u32.u64.compose %v842, %v837
    %v847 = vextract.low.u32 %v846
    %v848 = vextract.high.u32 %v846
    %v849 = vmul.u32 %v842, %v833
    %v850 = vadd.s32 %v845, %v847
    %vm851 = vc.u32 %v845, %v847
    %v852 = vadd.s32 %v848, 1
    %v853 = vsel %vm851, %v852, %v848
    %v854 = vadd.s32 %v849, %v853
    %v855 = vadd.s32 %v854, 536870912
    %v856 = vshrl.u32 %v855, 30
    %v857 = vshll.u32 %v856, 30
    %v858 = vsub.s32 %v854, %v857
    %vm859 = vcmp.lt.s32.totalorder %v858, 0
    %v860 = vsub.s32 0, %v858
    %v861 = vsel %vm859, %v860, %v858
    %v862 = vclz %v861
    %v863 = vsub.s32 %v862, 2
    %vm864 = vcmp.gt.s32.totalorder 0, %v863
    %v865 = vsel %vm864, 0, %v863
    %v866 = vsub.s32 32, %v865
    %v867 = vshll.u32 %v858, %v865
    %v868 = vshrl.u32 %v850, %v866
    %v869 = vor.u32 %v867, %v868
    %v870 = vsub.s32 4294967266, %v865
    %v871 = vadd.s32 %v870, 127
    %v872 = vshll.u32 %v871, 23
    %v873 = vor.u32 4788187, %v872
    %v874 = vand.u32 2147483647, %v873
    %v876 = vcvt.s32.f32 %v869
    %v877 = vmul.f32 %v876, %v874
    %v878 = vxor.u32 %v877, 2147483648
    %v879 = vsel %vm796, %v878, %v877
    %v880 = vsub.s32 4, %v856
    %v881 = vsel %vm796, %v880, %v856
    %v882 = vsel %vm795, %v160, %v879
    %v883 = vsel %vm795, 0, %v881
    %v884 = vcosq.f32.pop %v882
    %v885 = vsinq.f32.pop %v882
    %vm886 = vweird.f32 %v160
    %v887 = vadd.s32 %v883, 3
    %v888 = vand.u32 %v887, 3
    %vm889 = vcmp.lt.s32.totalorder %v888, 2
    %vm890 = vcmp.eq.s32.totalorder %v888, 0
    %v891 = vxor.u32 %v885, 2147483648
    %v892 = vsel %vm890, %v884, %v891
    %vm893 = vcmp.eq.s32.totalorder %v888, 2
    %v894 = vxor.u32 %v884, 2147483648
    %v895 = vsel %vm893, %v894, %v885
    %v896 = vsel %vm889, %v892, %v895
    %v897 = vsel %vm886, nan, %v896
    %v898 = vand.u32 2147483647, %v161
    %vm899 = vcmp.le.f32.partialorder %v898, 0.7853982
    %vm900 = vcmp.lt.s32.totalorder %v161, 0
    %v901 = vand.u32 %v161, 2139095040
    %v902 = vshrl.u32 %v901, 23
    %v903 = vsub.s32 %v902, 127
    %v904 = vand.u32 2147483647, %v161
    %v905 = vand.u32 %v904, 8388607
    %v906 = vor.u32 %v905, 8388608
    %v907 = vsub.s32 0, %v906
    %v908 = vadd.s32 %v903, 1
    %vm909 = vcmp.gt.s32.totalorder %v908, 0
    %v910 = vsel %vm909, %v908, 0
    %v911 = vshrl.u32 %v910, 5
    %v912 = vand.u32 %v910, 31
    %v913 = vsub.s32 32, %v912
    %v914 = vshrl.u32 683565275, %v913
    %v915 = vshll.u32 683565275, %v912
    %v916 = vshrl.u32 2475754826, %v913
    %v917 = vor.u32 %v915, %v916
    %v918 = vshll.u32 2475754826, %v912
    %v919 = vshrl.u32 2131351028, %v913
    %v920 = vor.u32 %v918, %v919
    %v921 = vshll.u32 2131351028, %v912
    %v922 = vshrl.u32 2102212464, %v913
    %v923 = vor.u32 %v921, %v922
    %v924 = vshll.u32 2102212464, %v912
    %v925 = vshrl.u32 920167782, %v913
    %v926 = vor.u32 %v924, %v925
    %v927 = vshll.u32 920167782, %v912
    %v928 = vshrl.u32 1326507024, %v913
    %v929 = vor.u32 %v927, %v928
    %vm930 = vcmp.lt.s32.totalorder %v911, 1
    %vm931 = vcmp.lt.s32.totalorder %v911, 2
    %vm932 = vcmp.lt.s32.totalorder %v911, 3
    %vm933 = vcmp.lt.s32.totalorder %v911, 4
    %v934 = vsel %vm930, %v914, %v917
    %v935 = vsel %vm933, %v923, 2102212464
    %v936 = vsel %vm932, %v920, %v935
    %v937 = vsel %vm931, %v934, %v936
    %v938 = vsel %vm930, %v917, %v920
    %v939 = vsel %vm933, %v926, 920167782
    %v940 = vsel %vm932, %v923, %v939
    %v941 = vsel %vm931, %v938, %v940
    %v942 = vsel %vm930, %v920, %v923
    %v943 = vsel %vm933, %v929, 1326507024
    %v944 = vsel %vm932, %v926, %v943
    %v945 = vsel %vm931, %v942, %v944
    %v946 = vshll.u32 %v906, 8
    %v947 = vmul.u32.u64.compose %v946, %v945
    %v948 = vextract.low.u32 %v947
    %v949 = vextract.high.u32 %v947
    %v950 = vmul.u32.u64.compose %v946, %v941
    %v951 = vextract.low.u32 %v950
    %v952 = vextract.high.u32 %v950
    %v953 = vmul.u32 %v946, %v937
    %v954 = vadd.s32 %v949, %v951
    %vm955 = vc.u32 %v949, %v951
    %v956 = vadd.s32 %v952, 1
    %v957 = vsel %vm955, %v956, %v952
    %v958 = vadd.s32 %v953, %v957
    %v959 = vadd.s32 %v958, 536870912
    %v960 = vshrl.u32 %v959, 30
    %v961 = vshll.u32 %v960, 30
    %v962 = vsub.s32 %v958, %v961
    %vm963 = vcmp.lt.s32.totalorder %v962, 0
    %v964 = vsub.s32 0, %v962
    %v965 = vsel %vm963, %v964, %v962
    %v966 = vclz %v965
    %v967 = vsub.s32 %v966, 2
    %vm968 = vcmp.gt.s32.totalorder 0, %v967
    %v969 = vsel %vm968, 0, %v967
    %v970 = vsub.s32 32, %v969
    %v971 = vshll.u32 %v962, %v969
    %v972 = vshrl.u32 %v954, %v970
    %v973 = vor.u32 %v971, %v972
    %v974 = vsub.s32 4294967266, %v969
    %v975 = vadd.s32 %v974, 127
    %v976 = vshll.u32 %v975, 23
    %v977 = vor.u32 4788187, %v976
    %v978 = vand.u32 2147483647, %v977
    %v980 = vcvt.s32.f32 %v973
    %v981 = vmul.f32 %v980, %v978
    %v982 = vxor.u32 %v981, 2147483648
    %v983 = vsel %vm900, %v982, %v981
    %v984 = vsub.s32 4, %v960
    %v985 = vsel %vm900, %v984, %v960
    %v986 = vsel %vm899, %v161, %v983
    %v987 = vsel %vm899, 0, %v985
    %v988 = vcosq.f32.pop %v986
    %v989 = vsinq.f32.pop %v986
    %vm990 = vweird.f32 %v161
    %v991 = vadd.s32 %v987, 3
    %v992 = vand.u32 %v991, 3
    %vm993 = vcmp.lt.s32.totalorder %v992, 2
    %vm994 = vcmp.eq.s32.totalorder %v992, 0
    %v995 = vxor.u32 %v989, 2147483648
    %v996 = vsel %vm994, %v988, %v995
    %vm997 = vcmp.eq.s32.totalorder %v992, 2
    %v998 = vxor.u32 %v988, 2147483648
    %v999 = vsel %vm997, %v998, %v989
    %v1000 = vsel %vm993, %v996, %v999
    %v1001 = vsel %vm990, nan, %v1000
    %v1002 = vand.u32 2147483647, %v162
    %vm1003 = vcmp.le.f32.partialorder %v1002, 0.7853982
    %vm1004 = vcmp.lt.s32.totalorder %v162, 0
    %v1005 = vand.u32 %v162, 2139095040
    %v1006 = vshrl.u32 %v1005, 23
    %v1007 = vsub.s32 %v1006, 127
    %v1008 = vand.u32 2147483647, %v162
    %v1009 = vand.u32 %v1008, 8388607
    %v1010 = vor.u32 %v1009, 8388608
    %v1011 = vsub.s32 0, %v1010
    %v1012 = vadd.s32 %v1007, 1
    %vm1013 = vcmp.gt.s32.totalorder %v1012, 0
    %v1014 = vsel %vm1013, %v1012, 0
    %v1015 = vshrl.u32 %v1014, 5
    %v1016 = vand.u32 %v1014, 31
    %v1017 = vsub.s32 32, %v1016
    %v1018 = vshrl.u32 683565275, %v1017
    %v1019 = vshll.u32 683565275, %v1016
    %v1020 = vshrl.u32 2475754826, %v1017
    %v1021 = vor.u32 %v1019, %v1020
    %v1022 = vshll.u32 2475754826, %v1016
    %v1023 = vshrl.u32 2131351028, %v1017
    %v1024 = vor.u32 %v1022, %v1023
    %v1025 = vshll.u32 2131351028, %v1016
    %v1026 = vshrl.u32 2102212464, %v1017
    %v1027 = vor.u32 %v1025, %v1026
    %v1028 = vshll.u32 2102212464, %v1016
    %v1029 = vshrl.u32 920167782, %v1017
    %v1030 = vor.u32 %v1028, %v1029
    %v1031 = vshll.u32 920167782, %v1016
    %v1032 = vshrl.u32 1326507024, %v1017
    %v1033 = vor.u32 %v1031, %v1032
    %vm1034 = vcmp.lt.s32.totalorder %v1015, 1
    %vm1035 = vcmp.lt.s32.totalorder %v1015, 2
    %vm1036 = vcmp.lt.s32.totalorder %v1015, 3
    %vm1037 = vcmp.lt.s32.totalorder %v1015, 4
    %v1038 = vsel %vm1034, %v1018, %v1021
    %v1039 = vsel %vm1037, %v1027, 2102212464
    %v1040 = vsel %vm1036, %v1024, %v1039
    %v1041 = vsel %vm1035, %v1038, %v1040
    %v1042 = vsel %vm1034, %v1021, %v1024
    %v1043 = vsel %vm1037, %v1030, 920167782
    %v1044 = vsel %vm1036, %v1027, %v1043
    %v1045 = vsel %vm1035, %v1042, %v1044
    %v1046 = vsel %vm1034, %v1024, %v1027
    %v1047 = vsel %vm1037, %v1033, 1326507024
    %v1048 = vsel %vm1036, %v1030, %v1047
    %v1049 = vsel %vm1035, %v1046, %v1048
    %v1050 = vshll.u32 %v1010, 8
    %v1051 = vmul.u32.u64.compose %v1050, %v1049
    %v1052 = vextract.low.u32 %v1051
    %v1053 = vextract.high.u32 %v1051
    %v1054 = vmul.u32.u64.compose %v1050, %v1045
    %v1055 = vextract.low.u32 %v1054
    %v1056 = vextract.high.u32 %v1054
    %v1057 = vmul.u32 %v1050, %v1041
    %v1058 = vadd.s32 %v1053, %v1055
    %vm1059 = vc.u32 %v1053, %v1055
    %v1060 = vadd.s32 %v1056, 1
    %v1061 = vsel %vm1059, %v1060, %v1056
    %v1062 = vadd.s32 %v1057, %v1061
    %v1063 = vadd.s32 %v1062, 536870912
    %v1064 = vshrl.u32 %v1063, 30
    %v1065 = vshll.u32 %v1064, 30
    %v1066 = vsub.s32 %v1062, %v1065
    %vm1067 = vcmp.lt.s32.totalorder %v1066, 0
    %v1068 = vsub.s32 0, %v1066
    %v1069 = vsel %vm1067, %v1068, %v1066
    %v1070 = vclz %v1069
    %v1071 = vsub.s32 %v1070, 2
    %vm1072 = vcmp.gt.s32.totalorder 0, %v1071
    %v1073 = vsel %vm1072, 0, %v1071
    %v1074 = vsub.s32 32, %v1073
    %v1075 = vshll.u32 %v1066, %v1073
    %v1076 = vshrl.u32 %v1058, %v1074
    %v1077 = vor.u32 %v1075, %v1076
    %v1078 = vsub.s32 4294967266, %v1073
    %v1079 = vadd.s32 %v1078, 127
    %v1080 = vshll.u32 %v1079, 23
    %v1081 = vor.u32 4788187, %v1080
    %v1082 = vand.u32 2147483647, %v1081
    %v1084 = vcvt.s32.f32 %v1077
    %v1085 = vmul.f32 %v1084, %v1082
    %v1086 = vxor.u32 %v1085, 2147483648
    %v1087 = vsel %vm1004, %v1086, %v1085
    %v1088 = vsub.s32 4, %v1064
    %v1089 = vsel %vm1004, %v1088, %v1064
    %v1090 = vsel %vm1003, %v162, %v1087
    %v1091 = vsel %vm1003, 0, %v1089
    %v1092 = vcosq.f32.pop %v1090
    %v1093 = vsinq.f32.pop %v1090
    %vm1094 = vweird.f32 %v162
    %v1095 = vadd.s32 %v1091, 3
    %v1096 = vand.u32 %v1095, 3
    %vm1097 = vcmp.lt.s32.totalorder %v1096, 2
    %vm1098 = vcmp.eq.s32.totalorder %v1096, 0
    %v1099 = vxor.u32 %v1093, 2147483648
    %v1100 = vsel %vm1098, %v1092, %v1099
    %vm1101 = vcmp.eq.s32.totalorder %v1096, 2
    %v1102 = vxor.u32 %v1092, 2147483648
    %v1103 = vsel %vm1101, %v1102, %v1093
    %v1104 = vsel %vm1097, %v1100, %v1103
    %v1105 = vsel %vm1094, nan, %v1104
    %v1106 = vand.u32 2147483647, %v163
    %vm1107 = vcmp.le.f32.partialorder %v1106, 0.7853982
    %vm1108 = vcmp.lt.s32.totalorder %v163, 0
    %v1109 = vand.u32 %v163, 2139095040
    %v1110 = vshrl.u32 %v1109, 23
    %v1111 = vsub.s32 %v1110, 127
    %v1112 = vand.u32 2147483647, %v163
    %v1113 = vand.u32 %v1112, 8388607
    %v1114 = vor.u32 %v1113, 8388608
    %v1115 = vsub.s32 0, %v1114
    %v1116 = vadd.s32 %v1111, 1
    %vm1117 = vcmp.gt.s32.totalorder %v1116, 0
    %v1118 = vsel %vm1117, %v1116, 0
    %v1119 = vshrl.u32 %v1118, 5
    %v1120 = vand.u32 %v1118, 31
    %v1121 = vsub.s32 32, %v1120
    %v1122 = vshrl.u32 683565275, %v1121
    %v1123 = vshll.u32 683565275, %v1120
    %v1124 = vshrl.u32 2475754826, %v1121
    %v1125 = vor.u32 %v1123, %v1124
    %v1126 = vshll.u32 2475754826, %v1120
    %v1127 = vshrl.u32 2131351028, %v1121
    %v1128 = vor.u32 %v1126, %v1127
    %v1129 = vshll.u32 2131351028, %v1120
    %v1130 = vshrl.u32 2102212464, %v1121
    %v1131 = vor.u32 %v1129, %v1130
    %v1132 = vshll.u32 2102212464, %v1120
    %v1133 = vshrl.u32 920167782, %v1121
    %v1134 = vor.u32 %v1132, %v1133
    %v1135 = vshll.u32 920167782, %v1120
    %v1136 = vshrl.u32 1326507024, %v1121
    %v1137 = vor.u32 %v1135, %v1136
    %vm1138 = vcmp.lt.s32.totalorder %v1119, 1
    %vm1139 = vcmp.lt.s32.totalorder %v1119, 2
    %vm1140 = vcmp.lt.s32.totalorder %v1119, 3
    %vm1141 = vcmp.lt.s32.totalorder %v1119, 4
    %v1142 = vsel %vm1138, %v1122, %v1125
    %v1143 = vsel %vm1141, %v1131, 2102212464
    %v1144 = vsel %vm1140, %v1128, %v1143
    %v1145 = vsel %vm1139, %v1142, %v1144
    %v1146 = vsel %vm1138, %v1125, %v1128
    %v1147 = vsel %vm1141, %v1134, 920167782
    %v1148 = vsel %vm1140, %v1131, %v1147
    %v1149 = vsel %vm1139, %v1146, %v1148
    %v1150 = vsel %vm1138, %v1128, %v1131
    %v1151 = vsel %vm1141, %v1137, 1326507024
    %v1152 = vsel %vm1140, %v1134, %v1151
    %v1153 = vsel %vm1139, %v1150, %v1152
    %v1154 = vshll.u32 %v1114, 8
    %v1155 = vmul.u32.u64.compose %v1154, %v1153
    %v1156 = vextract.low.u32 %v1155
    %v1157 = vextract.high.u32 %v1155
    %v1158 = vmul.u32.u64.compose %v1154, %v1149
    %v1159 = vextract.low.u32 %v1158
    %v1160 = vextract.high.u32 %v1158
    %v1161 = vmul.u32 %v1154, %v1145
    %v1162 = vadd.s32 %v1157, %v1159
    %vm1163 = vc.u32 %v1157, %v1159
    %v1164 = vadd.s32 %v1160, 1
    %v1165 = vsel %vm1163, %v1164, %v1160
    %v1166 = vadd.s32 %v1161, %v1165
    %v1167 = vadd.s32 %v1166, 536870912
    %v1168 = vshrl.u32 %v1167, 30
    %v1169 = vshll.u32 %v1168, 30
    %v1170 = vsub.s32 %v1166, %v1169
    %vm1171 = vcmp.lt.s32.totalorder %v1170, 0
    %v1172 = vsub.s32 0, %v1170
    %v1173 = vsel %vm1171, %v1172, %v1170
    %v1174 = vclz %v1173
    %v1175 = vsub.s32 %v1174, 2
    %vm1176 = vcmp.gt.s32.totalorder 0, %v1175
    %v1177 = vsel %vm1176, 0, %v1175
    %v1178 = vsub.s32 32, %v1177
    %v1179 = vshll.u32 %v1170, %v1177
    %v1180 = vshrl.u32 %v1162, %v1178
    %v1181 = vor.u32 %v1179, %v1180
    %v1182 = vsub.s32 4294967266, %v1177
    %v1183 = vadd.s32 %v1182, 127
    %v1184 = vshll.u32 %v1183, 23
    %v1185 = vor.u32 4788187, %v1184
    %v1186 = vand.u32 2147483647, %v1185
    %v1188 = vcvt.s32.f32 %v1181
    %v1189 = vmul.f32 %v1188, %v1186
    %v1190 = vxor.u32 %v1189, 2147483648
    %v1191 = vsel %vm1108, %v1190, %v1189
    %v1192 = vsub.s32 4, %v1168
    %v1193 = vsel %vm1108, %v1192, %v1168
    %v1194 = vsel %vm1107, %v163, %v1191
    %v1195 = vsel %vm1107, 0, %v1193
    %v1196 = vcosq.f32.pop %v1194
    %v1197 = vsinq.f32.pop %v1194
    %vm1198 = vweird.f32 %v163
    %v1199 = vadd.s32 %v1195, 3
    %v1200 = vand.u32 %v1199, 3
    %vm1201 = vcmp.lt.s32.totalorder %v1200, 2
    %vm1202 = vcmp.eq.s32.totalorder %v1200, 0
    %v1203 = vxor.u32 %v1197, 2147483648
    %v1204 = vsel %vm1202, %v1196, %v1203
    %vm1205 = vcmp.eq.s32.totalorder %v1200, 2
    %v1206 = vxor.u32 %v1196, 2147483648
    %v1207 = vsel %vm1205, %v1206, %v1197
    %v1208 = vsel %vm1201, %v1204, %v1207
    %v1209 = vsel %vm1198, nan, %v1208
    %v1210 = vand.u32 2147483647, %v164
    %vm1211 = vcmp.le.f32.partialorder %v1210, 0.7853982
    %vm1212 = vcmp.lt.s32.totalorder %v164, 0
    %v1213 = vand.u32 %v164, 2139095040
    %v1214 = vshrl.u32 %v1213, 23
    %v1215 = vsub.s32 %v1214, 127
    %v1216 = vand.u32 2147483647, %v164
    %v1217 = vand.u32 %v1216, 8388607
    %v1218 = vor.u32 %v1217, 8388608
    %v1219 = vsub.s32 0, %v1218
    %v1220 = vadd.s32 %v1215, 1
    %vm1221 = vcmp.gt.s32.totalorder %v1220, 0
    %v1222 = vsel %vm1221, %v1220, 0
    %v1223 = vshrl.u32 %v1222, 5
    %v1224 = vand.u32 %v1222, 31
    %v1225 = vsub.s32 32, %v1224
    %v1226 = vshrl.u32 683565275, %v1225
    %v1227 = vshll.u32 683565275, %v1224
    %v1228 = vshrl.u32 2475754826, %v1225
    %v1229 = vor.u32 %v1227, %v1228
    %v1230 = vshll.u32 2475754826, %v1224
    %v1231 = vshrl.u32 2131351028, %v1225
    %v1232 = vor.u32 %v1230, %v1231
    %v1233 = vshll.u32 2131351028, %v1224
    %v1234 = vshrl.u32 2102212464, %v1225
    %v1235 = vor.u32 %v1233, %v1234
    %v1236 = vshll.u32 2102212464, %v1224
    %v1237 = vshrl.u32 920167782, %v1225
    %v1238 = vor.u32 %v1236, %v1237
    %v1239 = vshll.u32 920167782, %v1224
    %v1240 = vshrl.u32 1326507024, %v1225
    %v1241 = vor.u32 %v1239, %v1240
    %vm1242 = vcmp.lt.s32.totalorder %v1223, 1
    %vm1243 = vcmp.lt.s32.totalorder %v1223, 2
    %vm1244 = vcmp.lt.s32.totalorder %v1223, 3
    %vm1245 = vcmp.lt.s32.totalorder %v1223, 4
    %v1246 = vsel %vm1242, %v1226, %v1229
    %v1247 = vsel %vm1245, %v1235, 2102212464
    %v1248 = vsel %vm1244, %v1232, %v1247
    %v1249 = vsel %vm1243, %v1246, %v1248
    %v1250 = vsel %vm1242, %v1229, %v1232
    %v1251 = vsel %vm1245, %v1238, 920167782
    %v1252 = vsel %vm1244, %v1235, %v1251
    %v1253 = vsel %vm1243, %v1250, %v1252
    %v1254 = vsel %vm1242, %v1232, %v1235
    %v1255 = vsel %vm1245, %v1241, 1326507024
    %v1256 = vsel %vm1244, %v1238, %v1255
    %v1257 = vsel %vm1243, %v1254, %v1256
    %v1258 = vshll.u32 %v1218, 8
    %v1259 = vmul.u32.u64.compose %v1258, %v1257
    %v1260 = vextract.low.u32 %v1259
    %v1261 = vextract.high.u32 %v1259
    %v1262 = vmul.u32.u64.compose %v1258, %v1253
    %v1263 = vextract.low.u32 %v1262
    %v1264 = vextract.high.u32 %v1262
    %v1265 = vmul.u32 %v1258, %v1249
    %v1266 = vadd.s32 %v1261, %v1263
    %vm1267 = vc.u32 %v1261, %v1263
    %v1268 = vadd.s32 %v1264, 1
    %v1269 = vsel %vm1267, %v1268, %v1264
    %v1270 = vadd.s32 %v1265, %v1269
    %v1271 = vadd.s32 %v1270, 536870912
    %v1272 = vshrl.u32 %v1271, 30
    %v1273 = vshll.u32 %v1272, 30
    %v1274 = vsub.s32 %v1270, %v1273
    %vm1275 = vcmp.lt.s32.totalorder %v1274, 0
    %v1276 = vsub.s32 0, %v1274
    %v1277 = vsel %vm1275, %v1276, %v1274
    %v1278 = vclz %v1277
    %v1279 = vsub.s32 %v1278, 2
    %vm1280 = vcmp.gt.s32.totalorder 0, %v1279
    %v1281 = vsel %vm1280, 0, %v1279
    %v1282 = vsub.s32 32, %v1281
    %v1283 = vshll.u32 %v1274, %v1281
    %v1284 = vshrl.u32 %v1266, %v1282
    %v1285 = vor.u32 %v1283, %v1284
    %v1286 = vsub.s32 4294967266, %v1281
    %v1287 = vadd.s32 %v1286, 127
    %v1288 = vshll.u32 %v1287, 23
    %v1289 = vor.u32 4788187, %v1288
    %v1290 = vand.u32 2147483647, %v1289
    %v1292 = vcvt.s32.f32 %v1285
    %v1293 = vmul.f32 %v1292, %v1290
    %v1294 = vxor.u32 %v1293, 2147483648
    %v1295 = vsel %vm1212, %v1294, %v1293
    %v1296 = vsub.s32 4, %v1272
    %v1297 = vsel %vm1212, %v1296, %v1272
    %v1298 = vsel %vm1211, %v164, %v1295
    %v1299 = vsel %vm1211, 0, %v1297
    %v1300 = vcosq.f32.pop %v1298
    %v1301 = vsinq.f32.pop %v1298
    %vm1302 = vweird.f32 %v164
    %v1303 = vadd.s32 %v1299, 3
    %v1304 = vand.u32 %v1303, 3
    %vm1305 = vcmp.lt.s32.totalorder %v1304, 2
    %vm1306 = vcmp.eq.s32.totalorder %v1304, 0
    %v1307 = vxor.u32 %v1301, 2147483648
    %v1308 = vsel %vm1306, %v1300, %v1307
    %vm1309 = vcmp.eq.s32.totalorder %v1304, 2
    %v1310 = vxor.u32 %v1300, 2147483648
    %v1311 = vsel %vm1309, %v1310, %v1301
    %v1312 = vsel %vm1305, %v1308, %v1311
    %v1313 = vsel %vm1302, nan, %v1312
    %v1314 = vand.u32 2147483647, %v165
    %vm1315 = vcmp.le.f32.partialorder %v1314, 0.7853982
    %vm1316 = vcmp.lt.s32.totalorder %v165, 0
    %v1317 = vand.u32 %v165, 2139095040
    %v1318 = vshrl.u32 %v1317, 23
    %v1319 = vsub.s32 %v1318, 127
    %v1320 = vand.u32 2147483647, %v165
    %v1321 = vand.u32 %v1320, 8388607
    %v1322 = vor.u32 %v1321, 8388608
    %v1323 = vsub.s32 0, %v1322
    %v1324 = vadd.s32 %v1319, 1
    %vm1325 = vcmp.gt.s32.totalorder %v1324, 0
    %v1326 = vsel %vm1325, %v1324, 0
    %v1327 = vshrl.u32 %v1326, 5
    %v1328 = vand.u32 %v1326, 31
    %v1329 = vsub.s32 32, %v1328
    %v1330 = vshrl.u32 683565275, %v1329
    %v1331 = vshll.u32 683565275, %v1328
    %v1332 = vshrl.u32 2475754826, %v1329
    %v1333 = vor.u32 %v1331, %v1332
    %v1334 = vshll.u32 2475754826, %v1328
    %v1335 = vshrl.u32 2131351028, %v1329
    %v1336 = vor.u32 %v1334, %v1335
    %v1337 = vshll.u32 2131351028, %v1328
    %v1338 = vshrl.u32 2102212464, %v1329
    %v1339 = vor.u32 %v1337, %v1338
    %v1340 = vshll.u32 2102212464, %v1328
    %v1341 = vshrl.u32 920167782, %v1329
    %v1342 = vor.u32 %v1340, %v1341
    %v1343 = vshll.u32 920167782, %v1328
    %v1344 = vshrl.u32 1326507024, %v1329
    %v1345 = vor.u32 %v1343, %v1344
    %vm1346 = vcmp.lt.s32.totalorder %v1327, 1
    %vm1347 = vcmp.lt.s32.totalorder %v1327, 2
    %vm1348 = vcmp.lt.s32.totalorder %v1327, 3
    %vm1349 = vcmp.lt.s32.totalorder %v1327, 4
    %v1350 = vsel %vm1346, %v1330, %v1333
    %v1351 = vsel %vm1349, %v1339, 2102212464
    %v1352 = vsel %vm1348, %v1336, %v1351
    %v1353 = vsel %vm1347, %v1350, %v1352
    %v1354 = vsel %vm1346, %v1333, %v1336
    %v1355 = vsel %vm1349, %v1342, 920167782
    %v1356 = vsel %vm1348, %v1339, %v1355
    %v1357 = vsel %vm1347, %v1354, %v1356
    %v1358 = vsel %vm1346, %v1336, %v1339
    %v1359 = vsel %vm1349, %v1345, 1326507024
    %v1360 = vsel %vm1348, %v1342, %v1359
    %v1361 = vsel %vm1347, %v1358, %v1360
    %v1362 = vshll.u32 %v1322, 8
    %v1363 = vmul.u32.u64.compose %v1362, %v1361
    %v1364 = vextract.low.u32 %v1363
    %v1365 = vextract.high.u32 %v1363
    %v1366 = vmul.u32.u64.compose %v1362, %v1357
    %v1367 = vextract.low.u32 %v1366
    %v1368 = vextract.high.u32 %v1366
    %v1369 = vmul.u32 %v1362, %v1353
    %v1370 = vadd.s32 %v1365, %v1367
    %vm1371 = vc.u32 %v1365, %v1367
    %v1372 = vadd.s32 %v1368, 1
    %v1373 = vsel %vm1371, %v1372, %v1368
    %v1374 = vadd.s32 %v1369, %v1373
    %v1375 = vadd.s32 %v1374, 536870912
    %v1376 = vshrl.u32 %v1375, 30
    %v1377 = vshll.u32 %v1376, 30
    %v1378 = vsub.s32 %v1374, %v1377
    %vm1379 = vcmp.lt.s32.totalorder %v1378, 0
    %v1380 = vsub.s32 0, %v1378
    %v1381 = vsel %vm1379, %v1380, %v1378
    %v1382 = vclz %v1381
    %v1383 = vsub.s32 %v1382, 2
    %vm1384 = vcmp.gt.s32.totalorder 0, %v1383
    %v1385 = vsel %vm1384, 0, %v1383
    %v1386 = vsub.s32 32, %v1385
    %v1387 = vshll.u32 %v1378, %v1385
    %v1388 = vshrl.u32 %v1370, %v1386
    %v1389 = vor.u32 %v1387, %v1388
    %v1390 = vsub.s32 4294967266, %v1385
    %v1391 = vadd.s32 %v1390, 127
    %v1392 = vshll.u32 %v1391, 23
    %v1393 = vor.u32 4788187, %v1392
    %v1394 = vand.u32 2147483647, %v1393
    %v1396 = vcvt.s32.f32 %v1389
    %v1397 = vmul.f32 %v1396, %v1394
    %v1398 = vxor.u32 %v1397, 2147483648
    %v1399 = vsel %vm1316, %v1398, %v1397
    %v1400 = vsub.s32 4, %v1376
    %v1401 = vsel %vm1316, %v1400, %v1376
    %v1402 = vsel %vm1315, %v165, %v1399
    %v1403 = vsel %vm1315, 0, %v1401
    %v1404 = vcosq.f32.pop %v1402
    %v1405 = vsinq.f32.pop %v1402
    %vm1406 = vweird.f32 %v165
    %v1407 = vadd.s32 %v1403, 3
    %v1408 = vand.u32 %v1407, 3
    %vm1409 = vcmp.lt.s32.totalorder %v1408, 2
    %vm1410 = vcmp.eq.s32.totalorder %v1408, 0
    %v1411 = vxor.u32 %v1405, 2147483648
    %v1412 = vsel %vm1410, %v1404, %v1411
    %vm1413 = vcmp.eq.s32.totalorder %v1408, 2
    %v1414 = vxor.u32 %v1404, 2147483648
    %v1415 = vsel %vm1413, %v1414, %v1405
    %v1416 = vsel %vm1409, %v1412, %v1415
    %v1417 = vsel %vm1406, nan, %v1416
    %v1418 = vand.u32 2147483647, %v166
    %vm1419 = vcmp.le.f32.partialorder %v1418, 0.7853982
    %vm1420 = vcmp.lt.s32.totalorder %v166, 0
    %v1421 = vand.u32 %v166, 2139095040
    %v1422 = vshrl.u32 %v1421, 23
    %v1423 = vsub.s32 %v1422, 127
    %v1424 = vand.u32 2147483647, %v166
    %v1425 = vand.u32 %v1424, 8388607
    %v1426 = vor.u32 %v1425, 8388608
    %v1427 = vsub.s32 0, %v1426
    %v1428 = vadd.s32 %v1423, 1
    %vm1429 = vcmp.gt.s32.totalorder %v1428, 0
    %v1430 = vsel %vm1429, %v1428, 0
    %v1431 = vshrl.u32 %v1430, 5
    %v1432 = vand.u32 %v1430, 31
    %v1433 = vsub.s32 32, %v1432
    %v1434 = vshrl.u32 683565275, %v1433
    %v1435 = vshll.u32 683565275, %v1432
    %v1436 = vshrl.u32 2475754826, %v1433
    %v1437 = vor.u32 %v1435, %v1436
    %v1438 = vshll.u32 2475754826, %v1432
    %v1439 = vshrl.u32 2131351028, %v1433
    %v1440 = vor.u32 %v1438, %v1439
    %v1441 = vshll.u32 2131351028, %v1432
    %v1442 = vshrl.u32 2102212464, %v1433
    %v1443 = vor.u32 %v1441, %v1442
    %v1444 = vshll.u32 2102212464, %v1432
    %v1445 = vshrl.u32 920167782, %v1433
    %v1446 = vor.u32 %v1444, %v1445
    %v1447 = vshll.u32 920167782, %v1432
    %v1448 = vshrl.u32 1326507024, %v1433
    %v1449 = vor.u32 %v1447, %v1448
    %vm1450 = vcmp.lt.s32.totalorder %v1431, 1
    %vm1451 = vcmp.lt.s32.totalorder %v1431, 2
    %vm1452 = vcmp.lt.s32.totalorder %v1431, 3
    %vm1453 = vcmp.lt.s32.totalorder %v1431, 4
    %v1454 = vsel %vm1450, %v1434, %v1437
    %v1455 = vsel %vm1453, %v1443, 2102212464
    %v1456 = vsel %vm1452, %v1440, %v1455
    %v1457 = vsel %vm1451, %v1454, %v1456
    %v1458 = vsel %vm1450, %v1437, %v1440
    %v1459 = vsel %vm1453, %v1446, 920167782
    %v1460 = vsel %vm1452, %v1443, %v1459
    %v1461 = vsel %vm1451, %v1458, %v1460
    %v1462 = vsel %vm1450, %v1440, %v1443
    %v1463 = vsel %vm1453, %v1449, 1326507024
    %v1464 = vsel %vm1452, %v1446, %v1463
    %v1465 = vsel %vm1451, %v1462, %v1464
    %v1466 = vshll.u32 %v1426, 8
    %v1467 = vmul.u32.u64.compose %v1466, %v1465
    %v1468 = vextract.low.u32 %v1467
    %v1469 = vextract.high.u32 %v1467
    %v1470 = vmul.u32.u64.compose %v1466, %v1461
    %v1471 = vextract.low.u32 %v1470
    %v1472 = vextract.high.u32 %v1470
    %v1473 = vmul.u32 %v1466, %v1457
    %v1474 = vadd.s32 %v1469, %v1471
    %vm1475 = vc.u32 %v1469, %v1471
    %v1476 = vadd.s32 %v1472, 1
    %v1477 = vsel %vm1475, %v1476, %v1472
    %v1478 = vadd.s32 %v1473, %v1477
    %v1479 = vadd.s32 %v1478, 536870912
    %v1480 = vshrl.u32 %v1479, 30
    %v1481 = vshll.u32 %v1480, 30
    %v1482 = vsub.s32 %v1478, %v1481
    %vm1483 = vcmp.lt.s32.totalorder %v1482, 0
    %v1484 = vsub.s32 0, %v1482
    %v1485 = vsel %vm1483, %v1484, %v1482
    %v1486 = vclz %v1485
    %v1487 = vsub.s32 %v1486, 2
    %vm1488 = vcmp.gt.s32.totalorder 0, %v1487
    %v1489 = vsel %vm1488, 0, %v1487
    %v1490 = vsub.s32 32, %v1489
    %v1491 = vshll.u32 %v1482, %v1489
    %v1492 = vshrl.u32 %v1474, %v1490
    %v1493 = vor.u32 %v1491, %v1492
    %v1494 = vsub.s32 4294967266, %v1489
    %v1495 = vadd.s32 %v1494, 127
    %v1496 = vshll.u32 %v1495, 23
    %v1497 = vor.u32 4788187, %v1496
    %v1498 = vand.u32 2147483647, %v1497
    %v1500 = vcvt.s32.f32 %v1493
    %v1501 = vmul.f32 %v1500, %v1498
    %v1502 = vxor.u32 %v1501, 2147483648
    %v1503 = vsel %vm1420, %v1502, %v1501
    %v1504 = vsub.s32 4, %v1480
    %v1505 = vsel %vm1420, %v1504, %v1480
    %v1506 = vsel %vm1419, %v166, %v1503
    %v1507 = vsel %vm1419, 0, %v1505
    %v1508 = vcosq.f32.pop %v1506
    %v1509 = vsinq.f32.pop %v1506
    %vm1510 = vweird.f32 %v166
    %v1511 = vadd.s32 %v1507, 3
    %v1512 = vand.u32 %v1511, 3
    %vm1513 = vcmp.lt.s32.totalorder %v1512, 2
    %vm1514 = vcmp.eq.s32.totalorder %v1512, 0
    %v1515 = vxor.u32 %v1509, 2147483648
    %v1516 = vsel %vm1514, %v1508, %v1515
    %vm1517 = vcmp.eq.s32.totalorder %v1512, 2
    %v1518 = vxor.u32 %v1508, 2147483648
    %v1519 = vsel %vm1517, %v1518, %v1509
    %v1520 = vsel %vm1513, %v1516, %v1519
    %v1521 = vsel %vm1510, nan, %v1520
    %v1522 = vand.u32 2147483647, %v167
    %vm1523 = vcmp.le.f32.partialorder %v1522, 0.7853982
    %vm1524 = vcmp.lt.s32.totalorder %v167, 0
    %v1525 = vand.u32 %v167, 2139095040
    %v1526 = vshrl.u32 %v1525, 23
    %v1527 = vsub.s32 %v1526, 127
    %v1528 = vand.u32 2147483647, %v167
    %v1529 = vand.u32 %v1528, 8388607
    %v1530 = vor.u32 %v1529, 8388608
    %v1531 = vsub.s32 0, %v1530
    %v1532 = vadd.s32 %v1527, 1
    %vm1533 = vcmp.gt.s32.totalorder %v1532, 0
    %v1534 = vsel %vm1533, %v1532, 0
    %v1535 = vshrl.u32 %v1534, 5
    %v1536 = vand.u32 %v1534, 31
    %v1537 = vsub.s32 32, %v1536
    %v1538 = vshrl.u32 683565275, %v1537
    %v1539 = vshll.u32 683565275, %v1536
    %v1540 = vshrl.u32 2475754826, %v1537
    %v1541 = vor.u32 %v1539, %v1540
    %v1542 = vshll.u32 2475754826, %v1536
    %v1543 = vshrl.u32 2131351028, %v1537
    %v1544 = vor.u32 %v1542, %v1543
    %v1545 = vshll.u32 2131351028, %v1536
    %v1546 = vshrl.u32 2102212464, %v1537
    %v1547 = vor.u32 %v1545, %v1546
    %v1548 = vshll.u32 2102212464, %v1536
    %v1549 = vshrl.u32 920167782, %v1537
    %v1550 = vor.u32 %v1548, %v1549
    %v1551 = vshll.u32 920167782, %v1536
    %v1552 = vshrl.u32 1326507024, %v1537
    %v1553 = vor.u32 %v1551, %v1552
    %vm1554 = vcmp.lt.s32.totalorder %v1535, 1
    %vm1555 = vcmp.lt.s32.totalorder %v1535, 2
    %vm1556 = vcmp.lt.s32.totalorder %v1535, 3
    %vm1557 = vcmp.lt.s32.totalorder %v1535, 4
    %v1558 = vsel %vm1554, %v1538, %v1541
    %v1559 = vsel %vm1557, %v1547, 2102212464
    %v1560 = vsel %vm1556, %v1544, %v1559
    %v1561 = vsel %vm1555, %v1558, %v1560
    %v1562 = vsel %vm1554, %v1541, %v1544
    %v1563 = vsel %vm1557, %v1550, 920167782
    %v1564 = vsel %vm1556, %v1547, %v1563
    %v1565 = vsel %vm1555, %v1562, %v1564
    %v1566 = vsel %vm1554, %v1544, %v1547
    %v1567 = vsel %vm1557, %v1553, 1326507024
    %v1568 = vsel %vm1556, %v1550, %v1567
    %v1569 = vsel %vm1555, %v1566, %v1568
    %v1570 = vshll.u32 %v1530, 8
    %v1571 = vmul.u32.u64.compose %v1570, %v1569
    %v1572 = vextract.low.u32 %v1571
    %v1573 = vextract.high.u32 %v1571
    %v1574 = vmul.u32.u64.compose %v1570, %v1565
    %v1575 = vextract.low.u32 %v1574
    %v1576 = vextract.high.u32 %v1574
    %v1577 = vmul.u32 %v1570, %v1561
    %v1578 = vadd.s32 %v1573, %v1575
    %vm1579 = vc.u32 %v1573, %v1575
    %v1580 = vadd.s32 %v1576, 1
    %v1581 = vsel %vm1579, %v1580, %v1576
    %v1582 = vadd.s32 %v1577, %v1581
    %v1583 = vadd.s32 %v1582, 536870912
    %v1584 = vshrl.u32 %v1583, 30
    %v1585 = vshll.u32 %v1584, 30
    %v1586 = vsub.s32 %v1582, %v1585
    %vm1587 = vcmp.lt.s32.totalorder %v1586, 0
    %v1588 = vsub.s32 0, %v1586
    %v1589 = vsel %vm1587, %v1588, %v1586
    %v1590 = vclz %v1589
    %v1591 = vsub.s32 %v1590, 2
    %vm1592 = vcmp.gt.s32.totalorder 0, %v1591
    %v1593 = vsel %vm1592, 0, %v1591
    %v1594 = vsub.s32 32, %v1593
    %v1595 = vshll.u32 %v1586, %v1593
    %v1596 = vshrl.u32 %v1578, %v1594
    %v1597 = vor.u32 %v1595, %v1596
    %v1598 = vsub.s32 4294967266, %v1593
    %v1599 = vadd.s32 %v1598, 127
    %v1600 = vshll.u32 %v1599, 23
    %v1601 = vor.u32 4788187, %v1600
    %v1602 = vand.u32 2147483647, %v1601
    %v1604 = vcvt.s32.f32 %v1597
    %v1605 = vmul.f32 %v1604, %v1602
    %v1606 = vxor.u32 %v1605, 2147483648
    %v1607 = vsel %vm1524, %v1606, %v1605
    %v1608 = vsub.s32 4, %v1584
    %v1609 = vsel %vm1524, %v1608, %v1584
    %v1610 = vsel %vm1523, %v167, %v1607
    %v1611 = vsel %vm1523, 0, %v1609
    %v1612 = vcosq.f32.pop %v1610
    %v1613 = vsinq.f32.pop %v1610
    %vm1614 = vweird.f32 %v167
    %v1615 = vadd.s32 %v1611, 3
    %v1616 = vand.u32 %v1615, 3
    %vm1617 = vcmp.lt.s32.totalorder %v1616, 2
    %vm1618 = vcmp.eq.s32.totalorder %v1616, 0
    %v1619 = vxor.u32 %v1613, 2147483648
    %v1620 = vsel %vm1618, %v1612, %v1619
    %vm1621 = vcmp.eq.s32.totalorder %v1616, 2
    %v1622 = vxor.u32 %v1612, 2147483648
    %v1623 = vsel %vm1621, %v1622, %v1613
    %v1624 = vsel %vm1617, %v1620, %v1623
    %v1625 = vsel %vm1614, nan, %v1624
    %v1626 = vand.u32 2147483647, %v168
    %vm1627 = vcmp.le.f32.partialorder %v1626, 0.7853982
    %vm1628 = vcmp.lt.s32.totalorder %v168, 0
    %v1629 = vand.u32 %v168, 2139095040
    %v1630 = vshrl.u32 %v1629, 23
    %v1631 = vsub.s32 %v1630, 127
    %v1632 = vand.u32 2147483647, %v168
    %v1633 = vand.u32 %v1632, 8388607
    %v1634 = vor.u32 %v1633, 8388608
    %v1635 = vsub.s32 0, %v1634
    %v1636 = vadd.s32 %v1631, 1
    %vm1637 = vcmp.gt.s32.totalorder %v1636, 0
    %v1638 = vsel %vm1637, %v1636, 0
    %v1639 = vshrl.u32 %v1638, 5
    %v1640 = vand.u32 %v1638, 31
    %v1641 = vsub.s32 32, %v1640
    %v1642 = vshrl.u32 683565275, %v1641
    %v1643 = vshll.u32 683565275, %v1640
    %v1644 = vshrl.u32 2475754826, %v1641
    %v1645 = vor.u32 %v1643, %v1644
    %v1646 = vshll.u32 2475754826, %v1640
    %v1647 = vshrl.u32 2131351028, %v1641
    %v1648 = vor.u32 %v1646, %v1647
    %v1649 = vshll.u32 2131351028, %v1640
    %v1650 = vshrl.u32 2102212464, %v1641
    %v1651 = vor.u32 %v1649, %v1650
    %v1652 = vshll.u32 2102212464, %v1640
    %v1653 = vshrl.u32 920167782, %v1641
    %v1654 = vor.u32 %v1652, %v1653
    %v1655 = vshll.u32 920167782, %v1640
    %v1656 = vshrl.u32 1326507024, %v1641
    %v1657 = vor.u32 %v1655, %v1656
    %vm1658 = vcmp.lt.s32.totalorder %v1639, 1
    %vm1659 = vcmp.lt.s32.totalorder %v1639, 2
    %vm1660 = vcmp.lt.s32.totalorder %v1639, 3
    %vm1661 = vcmp.lt.s32.totalorder %v1639, 4
    %v1662 = vsel %vm1658, %v1642, %v1645
    %v1663 = vsel %vm1661, %v1651, 2102212464
    %v1664 = vsel %vm1660, %v1648, %v1663
    %v1665 = vsel %vm1659, %v1662, %v1664
    %v1666 = vsel %vm1658, %v1645, %v1648
    %v1667 = vsel %vm1661, %v1654, 920167782
    %v1668 = vsel %vm1660, %v1651, %v1667
    %v1669 = vsel %vm1659, %v1666, %v1668
    %v1670 = vsel %vm1658, %v1648, %v1651
    %v1671 = vsel %vm1661, %v1657, 1326507024
    %v1672 = vsel %vm1660, %v1654, %v1671
    %v1673 = vsel %vm1659, %v1670, %v1672
    %v1674 = vshll.u32 %v1634, 8
    %v1675 = vmul.u32.u64.compose %v1674, %v1673
    %v1676 = vextract.low.u32 %v1675
    %v1677 = vextract.high.u32 %v1675
    %v1678 = vmul.u32.u64.compose %v1674, %v1669
    %v1679 = vextract.low.u32 %v1678
    %v1680 = vextract.high.u32 %v1678
    %v1681 = vmul.u32 %v1674, %v1665
    %v1682 = vadd.s32 %v1677, %v1679
    %vm1683 = vc.u32 %v1677, %v1679
    %v1684 = vadd.s32 %v1680, 1
    %v1685 = vsel %vm1683, %v1684, %v1680
    %v1686 = vadd.s32 %v1681, %v1685
    %v1687 = vadd.s32 %v1686, 536870912
    %v1688 = vshrl.u32 %v1687, 30
    %v1689 = vshll.u32 %v1688, 30
    %v1690 = vsub.s32 %v1686, %v1689
    %vm1691 = vcmp.lt.s32.totalorder %v1690, 0
    %v1692 = vsub.s32 0, %v1690
    %v1693 = vsel %vm1691, %v1692, %v1690
    %v1694 = vclz %v1693
    %v1695 = vsub.s32 %v1694, 2
    %vm1696 = vcmp.gt.s32.totalorder 0, %v1695
    %v1697 = vsel %vm1696, 0, %v1695
    %v1698 = vsub.s32 32, %v1697
    %v1699 = vshll.u32 %v1690, %v1697
    %v1700 = vshrl.u32 %v1682, %v1698
    %v1701 = vor.u32 %v1699, %v1700
    %v1702 = vsub.s32 4294967266, %v1697
    %v1703 = vadd.s32 %v1702, 127
    %v1704 = vshll.u32 %v1703, 23
    %v1705 = vor.u32 4788187, %v1704
    %v1706 = vand.u32 2147483647, %v1705
    %v1708 = vcvt.s32.f32 %v1701
    %v1709 = vmul.f32 %v1708, %v1706
    %v1710 = vxor.u32 %v1709, 2147483648
    %v1711 = vsel %vm1628, %v1710, %v1709
    %v1712 = vsub.s32 4, %v1688
    %v1713 = vsel %vm1628, %v1712, %v1688
    %v1714 = vsel %vm1627, %v168, %v1711
    %v1715 = vsel %vm1627, 0, %v1713
    %v1716 = vcosq.f32.pop %v1714
    %v1717 = vsinq.f32.pop %v1714
    %vm1718 = vweird.f32 %v168
    %v1719 = vadd.s32 %v1715, 3
    %v1720 = vand.u32 %v1719, 3
    %vm1721 = vcmp.lt.s32.totalorder %v1720, 2
    %vm1722 = vcmp.eq.s32.totalorder %v1720, 0
    %v1723 = vxor.u32 %v1717, 2147483648
    %v1724 = vsel %vm1722, %v1716, %v1723
    %vm1725 = vcmp.eq.s32.totalorder %v1720, 2
    %v1726 = vxor.u32 %v1716, 2147483648
    %v1727 = vsel %vm1725, %v1726, %v1717
    %v1728 = vsel %vm1721, %v1724, %v1727
    %v1729 = vsel %vm1718, nan, %v1728
    %v1730 = vand.u32 2147483647, %v169
    %vm1731 = vcmp.le.f32.partialorder %v1730, 0.7853982
    %vm1732 = vcmp.lt.s32.totalorder %v169, 0
    %v1733 = vand.u32 %v169, 2139095040
    %v1734 = vshrl.u32 %v1733, 23
    %v1735 = vsub.s32 %v1734, 127
    %v1736 = vand.u32 2147483647, %v169
    %v1737 = vand.u32 %v1736, 8388607
    %v1738 = vor.u32 %v1737, 8388608
    %v1739 = vsub.s32 0, %v1738
    %v1740 = vadd.s32 %v1735, 1
    %vm1741 = vcmp.gt.s32.totalorder %v1740, 0
    %v1742 = vsel %vm1741, %v1740, 0
    %v1743 = vshrl.u32 %v1742, 5
    %v1744 = vand.u32 %v1742, 31
    %v1745 = vsub.s32 32, %v1744
    %v1746 = vshrl.u32 683565275, %v1745
    %v1747 = vshll.u32 683565275, %v1744
    %v1748 = vshrl.u32 2475754826, %v1745
    %v1749 = vor.u32 %v1747, %v1748
    %v1750 = vshll.u32 2475754826, %v1744
    %v1751 = vshrl.u32 2131351028, %v1745
    %v1752 = vor.u32 %v1750, %v1751
    %v1753 = vshll.u32 2131351028, %v1744
    %v1754 = vshrl.u32 2102212464, %v1745
    %v1755 = vor.u32 %v1753, %v1754
    %v1756 = vshll.u32 2102212464, %v1744
    %v1757 = vshrl.u32 920167782, %v1745
    %v1758 = vor.u32 %v1756, %v1757
    %v1759 = vshll.u32 920167782, %v1744
    %v1760 = vshrl.u32 1326507024, %v1745
    %v1761 = vor.u32 %v1759, %v1760
    %vm1762 = vcmp.lt.s32.totalorder %v1743, 1
    %vm1763 = vcmp.lt.s32.totalorder %v1743, 2
    %vm1764 = vcmp.lt.s32.totalorder %v1743, 3
    %vm1765 = vcmp.lt.s32.totalorder %v1743, 4
    %v1766 = vsel %vm1762, %v1746, %v1749
    %v1767 = vsel %vm1765, %v1755, 2102212464
    %v1768 = vsel %vm1764, %v1752, %v1767
    %v1769 = vsel %vm1763, %v1766, %v1768
    %v1770 = vsel %vm1762, %v1749, %v1752
    %v1771 = vsel %vm1765, %v1758, 920167782
    %v1772 = vsel %vm1764, %v1755, %v1771
    %v1773 = vsel %vm1763, %v1770, %v1772
    %v1774 = vsel %vm1762, %v1752, %v1755
    %v1775 = vsel %vm1765, %v1761, 1326507024
    %v1776 = vsel %vm1764, %v1758, %v1775
    %v1777 = vsel %vm1763, %v1774, %v1776
    %v1778 = vshll.u32 %v1738, 8
    %v1779 = vmul.u32.u64.compose %v1778, %v1777
    %v1780 = vextract.low.u32 %v1779
    %v1781 = vextract.high.u32 %v1779
    %v1782 = vmul.u32.u64.compose %v1778, %v1773
    %v1783 = vextract.low.u32 %v1782
    %v1784 = vextract.high.u32 %v1782
    %v1785 = vmul.u32 %v1778, %v1769
    %v1786 = vadd.s32 %v1781, %v1783
    %vm1787 = vc.u32 %v1781, %v1783
    %v1788 = vadd.s32 %v1784, 1
    %v1789 = vsel %vm1787, %v1788, %v1784
    %v1790 = vadd.s32 %v1785, %v1789
    %v1791 = vadd.s32 %v1790, 536870912
    %v1792 = vshrl.u32 %v1791, 30
    %v1793 = vshll.u32 %v1792, 30
    %v1794 = vsub.s32 %v1790, %v1793
    %vm1795 = vcmp.lt.s32.totalorder %v1794, 0
    %v1796 = vsub.s32 0, %v1794
    %v1797 = vsel %vm1795, %v1796, %v1794
    %v1798 = vclz %v1797
    %v1799 = vsub.s32 %v1798, 2
    %vm1800 = vcmp.gt.s32.totalorder 0, %v1799
    %v1801 = vsel %vm1800, 0, %v1799
    %v1802 = vsub.s32 32, %v1801
    %v1803 = vshll.u32 %v1794, %v1801
    %v1804 = vshrl.u32 %v1786, %v1802
    %v1805 = vor.u32 %v1803, %v1804
    %v1806 = vsub.s32 4294967266, %v1801
    %v1807 = vadd.s32 %v1806, 127
    %v1808 = vshll.u32 %v1807, 23
    %v1809 = vor.u32 4788187, %v1808
    %v1810 = vand.u32 2147483647, %v1809
    %v1812 = vcvt.s32.f32 %v1805
    %v1813 = vmul.f32 %v1812, %v1810
    %v1814 = vxor.u32 %v1813, 2147483648
    %v1815 = vsel %vm1732, %v1814, %v1813
    %v1816 = vsub.s32 4, %v1792
    %v1817 = vsel %vm1732, %v1816, %v1792
    %v1818 = vsel %vm1731, %v169, %v1815
    %v1819 = vsel %vm1731, 0, %v1817
    %v1820 = vcosq.f32.pop %v1818
    %v1821 = vsinq.f32.pop %v1818
    %vm1822 = vweird.f32 %v169
    %v1823 = vadd.s32 %v1819, 3
    %v1824 = vand.u32 %v1823, 3
    %vm1825 = vcmp.lt.s32.totalorder %v1824, 2
    %vm1826 = vcmp.eq.s32.totalorder %v1824, 0
    %v1827 = vxor.u32 %v1821, 2147483648
    %v1828 = vsel %vm1826, %v1820, %v1827
    %vm1829 = vcmp.eq.s32.totalorder %v1824, 2
    %v1830 = vxor.u32 %v1820, 2147483648
    %v1831 = vsel %vm1829, %v1830, %v1821
    %v1832 = vsel %vm1825, %v1828, %v1831
    %v1833 = vsel %vm1822, nan, %v1832
    %1834 = vst [vmem:[#allocation5] sm:$0xff] %v273
    %1835 = vst [vmem:[#allocation5 + $0x8] sm:$0xff] %v377
    %1836 = vst [vmem:[#allocation5 + $0x10] sm:$0xff] %v481
    %1837 = vst [vmem:[#allocation5 + $0x18] sm:$0xff] %v585
    %1838 = vst [vmem:[#allocation5 + $0x20] sm:$0xff] %v689
    %1839 = vst [vmem:[#allocation5 + $0x28] sm:$0xff] %v793
    %1840 = vst [vmem:[#allocation5 + $0x30] sm:$0xff] %v897
    %1841 = vst [vmem:[#allocation5 + $0x38] sm:$0xff] %v1001
    %1842 = vst [vmem:[#allocation5 + $0x40] sm:$0xff] %v1105
    %1843 = vst [vmem:[#allocation5 + $0x48] sm:$0xff] %v1209
    %1844 = vst [vmem:[#allocation5 + $0x50] sm:$0xff] %v1313
    %1845 = vst [vmem:[#allocation5 + $0x58] sm:$0xff] %v1417
    %1846 = vst [vmem:[#allocation5 + $0x60] sm:$0xff] %v1521
    %1847 = vst [vmem:[#allocation5 + $0x68] sm:$0xff] %v1625
    %1848 = vst [vmem:[#allocation5 + $0x70] sm:$0xff] %v1729
    %1849 = vst [vmem:[#allocation5 + $0x78] sm:$0xff] %v1833
    %v1850 = vlaneseq
    %v1851 = vshrl.u32 %v1850, 7
    %v1852 = vsub.s32 1, %v1851
    %v1853 = vrot.slane %v118, %v1852
    %v1854 = vlaneseq
    %v1855 = vshrl.u32 %v1854, 7
    %v1856 = vsub.s32 3, %v1855
    %v1857 = vrot.slane %v118, %v1856
    %v1860 = vlaneseq
    %v1861 = vshrl.u32 %v1860, 7
    %v1862 = vsub.s32 1, %v1861
    %v1863 = vrot.slane %v1853, %v1862
    %v1864 = vlaneseq
    %v1865 = vshrl.u32 %v1864, 7
    %v1866 = vsub.s32 1, %v1865
    %v1867 = vrot.slane %v1857, %v1866
    %v1868 = vmul.f32 %v1863, %v87
    %v1869 = vmul.f32 %v1867, %v87
    %v1870 = vmul.f32 %v1863, %v89
    %v1871 = vmul.f32 %v1867, %v89
    %v1872 = vmul.f32 %v1863, %v91
    %v1873 = vmul.f32 %v1867, %v91
    %v1874 = vmul.f32 %v1863, %v93
    %v1875 = vmul.f32 %v1867, %v93
    %v1876 = vmul.f32 %v1863, %v95
    %v1877 = vmul.f32 %v1867, %v95
    %v1878 = vmul.f32 %v1863, %v97
    %v1879 = vmul.f32 %v1867, %v97
    %v1880 = vmul.f32 %v1863, %v99
    %v1881 = vmul.f32 %v1867, %v99
    %v1882 = vmul.f32 %v1863, %v101
    %v1883 = vmul.f32 %v1867, %v101
    %v1884 = vadd.f32 %v1868, %v110
    %v1885 = vadd.f32 %v1869, %v110
    %v1886 = vadd.f32 %v1870, %v111
    %v1887 = vadd.f32 %v1871, %v111
    %v1888 = vadd.f32 %v1872, %v112
    %v1889 = vadd.f32 %v1873, %v112
    %v1890 = vadd.f32 %v1874, %v113
    %v1891 = vadd.f32 %v1875, %v113
    %v1892 = vadd.f32 %v1876, %v114
    %v1893 = vadd.f32 %v1877, %v114
    %v1894 = vadd.f32 %v1878, %v115
    %v1895 = vadd.f32 %v1879, %v115
    %v1896 = vadd.f32 %v1880, %v116
    %v1897 = vadd.f32 %v1881, %v116
    %v1898 = vadd.f32 %v1882, %v117
    %v1899 = vadd.f32 %v1883, %v117
    %v1900 = vand.u32 2147483647, %v1884
    %vm1901 = vcmp.le.f32.partialorder %v1900, 0.7853982
    %vm1902 = vcmp.lt.s32.totalorder %v1884, 0
    %v1903 = vand.u32 %v1884, 2139095040
    %v1904 = vshrl.u32 %v1903, 23
    %v1905 = vsub.s32 %v1904, 127
    %v1906 = vand.u32 2147483647, %v1884
    %v1907 = vand.u32 %v1906, 8388607
    %v1908 = vor.u32 %v1907, 8388608
    %v1909 = vsub.s32 0, %v1908
    %v1910 = vadd.s32 %v1905, 1
    %vm1911 = vcmp.gt.s32.totalorder %v1910, 0
    %v1912 = vsel %vm1911, %v1910, 0
    %v1913 = vshrl.u32 %v1912, 5
    %v1914 = vand.u32 %v1912, 31
    %v1915 = vsub.s32 32, %v1914
    %v1916 = vshrl.u32 683565275, %v1915
    %v1917 = vshll.u32 683565275, %v1914
    %v1918 = vshrl.u32 2475754826, %v1915
    %v1919 = vor.u32 %v1917, %v1918
    %v1920 = vshll.u32 2475754826, %v1914
    %v1921 = vshrl.u32 2131351028, %v1915
    %v1922 = vor.u32 %v1920, %v1921
    %v1923 = vshll.u32 2131351028, %v1914
    %v1924 = vshrl.u32 2102212464, %v1915
    %v1925 = vor.u32 %v1923, %v1924
    %v1926 = vshll.u32 2102212464, %v1914
    %v1927 = vshrl.u32 920167782, %v1915
    %v1928 = vor.u32 %v1926, %v1927
    %v1929 = vshll.u32 920167782, %v1914
    %v1930 = vshrl.u32 1326507024, %v1915
    %v1931 = vor.u32 %v1929, %v1930
    %vm1932 = vcmp.lt.s32.totalorder %v1913, 1
    %vm1933 = vcmp.lt.s32.totalorder %v1913, 2
    %vm1934 = vcmp.lt.s32.totalorder %v1913, 3
    %vm1935 = vcmp.lt.s32.totalorder %v1913, 4
    %v1936 = vsel %vm1932, %v1916, %v1919
    %v1937 = vsel %vm1935, %v1925, 2102212464
    %v1938 = vsel %vm1934, %v1922, %v1937
    %v1939 = vsel %vm1933, %v1936, %v1938
    %v1940 = vsel %vm1932, %v1919, %v1922
    %v1941 = vsel %vm1935, %v1928, 920167782
    %v1942 = vsel %vm1934, %v1925, %v1941
    %v1943 = vsel %vm1933, %v1940, %v1942
    %v1944 = vsel %vm1932, %v1922, %v1925
    %v1945 = vsel %vm1935, %v1931, 1326507024
    %v1946 = vsel %vm1934, %v1928, %v1945
    %v1947 = vsel %vm1933, %v1944, %v1946
    %v1948 = vshll.u32 %v1908, 8
    %v1949 = vmul.u32.u64.compose %v1948, %v1947
    %v1950 = vextract.low.u32 %v1949
    %v1951 = vextract.high.u32 %v1949
    %v1952 = vmul.u32.u64.compose %v1948, %v1943
    %v1953 = vextract.low.u32 %v1952
    %v1954 = vextract.high.u32 %v1952
    %v1955 = vmul.u32 %v1948, %v1939
    %v1956 = vadd.s32 %v1951, %v1953
    %vm1957 = vc.u32 %v1951, %v1953
    %v1958 = vadd.s32 %v1954, 1
    %v1959 = vsel %vm1957, %v1958, %v1954
    %v1960 = vadd.s32 %v1955, %v1959
    %v1961 = vadd.s32 %v1960, 536870912
    %v1962 = vshrl.u32 %v1961, 30
    %v1963 = vshll.u32 %v1962, 30
    %v1964 = vsub.s32 %v1960, %v1963
    %vm1965 = vcmp.lt.s32.totalorder %v1964, 0
    %v1966 = vsub.s32 0, %v1964
    %v1967 = vsel %vm1965, %v1966, %v1964
    %v1968 = vclz %v1967
    %v1969 = vsub.s32 %v1968, 2
    %vm1970 = vcmp.gt.s32.totalorder 0, %v1969
    %v1971 = vsel %vm1970, 0, %v1969
    %v1972 = vsub.s32 32, %v1971
    %v1973 = vshll.u32 %v1964, %v1971
    %v1974 = vshrl.u32 %v1956, %v1972
    %v1975 = vor.u32 %v1973, %v1974
    %v1976 = vsub.s32 4294967266, %v1971
    %v1977 = vadd.s32 %v1976, 127
    %v1978 = vshll.u32 %v1977, 23
    %v1979 = vor.u32 4788187, %v1978
    %v1980 = vand.u32 2147483647, %v1979
    %v1982 = vcvt.s32.f32 %v1975
    %v1983 = vmul.f32 %v1982, %v1980
    %v1984 = vxor.u32 %v1983, 2147483648
    %v1985 = vsel %vm1902, %v1984, %v1983
    %v1986 = vsub.s32 4, %v1962
    %v1987 = vsel %vm1902, %v1986, %v1962
    %v1988 = vsel %vm1901, %v1884, %v1985
    %v1989 = vsel %vm1901, 0, %v1987
    %v1990 = vcosq.f32.pop %v1988
    %v1991 = vsinq.f32.pop %v1988
    %vm1992 = vweird.f32 %v1884
    %v1993 = vadd.s32 %v1989, 3
    %v1994 = vand.u32 %v1993, 3
    %vm1995 = vcmp.lt.s32.totalorder %v1994, 2
    %vm1996 = vcmp.eq.s32.totalorder %v1994, 0
    %v1997 = vxor.u32 %v1991, 2147483648
    %v1998 = vsel %vm1996, %v1990, %v1997
    %vm1999 = vcmp.eq.s32.totalorder %v1994, 2
    %v2000 = vxor.u32 %v1990, 2147483648
    %v2001 = vsel %vm1999, %v2000, %v1991
    %v2002 = vsel %vm1995, %v1998, %v2001
    %v2003 = vsel %vm1992, nan, %v2002
    %v2004 = vand.u32 2147483647, %v1885
    %vm2005 = vcmp.le.f32.partialorder %v2004, 0.7853982
    %vm2006 = vcmp.lt.s32.totalorder %v1885, 0
    %v2007 = vand.u32 %v1885, 2139095040
    %v2008 = vshrl.u32 %v2007, 23
    %v2009 = vsub.s32 %v2008, 127
    %v2010 = vand.u32 2147483647, %v1885
    %v2011 = vand.u32 %v2010, 8388607
    %v2012 = vor.u32 %v2011, 8388608
    %v2013 = vsub.s32 0, %v2012
    %v2014 = vadd.s32 %v2009, 1
    %vm2015 = vcmp.gt.s32.totalorder %v2014, 0
    %v2016 = vsel %vm2015, %v2014, 0
    %v2017 = vshrl.u32 %v2016, 5
    %v2018 = vand.u32 %v2016, 31
    %v2019 = vsub.s32 32, %v2018
    %v2020 = vshrl.u32 683565275, %v2019
    %v2021 = vshll.u32 683565275, %v2018
    %v2022 = vshrl.u32 2475754826, %v2019
    %v2023 = vor.u32 %v2021, %v2022
    %v2024 = vshll.u32 2475754826, %v2018
    %v2025 = vshrl.u32 2131351028, %v2019
    %v2026 = vor.u32 %v2024, %v2025
    %v2027 = vshll.u32 2131351028, %v2018
    %v2028 = vshrl.u32 2102212464, %v2019
    %v2029 = vor.u32 %v2027, %v2028
    %v2030 = vshll.u32 2102212464, %v2018
    %v2031 = vshrl.u32 920167782, %v2019
    %v2032 = vor.u32 %v2030, %v2031
    %v2033 = vshll.u32 920167782, %v2018
    %v2034 = vshrl.u32 1326507024, %v2019
    %v2035 = vor.u32 %v2033, %v2034
    %vm2036 = vcmp.lt.s32.totalorder %v2017, 1
    %vm2037 = vcmp.lt.s32.totalorder %v2017, 2
    %vm2038 = vcmp.lt.s32.totalorder %v2017, 3
    %vm2039 = vcmp.lt.s32.totalorder %v2017, 4
    %v2040 = vsel %vm2036, %v2020, %v2023
    %v2041 = vsel %vm2039, %v2029, 2102212464
    %v2042 = vsel %vm2038, %v2026, %v2041
    %v2043 = vsel %vm2037, %v2040, %v2042
    %v2044 = vsel %vm2036, %v2023, %v2026
    %v2045 = vsel %vm2039, %v2032, 920167782
    %v2046 = vsel %vm2038, %v2029, %v2045
    %v2047 = vsel %vm2037, %v2044, %v2046
    %v2048 = vsel %vm2036, %v2026, %v2029
    %v2049 = vsel %vm2039, %v2035, 1326507024
    %v2050 = vsel %vm2038, %v2032, %v2049
    %v2051 = vsel %vm2037, %v2048, %v2050
    %v2052 = vshll.u32 %v2012, 8
    %v2053 = vmul.u32.u64.compose %v2052, %v2051
    %v2054 = vextract.low.u32 %v2053
    %v2055 = vextract.high.u32 %v2053
    %v2056 = vmul.u32.u64.compose %v2052, %v2047
    %v2057 = vextract.low.u32 %v2056
    %v2058 = vextract.high.u32 %v2056
    %v2059 = vmul.u32 %v2052, %v2043
    %v2060 = vadd.s32 %v2055, %v2057
    %vm2061 = vc.u32 %v2055, %v2057
    %v2062 = vadd.s32 %v2058, 1
    %v2063 = vsel %vm2061, %v2062, %v2058
    %v2064 = vadd.s32 %v2059, %v2063
    %v2065 = vadd.s32 %v2064, 536870912
    %v2066 = vshrl.u32 %v2065, 30
    %v2067 = vshll.u32 %v2066, 30
    %v2068 = vsub.s32 %v2064, %v2067
    %vm2069 = vcmp.lt.s32.totalorder %v2068, 0
    %v2070 = vsub.s32 0, %v2068
    %v2071 = vsel %vm2069, %v2070, %v2068
    %v2072 = vclz %v2071
    %v2073 = vsub.s32 %v2072, 2
    %vm2074 = vcmp.gt.s32.totalorder 0, %v2073
    %v2075 = vsel %vm2074, 0, %v2073
    %v2076 = vsub.s32 32, %v2075
    %v2077 = vshll.u32 %v2068, %v2075
    %v2078 = vshrl.u32 %v2060, %v2076
    %v2079 = vor.u32 %v2077, %v2078
    %v2080 = vsub.s32 4294967266, %v2075
    %v2081 = vadd.s32 %v2080, 127
    %v2082 = vshll.u32 %v2081, 23
    %v2083 = vor.u32 4788187, %v2082
    %v2084 = vand.u32 2147483647, %v2083
    %v2086 = vcvt.s32.f32 %v2079
    %v2087 = vmul.f32 %v2086, %v2084
    %v2088 = vxor.u32 %v2087, 2147483648
    %v2089 = vsel %vm2006, %v2088, %v2087
    %v2090 = vsub.s32 4, %v2066
    %v2091 = vsel %vm2006, %v2090, %v2066
    %v2092 = vsel %vm2005, %v1885, %v2089
    %v2093 = vsel %vm2005, 0, %v2091
    %v2094 = vcosq.f32.pop %v2092
    %v2095 = vsinq.f32.pop %v2092
    %vm2096 = vweird.f32 %v1885
    %v2097 = vadd.s32 %v2093, 3
    %v2098 = vand.u32 %v2097, 3
    %vm2099 = vcmp.lt.s32.totalorder %v2098, 2
    %vm2100 = vcmp.eq.s32.totalorder %v2098, 0
    %v2101 = vxor.u32 %v2095, 2147483648
    %v2102 = vsel %vm2100, %v2094, %v2101
    %vm2103 = vcmp.eq.s32.totalorder %v2098, 2
    %v2104 = vxor.u32 %v2094, 2147483648
    %v2105 = vsel %vm2103, %v2104, %v2095
    %v2106 = vsel %vm2099, %v2102, %v2105
    %v2107 = vsel %vm2096, nan, %v2106
    %v2108 = vand.u32 2147483647, %v1886
    %vm2109 = vcmp.le.f32.partialorder %v2108, 0.7853982
    %vm2110 = vcmp.lt.s32.totalorder %v1886, 0
    %v2111 = vand.u32 %v1886, 2139095040
    %v2112 = vshrl.u32 %v2111, 23
    %v2113 = vsub.s32 %v2112, 127
    %v2114 = vand.u32 2147483647, %v1886
    %v2115 = vand.u32 %v2114, 8388607
    %v2116 = vor.u32 %v2115, 8388608
    %v2117 = vsub.s32 0, %v2116
    %v2118 = vadd.s32 %v2113, 1
    %vm2119 = vcmp.gt.s32.totalorder %v2118, 0
    %v2120 = vsel %vm2119, %v2118, 0
    %v2121 = vshrl.u32 %v2120, 5
    %v2122 = vand.u32 %v2120, 31
    %v2123 = vsub.s32 32, %v2122
    %v2124 = vshrl.u32 683565275, %v2123
    %v2125 = vshll.u32 683565275, %v2122
    %v2126 = vshrl.u32 2475754826, %v2123
    %v2127 = vor.u32 %v2125, %v2126
    %v2128 = vshll.u32 2475754826, %v2122
    %v2129 = vshrl.u32 2131351028, %v2123
    %v2130 = vor.u32 %v2128, %v2129
    %v2131 = vshll.u32 2131351028, %v2122
    %v2132 = vshrl.u32 2102212464, %v2123
    %v2133 = vor.u32 %v2131, %v2132
    %v2134 = vshll.u32 2102212464, %v2122
    %v2135 = vshrl.u32 920167782, %v2123
    %v2136 = vor.u32 %v2134, %v2135
    %v2137 = vshll.u32 920167782, %v2122
    %v2138 = vshrl.u32 1326507024, %v2123
    %v2139 = vor.u32 %v2137, %v2138
    %vm2140 = vcmp.lt.s32.totalorder %v2121, 1
    %vm2141 = vcmp.lt.s32.totalorder %v2121, 2
    %vm2142 = vcmp.lt.s32.totalorder %v2121, 3
    %vm2143 = vcmp.lt.s32.totalorder %v2121, 4
    %v2144 = vsel %vm2140, %v2124, %v2127
    %v2145 = vsel %vm2143, %v2133, 2102212464
    %v2146 = vsel %vm2142, %v2130, %v2145
    %v2147 = vsel %vm2141, %v2144, %v2146
    %v2148 = vsel %vm2140, %v2127, %v2130
    %v2149 = vsel %vm2143, %v2136, 920167782
    %v2150 = vsel %vm2142, %v2133, %v2149
    %v2151 = vsel %vm2141, %v2148, %v2150
    %v2152 = vsel %vm2140, %v2130, %v2133
    %v2153 = vsel %vm2143, %v2139, 1326507024
    %v2154 = vsel %vm2142, %v2136, %v2153
    %v2155 = vsel %vm2141, %v2152, %v2154
    %v2156 = vshll.u32 %v2116, 8
    %v2157 = vmul.u32.u64.compose %v2156, %v2155
    %v2158 = vextract.low.u32 %v2157
    %v2159 = vextract.high.u32 %v2157
    %v2160 = vmul.u32.u64.compose %v2156, %v2151
    %v2161 = vextract.low.u32 %v2160
    %v2162 = vextract.high.u32 %v2160
    %v2163 = vmul.u32 %v2156, %v2147
    %v2164 = vadd.s32 %v2159, %v2161
    %vm2165 = vc.u32 %v2159, %v2161
    %v2166 = vadd.s32 %v2162, 1
    %v2167 = vsel %vm2165, %v2166, %v2162
    %v2168 = vadd.s32 %v2163, %v2167
    %v2169 = vadd.s32 %v2168, 536870912
    %v2170 = vshrl.u32 %v2169, 30
    %v2171 = vshll.u32 %v2170, 30
    %v2172 = vsub.s32 %v2168, %v2171
    %vm2173 = vcmp.lt.s32.totalorder %v2172, 0
    %v2174 = vsub.s32 0, %v2172
    %v2175 = vsel %vm2173, %v2174, %v2172
    %v2176 = vclz %v2175
    %v2177 = vsub.s32 %v2176, 2
    %vm2178 = vcmp.gt.s32.totalorder 0, %v2177
    %v2179 = vsel %vm2178, 0, %v2177
    %v2180 = vsub.s32 32, %v2179
    %v2181 = vshll.u32 %v2172, %v2179
    %v2182 = vshrl.u32 %v2164, %v2180
    %v2183 = vor.u32 %v2181, %v2182
    %v2184 = vsub.s32 4294967266, %v2179
    %v2185 = vadd.s32 %v2184, 127
    %v2186 = vshll.u32 %v2185, 23
    %v2187 = vor.u32 4788187, %v2186
    %v2188 = vand.u32 2147483647, %v2187
    %v2190 = vcvt.s32.f32 %v2183
    %v2191 = vmul.f32 %v2190, %v2188
    %v2192 = vxor.u32 %v2191, 2147483648
    %v2193 = vsel %vm2110, %v2192, %v2191
    %v2194 = vsub.s32 4, %v2170
    %v2195 = vsel %vm2110, %v2194, %v2170
    %v2196 = vsel %vm2109, %v1886, %v2193
    %v2197 = vsel %vm2109, 0, %v2195
    %v2198 = vcosq.f32.pop %v2196
    %v2199 = vsinq.f32.pop %v2196
    %vm2200 = vweird.f32 %v1886
    %v2201 = vadd.s32 %v2197, 3
    %v2202 = vand.u32 %v2201, 3
    %vm2203 = vcmp.lt.s32.totalorder %v2202, 2
    %vm2204 = vcmp.eq.s32.totalorder %v2202, 0
    %v2205 = vxor.u32 %v2199, 2147483648
    %v2206 = vsel %vm2204, %v2198, %v2205
    %vm2207 = vcmp.eq.s32.totalorder %v2202, 2
    %v2208 = vxor.u32 %v2198, 2147483648
    %v2209 = vsel %vm2207, %v2208, %v2199
    %v2210 = vsel %vm2203, %v2206, %v2209
    %v2211 = vsel %vm2200, nan, %v2210
    %v2212 = vand.u32 2147483647, %v1887
    %vm2213 = vcmp.le.f32.partialorder %v2212, 0.7853982
    %vm2214 = vcmp.lt.s32.totalorder %v1887, 0
    %v2215 = vand.u32 %v1887, 2139095040
    %v2216 = vshrl.u32 %v2215, 23
    %v2217 = vsub.s32 %v2216, 127
    %v2218 = vand.u32 2147483647, %v1887
    %v2219 = vand.u32 %v2218, 8388607
    %v2220 = vor.u32 %v2219, 8388608
    %v2221 = vsub.s32 0, %v2220
    %v2222 = vadd.s32 %v2217, 1
    %vm2223 = vcmp.gt.s32.totalorder %v2222, 0
    %v2224 = vsel %vm2223, %v2222, 0
    %v2225 = vshrl.u32 %v2224, 5
    %v2226 = vand.u32 %v2224, 31
    %v2227 = vsub.s32 32, %v2226
    %v2228 = vshrl.u32 683565275, %v2227
    %v2229 = vshll.u32 683565275, %v2226
    %v2230 = vshrl.u32 2475754826, %v2227
    %v2231 = vor.u32 %v2229, %v2230
    %v2232 = vshll.u32 2475754826, %v2226
    %v2233 = vshrl.u32 2131351028, %v2227
    %v2234 = vor.u32 %v2232, %v2233
    %v2235 = vshll.u32 2131351028, %v2226
    %v2236 = vshrl.u32 2102212464, %v2227
    %v2237 = vor.u32 %v2235, %v2236
    %v2238 = vshll.u32 2102212464, %v2226
    %v2239 = vshrl.u32 920167782, %v2227
    %v2240 = vor.u32 %v2238, %v2239
    %v2241 = vshll.u32 920167782, %v2226
    %v2242 = vshrl.u32 1326507024, %v2227
    %v2243 = vor.u32 %v2241, %v2242
    %vm2244 = vcmp.lt.s32.totalorder %v2225, 1
    %vm2245 = vcmp.lt.s32.totalorder %v2225, 2
    %vm2246 = vcmp.lt.s32.totalorder %v2225, 3
    %vm2247 = vcmp.lt.s32.totalorder %v2225, 4
    %v2248 = vsel %vm2244, %v2228, %v2231
    %v2249 = vsel %vm2247, %v2237, 2102212464
    %v2250 = vsel %vm2246, %v2234, %v2249
    %v2251 = vsel %vm2245, %v2248, %v2250
    %v2252 = vsel %vm2244, %v2231, %v2234
    %v2253 = vsel %vm2247, %v2240, 920167782
    %v2254 = vsel %vm2246, %v2237, %v2253
    %v2255 = vsel %vm2245, %v2252, %v2254
    %v2256 = vsel %vm2244, %v2234, %v2237
    %v2257 = vsel %vm2247, %v2243, 1326507024
    %v2258 = vsel %vm2246, %v2240, %v2257
    %v2259 = vsel %vm2245, %v2256, %v2258
    %v2260 = vshll.u32 %v2220, 8
    %v2261 = vmul.u32.u64.compose %v2260, %v2259
    %v2262 = vextract.low.u32 %v2261
    %v2263 = vextract.high.u32 %v2261
    %v2264 = vmul.u32.u64.compose %v2260, %v2255
    %v2265 = vextract.low.u32 %v2264
    %v2266 = vextract.high.u32 %v2264
    %v2267 = vmul.u32 %v2260, %v2251
    %v2268 = vadd.s32 %v2263, %v2265
    %vm2269 = vc.u32 %v2263, %v2265
    %v2270 = vadd.s32 %v2266, 1
    %v2271 = vsel %vm2269, %v2270, %v2266
    %v2272 = vadd.s32 %v2267, %v2271
    %v2273 = vadd.s32 %v2272, 536870912
    %v2274 = vshrl.u32 %v2273, 30
    %v2275 = vshll.u32 %v2274, 30
    %v2276 = vsub.s32 %v2272, %v2275
    %vm2277 = vcmp.lt.s32.totalorder %v2276, 0
    %v2278 = vsub.s32 0, %v2276
    %v2279 = vsel %vm2277, %v2278, %v2276
    %v2280 = vclz %v2279
    %v2281 = vsub.s32 %v2280, 2
    %vm2282 = vcmp.gt.s32.totalorder 0, %v2281
    %v2283 = vsel %vm2282, 0, %v2281
    %v2284 = vsub.s32 32, %v2283
    %v2285 = vshll.u32 %v2276, %v2283
    %v2286 = vshrl.u32 %v2268, %v2284
    %v2287 = vor.u32 %v2285, %v2286
    %v2288 = vsub.s32 4294967266, %v2283
    %v2289 = vadd.s32 %v2288, 127
    %v2290 = vshll.u32 %v2289, 23
    %v2291 = vor.u32 4788187, %v2290
    %v2292 = vand.u32 2147483647, %v2291
    %v2294 = vcvt.s32.f32 %v2287
    %v2295 = vmul.f32 %v2294, %v2292
    %v2296 = vxor.u32 %v2295, 2147483648
    %v2297 = vsel %vm2214, %v2296, %v2295
    %v2298 = vsub.s32 4, %v2274
    %v2299 = vsel %vm2214, %v2298, %v2274
    %v2300 = vsel %vm2213, %v1887, %v2297
    %v2301 = vsel %vm2213, 0, %v2299
    %v2302 = vcosq.f32.pop %v2300
    %v2303 = vsinq.f32.pop %v2300
    %vm2304 = vweird.f32 %v1887
    %v2305 = vadd.s32 %v2301, 3
    %v2306 = vand.u32 %v2305, 3
    %vm2307 = vcmp.lt.s32.totalorder %v2306, 2
    %vm2308 = vcmp.eq.s32.totalorder %v2306, 0
    %v2309 = vxor.u32 %v2303, 2147483648
    %v2310 = vsel %vm2308, %v2302, %v2309
    %vm2311 = vcmp.eq.s32.totalorder %v2306, 2
    %v2312 = vxor.u32 %v2302, 2147483648
    %v2313 = vsel %vm2311, %v2312, %v2303
    %v2314 = vsel %vm2307, %v2310, %v2313
    %v2315 = vsel %vm2304, nan, %v2314
    %v2316 = vand.u32 2147483647, %v1888
    %vm2317 = vcmp.le.f32.partialorder %v2316, 0.7853982
    %vm2318 = vcmp.lt.s32.totalorder %v1888, 0
    %v2319 = vand.u32 %v1888, 2139095040
    %v2320 = vshrl.u32 %v2319, 23
    %v2321 = vsub.s32 %v2320, 127
    %v2322 = vand.u32 2147483647, %v1888
    %v2323 = vand.u32 %v2322, 8388607
    %v2324 = vor.u32 %v2323, 8388608
    %v2325 = vsub.s32 0, %v2324
    %v2326 = vadd.s32 %v2321, 1
    %vm2327 = vcmp.gt.s32.totalorder %v2326, 0
    %v2328 = vsel %vm2327, %v2326, 0
    %v2329 = vshrl.u32 %v2328, 5
    %v2330 = vand.u32 %v2328, 31
    %v2331 = vsub.s32 32, %v2330
    %v2332 = vshrl.u32 683565275, %v2331
    %v2333 = vshll.u32 683565275, %v2330
    %v2334 = vshrl.u32 2475754826, %v2331
    %v2335 = vor.u32 %v2333, %v2334
    %v2336 = vshll.u32 2475754826, %v2330
    %v2337 = vshrl.u32 2131351028, %v2331
    %v2338 = vor.u32 %v2336, %v2337
    %v2339 = vshll.u32 2131351028, %v2330
    %v2340 = vshrl.u32 2102212464, %v2331
    %v2341 = vor.u32 %v2339, %v2340
    %v2342 = vshll.u32 2102212464, %v2330
    %v2343 = vshrl.u32 920167782, %v2331
    %v2344 = vor.u32 %v2342, %v2343
    %v2345 = vshll.u32 920167782, %v2330
    %v2346 = vshrl.u32 1326507024, %v2331
    %v2347 = vor.u32 %v2345, %v2346
    %vm2348 = vcmp.lt.s32.totalorder %v2329, 1
    %vm2349 = vcmp.lt.s32.totalorder %v2329, 2
    %vm2350 = vcmp.lt.s32.totalorder %v2329, 3
    %vm2351 = vcmp.lt.s32.totalorder %v2329, 4
    %v2352 = vsel %vm2348, %v2332, %v2335
    %v2353 = vsel %vm2351, %v2341, 2102212464
    %v2354 = vsel %vm2350, %v2338, %v2353
    %v2355 = vsel %vm2349, %v2352, %v2354
    %v2356 = vsel %vm2348, %v2335, %v2338
    %v2357 = vsel %vm2351, %v2344, 920167782
    %v2358 = vsel %vm2350, %v2341, %v2357
    %v2359 = vsel %vm2349, %v2356, %v2358
    %v2360 = vsel %vm2348, %v2338, %v2341
    %v2361 = vsel %vm2351, %v2347, 1326507024
    %v2362 = vsel %vm2350, %v2344, %v2361
    %v2363 = vsel %vm2349, %v2360, %v2362
    %v2364 = vshll.u32 %v2324, 8
    %v2365 = vmul.u32.u64.compose %v2364, %v2363
    %v2366 = vextract.low.u32 %v2365
    %v2367 = vextract.high.u32 %v2365
    %v2368 = vmul.u32.u64.compose %v2364, %v2359
    %v2369 = vextract.low.u32 %v2368
    %v2370 = vextract.high.u32 %v2368
    %v2371 = vmul.u32 %v2364, %v2355
    %v2372 = vadd.s32 %v2367, %v2369
    %vm2373 = vc.u32 %v2367, %v2369
    %v2374 = vadd.s32 %v2370, 1
    %v2375 = vsel %vm2373, %v2374, %v2370
    %v2376 = vadd.s32 %v2371, %v2375
    %v2377 = vadd.s32 %v2376, 536870912
    %v2378 = vshrl.u32 %v2377, 30
    %v2379 = vshll.u32 %v2378, 30
    %v2380 = vsub.s32 %v2376, %v2379
    %vm2381 = vcmp.lt.s32.totalorder %v2380, 0
    %v2382 = vsub.s32 0, %v2380
    %v2383 = vsel %vm2381, %v2382, %v2380
    %v2384 = vclz %v2383
    %v2385 = vsub.s32 %v2384, 2
    %vm2386 = vcmp.gt.s32.totalorder 0, %v2385
    %v2387 = vsel %vm2386, 0, %v2385
    %v2388 = vsub.s32 32, %v2387
    %v2389 = vshll.u32 %v2380, %v2387
    %v2390 = vshrl.u32 %v2372, %v2388
    %v2391 = vor.u32 %v2389, %v2390
    %v2392 = vsub.s32 4294967266, %v2387
    %v2393 = vadd.s32 %v2392, 127
    %v2394 = vshll.u32 %v2393, 23
    %v2395 = vor.u32 4788187, %v2394
    %v2396 = vand.u32 2147483647, %v2395
    %v2398 = vcvt.s32.f32 %v2391
    %v2399 = vmul.f32 %v2398, %v2396
    %v2400 = vxor.u32 %v2399, 2147483648
    %v2401 = vsel %vm2318, %v2400, %v2399
    %v2402 = vsub.s32 4, %v2378
    %v2403 = vsel %vm2318, %v2402, %v2378
    %v2404 = vsel %vm2317, %v1888, %v2401
    %v2405 = vsel %vm2317, 0, %v2403
    %v2406 = vcosq.f32.pop %v2404
    %v2407 = vsinq.f32.pop %v2404
    %vm2408 = vweird.f32 %v1888
    %v2409 = vadd.s32 %v2405, 3
    %v2410 = vand.u32 %v2409, 3
    %vm2411 = vcmp.lt.s32.totalorder %v2410, 2
    %vm2412 = vcmp.eq.s32.totalorder %v2410, 0
    %v2413 = vxor.u32 %v2407, 2147483648
    %v2414 = vsel %vm2412, %v2406, %v2413
    %vm2415 = vcmp.eq.s32.totalorder %v2410, 2
    %v2416 = vxor.u32 %v2406, 2147483648
    %v2417 = vsel %vm2415, %v2416, %v2407
    %v2418 = vsel %vm2411, %v2414, %v2417
    %v2419 = vsel %vm2408, nan, %v2418
    %v2420 = vand.u32 2147483647, %v1889
    %vm2421 = vcmp.le.f32.partialorder %v2420, 0.7853982
    %vm2422 = vcmp.lt.s32.totalorder %v1889, 0
    %v2423 = vand.u32 %v1889, 2139095040
    %v2424 = vshrl.u32 %v2423, 23
    %v2425 = vsub.s32 %v2424, 127
    %v2426 = vand.u32 2147483647, %v1889
    %v2427 = vand.u32 %v2426, 8388607
    %v2428 = vor.u32 %v2427, 8388608
    %v2429 = vsub.s32 0, %v2428
    %v2430 = vadd.s32 %v2425, 1
    %vm2431 = vcmp.gt.s32.totalorder %v2430, 0
    %v2432 = vsel %vm2431, %v2430, 0
    %v2433 = vshrl.u32 %v2432, 5
    %v2434 = vand.u32 %v2432, 31
    %v2435 = vsub.s32 32, %v2434
    %v2436 = vshrl.u32 683565275, %v2435
    %v2437 = vshll.u32 683565275, %v2434
    %v2438 = vshrl.u32 2475754826, %v2435
    %v2439 = vor.u32 %v2437, %v2438
    %v2440 = vshll.u32 2475754826, %v2434
    %v2441 = vshrl.u32 2131351028, %v2435
    %v2442 = vor.u32 %v2440, %v2441
    %v2443 = vshll.u32 2131351028, %v2434
    %v2444 = vshrl.u32 2102212464, %v2435
    %v2445 = vor.u32 %v2443, %v2444
    %v2446 = vshll.u32 2102212464, %v2434
    %v2447 = vshrl.u32 920167782, %v2435
    %v2448 = vor.u32 %v2446, %v2447
    %v2449 = vshll.u32 920167782, %v2434
    %v2450 = vshrl.u32 1326507024, %v2435
    %v2451 = vor.u32 %v2449, %v2450
    %vm2452 = vcmp.lt.s32.totalorder %v2433, 1
    %vm2453 = vcmp.lt.s32.totalorder %v2433, 2
    %vm2454 = vcmp.lt.s32.totalorder %v2433, 3
    %vm2455 = vcmp.lt.s32.totalorder %v2433, 4
    %v2456 = vsel %vm2452, %v2436, %v2439
    %v2457 = vsel %vm2455, %v2445, 2102212464
    %v2458 = vsel %vm2454, %v2442, %v2457
    %v2459 = vsel %vm2453, %v2456, %v2458
    %v2460 = vsel %vm2452, %v2439, %v2442
    %v2461 = vsel %vm2455, %v2448, 920167782
    %v2462 = vsel %vm2454, %v2445, %v2461
    %v2463 = vsel %vm2453, %v2460, %v2462
    %v2464 = vsel %vm2452, %v2442, %v2445
    %v2465 = vsel %vm2455, %v2451, 1326507024
    %v2466 = vsel %vm2454, %v2448, %v2465
    %v2467 = vsel %vm2453, %v2464, %v2466
    %v2468 = vshll.u32 %v2428, 8
    %v2469 = vmul.u32.u64.compose %v2468, %v2467
    %v2470 = vextract.low.u32 %v2469
    %v2471 = vextract.high.u32 %v2469
    %v2472 = vmul.u32.u64.compose %v2468, %v2463
    %v2473 = vextract.low.u32 %v2472
    %v2474 = vextract.high.u32 %v2472
    %v2475 = vmul.u32 %v2468, %v2459
    %v2476 = vadd.s32 %v2471, %v2473
    %vm2477 = vc.u32 %v2471, %v2473
    %v2478 = vadd.s32 %v2474, 1
    %v2479 = vsel %vm2477, %v2478, %v2474
    %v2480 = vadd.s32 %v2475, %v2479
    %v2481 = vadd.s32 %v2480, 536870912
    %v2482 = vshrl.u32 %v2481, 30
    %v2483 = vshll.u32 %v2482, 30
    %v2484 = vsub.s32 %v2480, %v2483
    %vm2485 = vcmp.lt.s32.totalorder %v2484, 0
    %v2486 = vsub.s32 0, %v2484
    %v2487 = vsel %vm2485, %v2486, %v2484
    %v2488 = vclz %v2487
    %v2489 = vsub.s32 %v2488, 2
    %vm2490 = vcmp.gt.s32.totalorder 0, %v2489
    %v2491 = vsel %vm2490, 0, %v2489
    %v2492 = vsub.s32 32, %v2491
    %v2493 = vshll.u32 %v2484, %v2491
    %v2494 = vshrl.u32 %v2476, %v2492
    %v2495 = vor.u32 %v2493, %v2494
    %v2496 = vsub.s32 4294967266, %v2491
    %v2497 = vadd.s32 %v2496, 127
    %v2498 = vshll.u32 %v2497, 23
    %v2499 = vor.u32 4788187, %v2498
    %v2500 = vand.u32 2147483647, %v2499
    %v2502 = vcvt.s32.f32 %v2495
    %v2503 = vmul.f32 %v2502, %v2500
    %v2504 = vxor.u32 %v2503, 2147483648
    %v2505 = vsel %vm2422, %v2504, %v2503
    %v2506 = vsub.s32 4, %v2482
    %v2507 = vsel %vm2422, %v2506, %v2482
    %v2508 = vsel %vm2421, %v1889, %v2505
    %v2509 = vsel %vm2421, 0, %v2507
    %v2510 = vcosq.f32.pop %v2508
    %v2511 = vsinq.f32.pop %v2508
    %vm2512 = vweird.f32 %v1889
    %v2513 = vadd.s32 %v2509, 3
    %v2514 = vand.u32 %v2513, 3
    %vm2515 = vcmp.lt.s32.totalorder %v2514, 2
    %vm2516 = vcmp.eq.s32.totalorder %v2514, 0
    %v2517 = vxor.u32 %v2511, 2147483648
    %v2518 = vsel %vm2516, %v2510, %v2517
    %vm2519 = vcmp.eq.s32.totalorder %v2514, 2
    %v2520 = vxor.u32 %v2510, 2147483648
    %v2521 = vsel %vm2519, %v2520, %v2511
    %v2522 = vsel %vm2515, %v2518, %v2521
    %v2523 = vsel %vm2512, nan, %v2522
    %v2524 = vand.u32 2147483647, %v1890
    %vm2525 = vcmp.le.f32.partialorder %v2524, 0.7853982
    %vm2526 = vcmp.lt.s32.totalorder %v1890, 0
    %v2527 = vand.u32 %v1890, 2139095040
    %v2528 = vshrl.u32 %v2527, 23
    %v2529 = vsub.s32 %v2528, 127
    %v2530 = vand.u32 2147483647, %v1890
    %v2531 = vand.u32 %v2530, 8388607
    %v2532 = vor.u32 %v2531, 8388608
    %v2533 = vsub.s32 0, %v2532
    %v2534 = vadd.s32 %v2529, 1
    %vm2535 = vcmp.gt.s32.totalorder %v2534, 0
    %v2536 = vsel %vm2535, %v2534, 0
    %v2537 = vshrl.u32 %v2536, 5
    %v2538 = vand.u32 %v2536, 31
    %v2539 = vsub.s32 32, %v2538
    %v2540 = vshrl.u32 683565275, %v2539
    %v2541 = vshll.u32 683565275, %v2538
    %v2542 = vshrl.u32 2475754826, %v2539
    %v2543 = vor.u32 %v2541, %v2542
    %v2544 = vshll.u32 2475754826, %v2538
    %v2545 = vshrl.u32 2131351028, %v2539
    %v2546 = vor.u32 %v2544, %v2545
    %v2547 = vshll.u32 2131351028, %v2538
    %v2548 = vshrl.u32 2102212464, %v2539
    %v2549 = vor.u32 %v2547, %v2548
    %v2550 = vshll.u32 2102212464, %v2538
    %v2551 = vshrl.u32 920167782, %v2539
    %v2552 = vor.u32 %v2550, %v2551
    %v2553 = vshll.u32 920167782, %v2538
    %v2554 = vshrl.u32 1326507024, %v2539
    %v2555 = vor.u32 %v2553, %v2554
    %vm2556 = vcmp.lt.s32.totalorder %v2537, 1
    %vm2557 = vcmp.lt.s32.totalorder %v2537, 2
    %vm2558 = vcmp.lt.s32.totalorder %v2537, 3
    %vm2559 = vcmp.lt.s32.totalorder %v2537, 4
    %v2560 = vsel %vm2556, %v2540, %v2543
    %v2561 = vsel %vm2559, %v2549, 2102212464
    %v2562 = vsel %vm2558, %v2546, %v2561
    %v2563 = vsel %vm2557, %v2560, %v2562
    %v2564 = vsel %vm2556, %v2543, %v2546
    %v2565 = vsel %vm2559, %v2552, 920167782
    %v2566 = vsel %vm2558, %v2549, %v2565
    %v2567 = vsel %vm2557, %v2564, %v2566
    %v2568 = vsel %vm2556, %v2546, %v2549
    %v2569 = vsel %vm2559, %v2555, 1326507024
    %v2570 = vsel %vm2558, %v2552, %v2569
    %v2571 = vsel %vm2557, %v2568, %v2570
    %v2572 = vshll.u32 %v2532, 8
    %v2573 = vmul.u32.u64.compose %v2572, %v2571
    %v2574 = vextract.low.u32 %v2573
    %v2575 = vextract.high.u32 %v2573
    %v2576 = vmul.u32.u64.compose %v2572, %v2567
    %v2577 = vextract.low.u32 %v2576
    %v2578 = vextract.high.u32 %v2576
    %v2579 = vmul.u32 %v2572, %v2563
    %v2580 = vadd.s32 %v2575, %v2577
    %vm2581 = vc.u32 %v2575, %v2577
    %v2582 = vadd.s32 %v2578, 1
    %v2583 = vsel %vm2581, %v2582, %v2578
    %v2584 = vadd.s32 %v2579, %v2583
    %v2585 = vadd.s32 %v2584, 536870912
    %v2586 = vshrl.u32 %v2585, 30
    %v2587 = vshll.u32 %v2586, 30
    %v2588 = vsub.s32 %v2584, %v2587
    %vm2589 = vcmp.lt.s32.totalorder %v2588, 0
    %v2590 = vsub.s32 0, %v2588
    %v2591 = vsel %vm2589, %v2590, %v2588
    %v2592 = vclz %v2591
    %v2593 = vsub.s32 %v2592, 2
    %vm2594 = vcmp.gt.s32.totalorder 0, %v2593
    %v2595 = vsel %vm2594, 0, %v2593
    %v2596 = vsub.s32 32, %v2595
    %v2597 = vshll.u32 %v2588, %v2595
    %v2598 = vshrl.u32 %v2580, %v2596
    %v2599 = vor.u32 %v2597, %v2598
    %v2600 = vsub.s32 4294967266, %v2595
    %v2601 = vadd.s32 %v2600, 127
    %v2602 = vshll.u32 %v2601, 23
    %v2603 = vor.u32 4788187, %v2602
    %v2604 = vand.u32 2147483647, %v2603
    %v2606 = vcvt.s32.f32 %v2599
    %v2607 = vmul.f32 %v2606, %v2604
    %v2608 = vxor.u32 %v2607, 2147483648
    %v2609 = vsel %vm2526, %v2608, %v2607
    %v2610 = vsub.s32 4, %v2586
    %v2611 = vsel %vm2526, %v2610, %v2586
    %v2612 = vsel %vm2525, %v1890, %v2609
    %v2613 = vsel %vm2525, 0, %v2611
    %v2614 = vcosq.f32.pop %v2612
    %v2615 = vsinq.f32.pop %v2612
    %vm2616 = vweird.f32 %v1890
    %v2617 = vadd.s32 %v2613, 3
    %v2618 = vand.u32 %v2617, 3
    %vm2619 = vcmp.lt.s32.totalorder %v2618, 2
    %vm2620 = vcmp.eq.s32.totalorder %v2618, 0
    %v2621 = vxor.u32 %v2615, 2147483648
    %v2622 = vsel %vm2620, %v2614, %v2621
    %vm2623 = vcmp.eq.s32.totalorder %v2618, 2
    %v2624 = vxor.u32 %v2614, 2147483648
    %v2625 = vsel %vm2623, %v2624, %v2615
    %v2626 = vsel %vm2619, %v2622, %v2625
    %v2627 = vsel %vm2616, nan, %v2626
    %v2628 = vand.u32 2147483647, %v1891
    %vm2629 = vcmp.le.f32.partialorder %v2628, 0.7853982
    %vm2630 = vcmp.lt.s32.totalorder %v1891, 0
    %v2631 = vand.u32 %v1891, 2139095040
    %v2632 = vshrl.u32 %v2631, 23
    %v2633 = vsub.s32 %v2632, 127
    %v2634 = vand.u32 2147483647, %v1891
    %v2635 = vand.u32 %v2634, 8388607
    %v2636 = vor.u32 %v2635, 8388608
    %v2637 = vsub.s32 0, %v2636
    %v2638 = vadd.s32 %v2633, 1
    %vm2639 = vcmp.gt.s32.totalorder %v2638, 0
    %v2640 = vsel %vm2639, %v2638, 0
    %v2641 = vshrl.u32 %v2640, 5
    %v2642 = vand.u32 %v2640, 31
    %v2643 = vsub.s32 32, %v2642
    %v2644 = vshrl.u32 683565275, %v2643
    %v2645 = vshll.u32 683565275, %v2642
    %v2646 = vshrl.u32 2475754826, %v2643
    %v2647 = vor.u32 %v2645, %v2646
    %v2648 = vshll.u32 2475754826, %v2642
    %v2649 = vshrl.u32 2131351028, %v2643
    %v2650 = vor.u32 %v2648, %v2649
    %v2651 = vshll.u32 2131351028, %v2642
    %v2652 = vshrl.u32 2102212464, %v2643
    %v2653 = vor.u32 %v2651, %v2652
    %v2654 = vshll.u32 2102212464, %v2642
    %v2655 = vshrl.u32 920167782, %v2643
    %v2656 = vor.u32 %v2654, %v2655
    %v2657 = vshll.u32 920167782, %v2642
    %v2658 = vshrl.u32 1326507024, %v2643
    %v2659 = vor.u32 %v2657, %v2658
    %vm2660 = vcmp.lt.s32.totalorder %v2641, 1
    %vm2661 = vcmp.lt.s32.totalorder %v2641, 2
    %vm2662 = vcmp.lt.s32.totalorder %v2641, 3
    %vm2663 = vcmp.lt.s32.totalorder %v2641, 4
    %v2664 = vsel %vm2660, %v2644, %v2647
    %v2665 = vsel %vm2663, %v2653, 2102212464
    %v2666 = vsel %vm2662, %v2650, %v2665
    %v2667 = vsel %vm2661, %v2664, %v2666
    %v2668 = vsel %vm2660, %v2647, %v2650
    %v2669 = vsel %vm2663, %v2656, 920167782
    %v2670 = vsel %vm2662, %v2653, %v2669
    %v2671 = vsel %vm2661, %v2668, %v2670
    %v2672 = vsel %vm2660, %v2650, %v2653
    %v2673 = vsel %vm2663, %v2659, 1326507024
    %v2674 = vsel %vm2662, %v2656, %v2673
    %v2675 = vsel %vm2661, %v2672, %v2674
    %v2676 = vshll.u32 %v2636, 8
    %v2677 = vmul.u32.u64.compose %v2676, %v2675
    %v2678 = vextract.low.u32 %v2677
    %v2679 = vextract.high.u32 %v2677
    %v2680 = vmul.u32.u64.compose %v2676, %v2671
    %v2681 = vextract.low.u32 %v2680
    %v2682 = vextract.high.u32 %v2680
    %v2683 = vmul.u32 %v2676, %v2667
    %v2684 = vadd.s32 %v2679, %v2681
    %vm2685 = vc.u32 %v2679, %v2681
    %v2686 = vadd.s32 %v2682, 1
    %v2687 = vsel %vm2685, %v2686, %v2682
    %v2688 = vadd.s32 %v2683, %v2687
    %v2689 = vadd.s32 %v2688, 536870912
    %v2690 = vshrl.u32 %v2689, 30
    %v2691 = vshll.u32 %v2690, 30
    %v2692 = vsub.s32 %v2688, %v2691
    %vm2693 = vcmp.lt.s32.totalorder %v2692, 0
    %v2694 = vsub.s32 0, %v2692
    %v2695 = vsel %vm2693, %v2694, %v2692
    %v2696 = vclz %v2695
    %v2697 = vsub.s32 %v2696, 2
    %vm2698 = vcmp.gt.s32.totalorder 0, %v2697
    %v2699 = vsel %vm2698, 0, %v2697
    %v2700 = vsub.s32 32, %v2699
    %v2701 = vshll.u32 %v2692, %v2699
    %v2702 = vshrl.u32 %v2684, %v2700
    %v2703 = vor.u32 %v2701, %v2702
    %v2704 = vsub.s32 4294967266, %v2699
    %v2705 = vadd.s32 %v2704, 127
    %v2706 = vshll.u32 %v2705, 23
    %v2707 = vor.u32 4788187, %v2706
    %v2708 = vand.u32 2147483647, %v2707
    %v2710 = vcvt.s32.f32 %v2703
    %v2711 = vmul.f32 %v2710, %v2708
    %v2712 = vxor.u32 %v2711, 2147483648
    %v2713 = vsel %vm2630, %v2712, %v2711
    %v2714 = vsub.s32 4, %v2690
    %v2715 = vsel %vm2630, %v2714, %v2690
    %v2716 = vsel %vm2629, %v1891, %v2713
    %v2717 = vsel %vm2629, 0, %v2715
    %v2718 = vcosq.f32.pop %v2716
    %v2719 = vsinq.f32.pop %v2716
    %vm2720 = vweird.f32 %v1891
    %v2721 = vadd.s32 %v2717, 3
    %v2722 = vand.u32 %v2721, 3
    %vm2723 = vcmp.lt.s32.totalorder %v2722, 2
    %vm2724 = vcmp.eq.s32.totalorder %v2722, 0
    %v2725 = vxor.u32 %v2719, 2147483648
    %v2726 = vsel %vm2724, %v2718, %v2725
    %vm2727 = vcmp.eq.s32.totalorder %v2722, 2
    %v2728 = vxor.u32 %v2718, 2147483648
    %v2729 = vsel %vm2727, %v2728, %v2719
    %v2730 = vsel %vm2723, %v2726, %v2729
    %v2731 = vsel %vm2720, nan, %v2730
    %v2732 = vand.u32 2147483647, %v1892
    %vm2733 = vcmp.le.f32.partialorder %v2732, 0.7853982
    %vm2734 = vcmp.lt.s32.totalorder %v1892, 0
    %v2735 = vand.u32 %v1892, 2139095040
    %v2736 = vshrl.u32 %v2735, 23
    %v2737 = vsub.s32 %v2736, 127
    %v2738 = vand.u32 2147483647, %v1892
    %v2739 = vand.u32 %v2738, 8388607
    %v2740 = vor.u32 %v2739, 8388608
    %v2741 = vsub.s32 0, %v2740
    %v2742 = vadd.s32 %v2737, 1
    %vm2743 = vcmp.gt.s32.totalorder %v2742, 0
    %v2744 = vsel %vm2743, %v2742, 0
    %v2745 = vshrl.u32 %v2744, 5
    %v2746 = vand.u32 %v2744, 31
    %v2747 = vsub.s32 32, %v2746
    %v2748 = vshrl.u32 683565275, %v2747
    %v2749 = vshll.u32 683565275, %v2746
    %v2750 = vshrl.u32 2475754826, %v2747
    %v2751 = vor.u32 %v2749, %v2750
    %v2752 = vshll.u32 2475754826, %v2746
    %v2753 = vshrl.u32 2131351028, %v2747
    %v2754 = vor.u32 %v2752, %v2753
    %v2755 = vshll.u32 2131351028, %v2746
    %v2756 = vshrl.u32 2102212464, %v2747
    %v2757 = vor.u32 %v2755, %v2756
    %v2758 = vshll.u32 2102212464, %v2746
    %v2759 = vshrl.u32 920167782, %v2747
    %v2760 = vor.u32 %v2758, %v2759
    %v2761 = vshll.u32 920167782, %v2746
    %v2762 = vshrl.u32 1326507024, %v2747
    %v2763 = vor.u32 %v2761, %v2762
    %vm2764 = vcmp.lt.s32.totalorder %v2745, 1
    %vm2765 = vcmp.lt.s32.totalorder %v2745, 2
    %vm2766 = vcmp.lt.s32.totalorder %v2745, 3
    %vm2767 = vcmp.lt.s32.totalorder %v2745, 4
    %v2768 = vsel %vm2764, %v2748, %v2751
    %v2769 = vsel %vm2767, %v2757, 2102212464
    %v2770 = vsel %vm2766, %v2754, %v2769
    %v2771 = vsel %vm2765, %v2768, %v2770
    %v2772 = vsel %vm2764, %v2751, %v2754
    %v2773 = vsel %vm2767, %v2760, 920167782
    %v2774 = vsel %vm2766, %v2757, %v2773
    %v2775 = vsel %vm2765, %v2772, %v2774
    %v2776 = vsel %vm2764, %v2754, %v2757
    %v2777 = vsel %vm2767, %v2763, 1326507024
    %v2778 = vsel %vm2766, %v2760, %v2777
    %v2779 = vsel %vm2765, %v2776, %v2778
    %v2780 = vshll.u32 %v2740, 8
    %v2781 = vmul.u32.u64.compose %v2780, %v2779
    %v2782 = vextract.low.u32 %v2781
    %v2783 = vextract.high.u32 %v2781
    %v2784 = vmul.u32.u64.compose %v2780, %v2775
    %v2785 = vextract.low.u32 %v2784
    %v2786 = vextract.high.u32 %v2784
    %v2787 = vmul.u32 %v2780, %v2771
    %v2788 = vadd.s32 %v2783, %v2785
    %vm2789 = vc.u32 %v2783, %v2785
    %v2790 = vadd.s32 %v2786, 1
    %v2791 = vsel %vm2789, %v2790, %v2786
    %v2792 = vadd.s32 %v2787, %v2791
    %v2793 = vadd.s32 %v2792, 536870912
    %v2794 = vshrl.u32 %v2793, 30
    %v2795 = vshll.u32 %v2794, 30
    %v2796 = vsub.s32 %v2792, %v2795
    %vm2797 = vcmp.lt.s32.totalorder %v2796, 0
    %v2798 = vsub.s32 0, %v2796
    %v2799 = vsel %vm2797, %v2798, %v2796
    %v2800 = vclz %v2799
    %v2801 = vsub.s32 %v2800, 2
    %vm2802 = vcmp.gt.s32.totalorder 0, %v2801
    %v2803 = vsel %vm2802, 0, %v2801
    %v2804 = vsub.s32 32, %v2803
    %v2805 = vshll.u32 %v2796, %v2803
    %v2806 = vshrl.u32 %v2788, %v2804
    %v2807 = vor.u32 %v2805, %v2806
    %v2808 = vsub.s32 4294967266, %v2803
    %v2809 = vadd.s32 %v2808, 127
    %v2810 = vshll.u32 %v2809, 23
    %v2811 = vor.u32 4788187, %v2810
    %v2812 = vand.u32 2147483647, %v2811
    %v2814 = vcvt.s32.f32 %v2807
    %v2815 = vmul.f32 %v2814, %v2812
    %v2816 = vxor.u32 %v2815, 2147483648
    %v2817 = vsel %vm2734, %v2816, %v2815
    %v2818 = vsub.s32 4, %v2794
    %v2819 = vsel %vm2734, %v2818, %v2794
    %v2820 = vsel %vm2733, %v1892, %v2817
    %v2821 = vsel %vm2733, 0, %v2819
    %v2822 = vcosq.f32.pop %v2820
    %v2823 = vsinq.f32.pop %v2820
    %vm2824 = vweird.f32 %v1892
    %v2825 = vadd.s32 %v2821, 3
    %v2826 = vand.u32 %v2825, 3
    %vm2827 = vcmp.lt.s32.totalorder %v2826, 2
    %vm2828 = vcmp.eq.s32.totalorder %v2826, 0
    %v2829 = vxor.u32 %v2823, 2147483648
    %v2830 = vsel %vm2828, %v2822, %v2829
    %vm2831 = vcmp.eq.s32.totalorder %v2826, 2
    %v2832 = vxor.u32 %v2822, 2147483648
    %v2833 = vsel %vm2831, %v2832, %v2823
    %v2834 = vsel %vm2827, %v2830, %v2833
    %v2835 = vsel %vm2824, nan, %v2834
    %v2836 = vand.u32 2147483647, %v1893
    %vm2837 = vcmp.le.f32.partialorder %v2836, 0.7853982
    %vm2838 = vcmp.lt.s32.totalorder %v1893, 0
    %v2839 = vand.u32 %v1893, 2139095040
    %v2840 = vshrl.u32 %v2839, 23
    %v2841 = vsub.s32 %v2840, 127
    %v2842 = vand.u32 2147483647, %v1893
    %v2843 = vand.u32 %v2842, 8388607
    %v2844 = vor.u32 %v2843, 8388608
    %v2845 = vsub.s32 0, %v2844
    %v2846 = vadd.s32 %v2841, 1
    %vm2847 = vcmp.gt.s32.totalorder %v2846, 0
    %v2848 = vsel %vm2847, %v2846, 0
    %v2849 = vshrl.u32 %v2848, 5
    %v2850 = vand.u32 %v2848, 31
    %v2851 = vsub.s32 32, %v2850
    %v2852 = vshrl.u32 683565275, %v2851
    %v2853 = vshll.u32 683565275, %v2850
    %v2854 = vshrl.u32 2475754826, %v2851
    %v2855 = vor.u32 %v2853, %v2854
    %v2856 = vshll.u32 2475754826, %v2850
    %v2857 = vshrl.u32 2131351028, %v2851
    %v2858 = vor.u32 %v2856, %v2857
    %v2859 = vshll.u32 2131351028, %v2850
    %v2860 = vshrl.u32 2102212464, %v2851
    %v2861 = vor.u32 %v2859, %v2860
    %v2862 = vshll.u32 2102212464, %v2850
    %v2863 = vshrl.u32 920167782, %v2851
    %v2864 = vor.u32 %v2862, %v2863
    %v2865 = vshll.u32 920167782, %v2850
    %v2866 = vshrl.u32 1326507024, %v2851
    %v2867 = vor.u32 %v2865, %v2866
    %vm2868 = vcmp.lt.s32.totalorder %v2849, 1
    %vm2869 = vcmp.lt.s32.totalorder %v2849, 2
    %vm2870 = vcmp.lt.s32.totalorder %v2849, 3
    %vm2871 = vcmp.lt.s32.totalorder %v2849, 4
    %v2872 = vsel %vm2868, %v2852, %v2855
    %v2873 = vsel %vm2871, %v2861, 2102212464
    %v2874 = vsel %vm2870, %v2858, %v2873
    %v2875 = vsel %vm2869, %v2872, %v2874
    %v2876 = vsel %vm2868, %v2855, %v2858
    %v2877 = vsel %vm2871, %v2864, 920167782
    %v2878 = vsel %vm2870, %v2861, %v2877
    %v2879 = vsel %vm2869, %v2876, %v2878
    %v2880 = vsel %vm2868, %v2858, %v2861
    %v2881 = vsel %vm2871, %v2867, 1326507024
    %v2882 = vsel %vm2870, %v2864, %v2881
    %v2883 = vsel %vm2869, %v2880, %v2882
    %v2884 = vshll.u32 %v2844, 8
    %v2885 = vmul.u32.u64.compose %v2884, %v2883
    %v2886 = vextract.low.u32 %v2885
    %v2887 = vextract.high.u32 %v2885
    %v2888 = vmul.u32.u64.compose %v2884, %v2879
    %v2889 = vextract.low.u32 %v2888
    %v2890 = vextract.high.u32 %v2888
    %v2891 = vmul.u32 %v2884, %v2875
    %v2892 = vadd.s32 %v2887, %v2889
    %vm2893 = vc.u32 %v2887, %v2889
    %v2894 = vadd.s32 %v2890, 1
    %v2895 = vsel %vm2893, %v2894, %v2890
    %v2896 = vadd.s32 %v2891, %v2895
    %v2897 = vadd.s32 %v2896, 536870912
    %v2898 = vshrl.u32 %v2897, 30
    %v2899 = vshll.u32 %v2898, 30
    %v2900 = vsub.s32 %v2896, %v2899
    %vm2901 = vcmp.lt.s32.totalorder %v2900, 0
    %v2902 = vsub.s32 0, %v2900
    %v2903 = vsel %vm2901, %v2902, %v2900
    %v2904 = vclz %v2903
    %v2905 = vsub.s32 %v2904, 2
    %vm2906 = vcmp.gt.s32.totalorder 0, %v2905
    %v2907 = vsel %vm2906, 0, %v2905
    %v2908 = vsub.s32 32, %v2907
    %v2909 = vshll.u32 %v2900, %v2907
    %v2910 = vshrl.u32 %v2892, %v2908
    %v2911 = vor.u32 %v2909, %v2910
    %v2912 = vsub.s32 4294967266, %v2907
    %v2913 = vadd.s32 %v2912, 127
    %v2914 = vshll.u32 %v2913, 23
    %v2915 = vor.u32 4788187, %v2914
    %v2916 = vand.u32 2147483647, %v2915
    %v2918 = vcvt.s32.f32 %v2911
    %v2919 = vmul.f32 %v2918, %v2916
    %v2920 = vxor.u32 %v2919, 2147483648
    %v2921 = vsel %vm2838, %v2920, %v2919
    %v2922 = vsub.s32 4, %v2898
    %v2923 = vsel %vm2838, %v2922, %v2898
    %v2924 = vsel %vm2837, %v1893, %v2921
    %v2925 = vsel %vm2837, 0, %v2923
    %v2926 = vcosq.f32.pop %v2924
    %v2927 = vsinq.f32.pop %v2924
    %vm2928 = vweird.f32 %v1893
    %v2929 = vadd.s32 %v2925, 3
    %v2930 = vand.u32 %v2929, 3
    %vm2931 = vcmp.lt.s32.totalorder %v2930, 2
    %vm2932 = vcmp.eq.s32.totalorder %v2930, 0
    %v2933 = vxor.u32 %v2927, 2147483648
    %v2934 = vsel %vm2932, %v2926, %v2933
    %vm2935 = vcmp.eq.s32.totalorder %v2930, 2
    %v2936 = vxor.u32 %v2926, 2147483648
    %v2937 = vsel %vm2935, %v2936, %v2927
    %v2938 = vsel %vm2931, %v2934, %v2937
    %v2939 = vsel %vm2928, nan, %v2938
    %v2940 = vand.u32 2147483647, %v1894
    %vm2941 = vcmp.le.f32.partialorder %v2940, 0.7853982
    %vm2942 = vcmp.lt.s32.totalorder %v1894, 0
    %v2943 = vand.u32 %v1894, 2139095040
    %v2944 = vshrl.u32 %v2943, 23
    %v2945 = vsub.s32 %v2944, 127
    %v2946 = vand.u32 2147483647, %v1894
    %v2947 = vand.u32 %v2946, 8388607
    %v2948 = vor.u32 %v2947, 8388608
    %v2949 = vsub.s32 0, %v2948
    %v2950 = vadd.s32 %v2945, 1
    %vm2951 = vcmp.gt.s32.totalorder %v2950, 0
    %v2952 = vsel %vm2951, %v2950, 0
    %v2953 = vshrl.u32 %v2952, 5
    %v2954 = vand.u32 %v2952, 31
    %v2955 = vsub.s32 32, %v2954
    %v2956 = vshrl.u32 683565275, %v2955
    %v2957 = vshll.u32 683565275, %v2954
    %v2958 = vshrl.u32 2475754826, %v2955
    %v2959 = vor.u32 %v2957, %v2958
    %v2960 = vshll.u32 2475754826, %v2954
    %v2961 = vshrl.u32 2131351028, %v2955
    %v2962 = vor.u32 %v2960, %v2961
    %v2963 = vshll.u32 2131351028, %v2954
    %v2964 = vshrl.u32 2102212464, %v2955
    %v2965 = vor.u32 %v2963, %v2964
    %v2966 = vshll.u32 2102212464, %v2954
    %v2967 = vshrl.u32 920167782, %v2955
    %v2968 = vor.u32 %v2966, %v2967
    %v2969 = vshll.u32 920167782, %v2954
    %v2970 = vshrl.u32 1326507024, %v2955
    %v2971 = vor.u32 %v2969, %v2970
    %vm2972 = vcmp.lt.s32.totalorder %v2953, 1
    %vm2973 = vcmp.lt.s32.totalorder %v2953, 2
    %vm2974 = vcmp.lt.s32.totalorder %v2953, 3
    %vm2975 = vcmp.lt.s32.totalorder %v2953, 4
    %v2976 = vsel %vm2972, %v2956, %v2959
    %v2977 = vsel %vm2975, %v2965, 2102212464
    %v2978 = vsel %vm2974, %v2962, %v2977
    %v2979 = vsel %vm2973, %v2976, %v2978
    %v2980 = vsel %vm2972, %v2959, %v2962
    %v2981 = vsel %vm2975, %v2968, 920167782
    %v2982 = vsel %vm2974, %v2965, %v2981
    %v2983 = vsel %vm2973, %v2980, %v2982
    %v2984 = vsel %vm2972, %v2962, %v2965
    %v2985 = vsel %vm2975, %v2971, 1326507024
    %v2986 = vsel %vm2974, %v2968, %v2985
    %v2987 = vsel %vm2973, %v2984, %v2986
    %v2988 = vshll.u32 %v2948, 8
    %v2989 = vmul.u32.u64.compose %v2988, %v2987
    %v2990 = vextract.low.u32 %v2989
    %v2991 = vextract.high.u32 %v2989
    %v2992 = vmul.u32.u64.compose %v2988, %v2983
    %v2993 = vextract.low.u32 %v2992
    %v2994 = vextract.high.u32 %v2992
    %v2995 = vmul.u32 %v2988, %v2979
    %v2996 = vadd.s32 %v2991, %v2993
    %vm2997 = vc.u32 %v2991, %v2993
    %v2998 = vadd.s32 %v2994, 1
    %v2999 = vsel %vm2997, %v2998, %v2994
    %v3000 = vadd.s32 %v2995, %v2999
    %v3001 = vadd.s32 %v3000, 536870912
    %v3002 = vshrl.u32 %v3001, 30
    %v3003 = vshll.u32 %v3002, 30
    %v3004 = vsub.s32 %v3000, %v3003
    %vm3005 = vcmp.lt.s32.totalorder %v3004, 0
    %v3006 = vsub.s32 0, %v3004
    %v3007 = vsel %vm3005, %v3006, %v3004
    %v3008 = vclz %v3007
    %v3009 = vsub.s32 %v3008, 2
    %vm3010 = vcmp.gt.s32.totalorder 0, %v3009
    %v3011 = vsel %vm3010, 0, %v3009
    %v3012 = vsub.s32 32, %v3011
    %v3013 = vshll.u32 %v3004, %v3011
    %v3014 = vshrl.u32 %v2996, %v3012
    %v3015 = vor.u32 %v3013, %v3014
    %v3016 = vsub.s32 4294967266, %v3011
    %v3017 = vadd.s32 %v3016, 127
    %v3018 = vshll.u32 %v3017, 23
    %v3019 = vor.u32 4788187, %v3018
    %v3020 = vand.u32 2147483647, %v3019
    %v3022 = vcvt.s32.f32 %v3015
    %v3023 = vmul.f32 %v3022, %v3020
    %v3024 = vxor.u32 %v3023, 2147483648
    %v3025 = vsel %vm2942, %v3024, %v3023
    %v3026 = vsub.s32 4, %v3002
    %v3027 = vsel %vm2942, %v3026, %v3002
    %v3028 = vsel %vm2941, %v1894, %v3025
    %v3029 = vsel %vm2941, 0, %v3027
    %v3030 = vcosq.f32.pop %v3028
    %v3031 = vsinq.f32.pop %v3028
    %vm3032 = vweird.f32 %v1894
    %v3033 = vadd.s32 %v3029, 3
    %v3034 = vand.u32 %v3033, 3
    %vm3035 = vcmp.lt.s32.totalorder %v3034, 2
    %vm3036 = vcmp.eq.s32.totalorder %v3034, 0
    %v3037 = vxor.u32 %v3031, 2147483648
    %v3038 = vsel %vm3036, %v3030, %v3037
    %vm3039 = vcmp.eq.s32.totalorder %v3034, 2
    %v3040 = vxor.u32 %v3030, 2147483648
    %v3041 = vsel %vm3039, %v3040, %v3031
    %v3042 = vsel %vm3035, %v3038, %v3041
    %v3043 = vsel %vm3032, nan, %v3042
    %v3044 = vand.u32 2147483647, %v1895
    %vm3045 = vcmp.le.f32.partialorder %v3044, 0.7853982
    %vm3046 = vcmp.lt.s32.totalorder %v1895, 0
    %v3047 = vand.u32 %v1895, 2139095040
    %v3048 = vshrl.u32 %v3047, 23
    %v3049 = vsub.s32 %v3048, 127
    %v3050 = vand.u32 2147483647, %v1895
    %v3051 = vand.u32 %v3050, 8388607
    %v3052 = vor.u32 %v3051, 8388608
    %v3053 = vsub.s32 0, %v3052
    %v3054 = vadd.s32 %v3049, 1
    %vm3055 = vcmp.gt.s32.totalorder %v3054, 0
    %v3056 = vsel %vm3055, %v3054, 0
    %v3057 = vshrl.u32 %v3056, 5
    %v3058 = vand.u32 %v3056, 31
    %v3059 = vsub.s32 32, %v3058
    %v3060 = vshrl.u32 683565275, %v3059
    %v3061 = vshll.u32 683565275, %v3058
    %v3062 = vshrl.u32 2475754826, %v3059
    %v3063 = vor.u32 %v3061, %v3062
    %v3064 = vshll.u32 2475754826, %v3058
    %v3065 = vshrl.u32 2131351028, %v3059
    %v3066 = vor.u32 %v3064, %v3065
    %v3067 = vshll.u32 2131351028, %v3058
    %v3068 = vshrl.u32 2102212464, %v3059
    %v3069 = vor.u32 %v3067, %v3068
    %v3070 = vshll.u32 2102212464, %v3058
    %v3071 = vshrl.u32 920167782, %v3059
    %v3072 = vor.u32 %v3070, %v3071
    %v3073 = vshll.u32 920167782, %v3058
    %v3074 = vshrl.u32 1326507024, %v3059
    %v3075 = vor.u32 %v3073, %v3074
    %vm3076 = vcmp.lt.s32.totalorder %v3057, 1
    %vm3077 = vcmp.lt.s32.totalorder %v3057, 2
    %vm3078 = vcmp.lt.s32.totalorder %v3057, 3
    %vm3079 = vcmp.lt.s32.totalorder %v3057, 4
    %v3080 = vsel %vm3076, %v3060, %v3063
    %v3081 = vsel %vm3079, %v3069, 2102212464
    %v3082 = vsel %vm3078, %v3066, %v3081
    %v3083 = vsel %vm3077, %v3080, %v3082
    %v3084 = vsel %vm3076, %v3063, %v3066
    %v3085 = vsel %vm3079, %v3072, 920167782
    %v3086 = vsel %vm3078, %v3069, %v3085
    %v3087 = vsel %vm3077, %v3084, %v3086
    %v3088 = vsel %vm3076, %v3066, %v3069
    %v3089 = vsel %vm3079, %v3075, 1326507024
    %v3090 = vsel %vm3078, %v3072, %v3089
    %v3091 = vsel %vm3077, %v3088, %v3090
    %v3092 = vshll.u32 %v3052, 8
    %v3093 = vmul.u32.u64.compose %v3092, %v3091
    %v3094 = vextract.low.u32 %v3093
    %v3095 = vextract.high.u32 %v3093
    %v3096 = vmul.u32.u64.compose %v3092, %v3087
    %v3097 = vextract.low.u32 %v3096
    %v3098 = vextract.high.u32 %v3096
    %v3099 = vmul.u32 %v3092, %v3083
    %v3100 = vadd.s32 %v3095, %v3097
    %vm3101 = vc.u32 %v3095, %v3097
    %v3102 = vadd.s32 %v3098, 1
    %v3103 = vsel %vm3101, %v3102, %v3098
    %v3104 = vadd.s32 %v3099, %v3103
    %v3105 = vadd.s32 %v3104, 536870912
    %v3106 = vshrl.u32 %v3105, 30
    %v3107 = vshll.u32 %v3106, 30
    %v3108 = vsub.s32 %v3104, %v3107
    %vm3109 = vcmp.lt.s32.totalorder %v3108, 0
    %v3110 = vsub.s32 0, %v3108
    %v3111 = vsel %vm3109, %v3110, %v3108
    %v3112 = vclz %v3111
    %v3113 = vsub.s32 %v3112, 2
    %vm3114 = vcmp.gt.s32.totalorder 0, %v3113
    %v3115 = vsel %vm3114, 0, %v3113
    %v3116 = vsub.s32 32, %v3115
    %v3117 = vshll.u32 %v3108, %v3115
    %v3118 = vshrl.u32 %v3100, %v3116
    %v3119 = vor.u32 %v3117, %v3118
    %v3120 = vsub.s32 4294967266, %v3115
    %v3121 = vadd.s32 %v3120, 127
    %v3122 = vshll.u32 %v3121, 23
    %v3123 = vor.u32 4788187, %v3122
    %v3124 = vand.u32 2147483647, %v3123
    %v3126 = vcvt.s32.f32 %v3119
    %v3127 = vmul.f32 %v3126, %v3124
    %v3128 = vxor.u32 %v3127, 2147483648
    %v3129 = vsel %vm3046, %v3128, %v3127
    %v3130 = vsub.s32 4, %v3106
    %v3131 = vsel %vm3046, %v3130, %v3106
    %v3132 = vsel %vm3045, %v1895, %v3129
    %v3133 = vsel %vm3045, 0, %v3131
    %v3134 = vcosq.f32.pop %v3132
    %v3135 = vsinq.f32.pop %v3132
    %vm3136 = vweird.f32 %v1895
    %v3137 = vadd.s32 %v3133, 3
    %v3138 = vand.u32 %v3137, 3
    %vm3139 = vcmp.lt.s32.totalorder %v3138, 2
    %vm3140 = vcmp.eq.s32.totalorder %v3138, 0
    %v3141 = vxor.u32 %v3135, 2147483648
    %v3142 = vsel %vm3140, %v3134, %v3141
    %vm3143 = vcmp.eq.s32.totalorder %v3138, 2
    %v3144 = vxor.u32 %v3134, 2147483648
    %v3145 = vsel %vm3143, %v3144, %v3135
    %v3146 = vsel %vm3139, %v3142, %v3145
    %v3147 = vsel %vm3136, nan, %v3146
    %v3148 = vand.u32 2147483647, %v1896
    %vm3149 = vcmp.le.f32.partialorder %v3148, 0.7853982
    %vm3150 = vcmp.lt.s32.totalorder %v1896, 0
    %v3151 = vand.u32 %v1896, 2139095040
    %v3152 = vshrl.u32 %v3151, 23
    %v3153 = vsub.s32 %v3152, 127
    %v3154 = vand.u32 2147483647, %v1896
    %v3155 = vand.u32 %v3154, 8388607
    %v3156 = vor.u32 %v3155, 8388608
    %v3157 = vsub.s32 0, %v3156
    %v3158 = vadd.s32 %v3153, 1
    %vm3159 = vcmp.gt.s32.totalorder %v3158, 0
    %v3160 = vsel %vm3159, %v3158, 0
    %v3161 = vshrl.u32 %v3160, 5
    %v3162 = vand.u32 %v3160, 31
    %v3163 = vsub.s32 32, %v3162
    %v3164 = vshrl.u32 683565275, %v3163
    %v3165 = vshll.u32 683565275, %v3162
    %v3166 = vshrl.u32 2475754826, %v3163
    %v3167 = vor.u32 %v3165, %v3166
    %v3168 = vshll.u32 2475754826, %v3162
    %v3169 = vshrl.u32 2131351028, %v3163
    %v3170 = vor.u32 %v3168, %v3169
    %v3171 = vshll.u32 2131351028, %v3162
    %v3172 = vshrl.u32 2102212464, %v3163
    %v3173 = vor.u32 %v3171, %v3172
    %v3174 = vshll.u32 2102212464, %v3162
    %v3175 = vshrl.u32 920167782, %v3163
    %v3176 = vor.u32 %v3174, %v3175
    %v3177 = vshll.u32 920167782, %v3162
    %v3178 = vshrl.u32 1326507024, %v3163
    %v3179 = vor.u32 %v3177, %v3178
    %vm3180 = vcmp.lt.s32.totalorder %v3161, 1
    %vm3181 = vcmp.lt.s32.totalorder %v3161, 2
    %vm3182 = vcmp.lt.s32.totalorder %v3161, 3
    %vm3183 = vcmp.lt.s32.totalorder %v3161, 4
    %v3184 = vsel %vm3180, %v3164, %v3167
    %v3185 = vsel %vm3183, %v3173, 2102212464
    %v3186 = vsel %vm3182, %v3170, %v3185
    %v3187 = vsel %vm3181, %v3184, %v3186
    %v3188 = vsel %vm3180, %v3167, %v3170
    %v3189 = vsel %vm3183, %v3176, 920167782
    %v3190 = vsel %vm3182, %v3173, %v3189
    %v3191 = vsel %vm3181, %v3188, %v3190
    %v3192 = vsel %vm3180, %v3170, %v3173
    %v3193 = vsel %vm3183, %v3179, 1326507024
    %v3194 = vsel %vm3182, %v3176, %v3193
    %v3195 = vsel %vm3181, %v3192, %v3194
    %v3196 = vshll.u32 %v3156, 8
    %v3197 = vmul.u32.u64.compose %v3196, %v3195
    %v3198 = vextract.low.u32 %v3197
    %v3199 = vextract.high.u32 %v3197
    %v3200 = vmul.u32.u64.compose %v3196, %v3191
    %v3201 = vextract.low.u32 %v3200
    %v3202 = vextract.high.u32 %v3200
    %v3203 = vmul.u32 %v3196, %v3187
    %v3204 = vadd.s32 %v3199, %v3201
    %vm3205 = vc.u32 %v3199, %v3201
    %v3206 = vadd.s32 %v3202, 1
    %v3207 = vsel %vm3205, %v3206, %v3202
    %v3208 = vadd.s32 %v3203, %v3207
    %v3209 = vadd.s32 %v3208, 536870912
    %v3210 = vshrl.u32 %v3209, 30
    %v3211 = vshll.u32 %v3210, 30
    %v3212 = vsub.s32 %v3208, %v3211
    %vm3213 = vcmp.lt.s32.totalorder %v3212, 0
    %v3214 = vsub.s32 0, %v3212
    %v3215 = vsel %vm3213, %v3214, %v3212
    %v3216 = vclz %v3215
    %v3217 = vsub.s32 %v3216, 2
    %vm3218 = vcmp.gt.s32.totalorder 0, %v3217
    %v3219 = vsel %vm3218, 0, %v3217
    %v3220 = vsub.s32 32, %v3219
    %v3221 = vshll.u32 %v3212, %v3219
    %v3222 = vshrl.u32 %v3204, %v3220
    %v3223 = vor.u32 %v3221, %v3222
    %v3224 = vsub.s32 4294967266, %v3219
    %v3225 = vadd.s32 %v3224, 127
    %v3226 = vshll.u32 %v3225, 23
    %v3227 = vor.u32 4788187, %v3226
    %v3228 = vand.u32 2147483647, %v3227
    %v3230 = vcvt.s32.f32 %v3223
    %v3231 = vmul.f32 %v3230, %v3228
    %v3232 = vxor.u32 %v3231, 2147483648
    %v3233 = vsel %vm3150, %v3232, %v3231
    %v3234 = vsub.s32 4, %v3210
    %v3235 = vsel %vm3150, %v3234, %v3210
    %v3236 = vsel %vm3149, %v1896, %v3233
    %v3237 = vsel %vm3149, 0, %v3235
    %v3238 = vcosq.f32.pop %v3236
    %v3239 = vsinq.f32.pop %v3236
    %vm3240 = vweird.f32 %v1896
    %v3241 = vadd.s32 %v3237, 3
    %v3242 = vand.u32 %v3241, 3
    %vm3243 = vcmp.lt.s32.totalorder %v3242, 2
    %vm3244 = vcmp.eq.s32.totalorder %v3242, 0
    %v3245 = vxor.u32 %v3239, 2147483648
    %v3246 = vsel %vm3244, %v3238, %v3245
    %vm3247 = vcmp.eq.s32.totalorder %v3242, 2
    %v3248 = vxor.u32 %v3238, 2147483648
    %v3249 = vsel %vm3247, %v3248, %v3239
    %v3250 = vsel %vm3243, %v3246, %v3249
    %v3251 = vsel %vm3240, nan, %v3250
    %v3252 = vand.u32 2147483647, %v1897
    %vm3253 = vcmp.le.f32.partialorder %v3252, 0.7853982
    %vm3254 = vcmp.lt.s32.totalorder %v1897, 0
    %v3255 = vand.u32 %v1897, 2139095040
    %v3256 = vshrl.u32 %v3255, 23
    %v3257 = vsub.s32 %v3256, 127
    %v3258 = vand.u32 2147483647, %v1897
    %v3259 = vand.u32 %v3258, 8388607
    %v3260 = vor.u32 %v3259, 8388608
    %v3261 = vsub.s32 0, %v3260
    %v3262 = vadd.s32 %v3257, 1
    %vm3263 = vcmp.gt.s32.totalorder %v3262, 0
    %v3264 = vsel %vm3263, %v3262, 0
    %v3265 = vshrl.u32 %v3264, 5
    %v3266 = vand.u32 %v3264, 31
    %v3267 = vsub.s32 32, %v3266
    %v3268 = vshrl.u32 683565275, %v3267
    %v3269 = vshll.u32 683565275, %v3266
    %v3270 = vshrl.u32 2475754826, %v3267
    %v3271 = vor.u32 %v3269, %v3270
    %v3272 = vshll.u32 2475754826, %v3266
    %v3273 = vshrl.u32 2131351028, %v3267
    %v3274 = vor.u32 %v3272, %v3273
    %v3275 = vshll.u32 2131351028, %v3266
    %v3276 = vshrl.u32 2102212464, %v3267
    %v3277 = vor.u32 %v3275, %v3276
    %v3278 = vshll.u32 2102212464, %v3266
    %v3279 = vshrl.u32 920167782, %v3267
    %v3280 = vor.u32 %v3278, %v3279
    %v3281 = vshll.u32 920167782, %v3266
    %v3282 = vshrl.u32 1326507024, %v3267
    %v3283 = vor.u32 %v3281, %v3282
    %vm3284 = vcmp.lt.s32.totalorder %v3265, 1
    %vm3285 = vcmp.lt.s32.totalorder %v3265, 2
    %vm3286 = vcmp.lt.s32.totalorder %v3265, 3
    %vm3287 = vcmp.lt.s32.totalorder %v3265, 4
    %v3288 = vsel %vm3284, %v3268, %v3271
    %v3289 = vsel %vm3287, %v3277, 2102212464
    %v3290 = vsel %vm3286, %v3274, %v3289
    %v3291 = vsel %vm3285, %v3288, %v3290
    %v3292 = vsel %vm3284, %v3271, %v3274
    %v3293 = vsel %vm3287, %v3280, 920167782
    %v3294 = vsel %vm3286, %v3277, %v3293
    %v3295 = vsel %vm3285, %v3292, %v3294
    %v3296 = vsel %vm3284, %v3274, %v3277
    %v3297 = vsel %vm3287, %v3283, 1326507024
    %v3298 = vsel %vm3286, %v3280, %v3297
    %v3299 = vsel %vm3285, %v3296, %v3298
    %v3300 = vshll.u32 %v3260, 8
    %v3301 = vmul.u32.u64.compose %v3300, %v3299
    %v3302 = vextract.low.u32 %v3301
    %v3303 = vextract.high.u32 %v3301
    %v3304 = vmul.u32.u64.compose %v3300, %v3295
    %v3305 = vextract.low.u32 %v3304
    %v3306 = vextract.high.u32 %v3304
    %v3307 = vmul.u32 %v3300, %v3291
    %v3308 = vadd.s32 %v3303, %v3305
    %vm3309 = vc.u32 %v3303, %v3305
    %v3310 = vadd.s32 %v3306, 1
    %v3311 = vsel %vm3309, %v3310, %v3306
    %v3312 = vadd.s32 %v3307, %v3311
    %v3313 = vadd.s32 %v3312, 536870912
    %v3314 = vshrl.u32 %v3313, 30
    %v3315 = vshll.u32 %v3314, 30
    %v3316 = vsub.s32 %v3312, %v3315
    %vm3317 = vcmp.lt.s32.totalorder %v3316, 0
    %v3318 = vsub.s32 0, %v3316
    %v3319 = vsel %vm3317, %v3318, %v3316
    %v3320 = vclz %v3319
    %v3321 = vsub.s32 %v3320, 2
    %vm3322 = vcmp.gt.s32.totalorder 0, %v3321
    %v3323 = vsel %vm3322, 0, %v3321
    %v3324 = vsub.s32 32, %v3323
    %v3325 = vshll.u32 %v3316, %v3323
    %v3326 = vshrl.u32 %v3308, %v3324
    %v3327 = vor.u32 %v3325, %v3326
    %v3328 = vsub.s32 4294967266, %v3323
    %v3329 = vadd.s32 %v3328, 127
    %v3330 = vshll.u32 %v3329, 23
    %v3331 = vor.u32 4788187, %v3330
    %v3332 = vand.u32 2147483647, %v3331
    %v3334 = vcvt.s32.f32 %v3327
    %v3335 = vmul.f32 %v3334, %v3332
    %v3336 = vxor.u32 %v3335, 2147483648
    %v3337 = vsel %vm3254, %v3336, %v3335
    %v3338 = vsub.s32 4, %v3314
    %v3339 = vsel %vm3254, %v3338, %v3314
    %v3340 = vsel %vm3253, %v1897, %v3337
    %v3341 = vsel %vm3253, 0, %v3339
    %v3342 = vcosq.f32.pop %v3340
    %v3343 = vsinq.f32.pop %v3340
    %vm3344 = vweird.f32 %v1897
    %v3345 = vadd.s32 %v3341, 3
    %v3346 = vand.u32 %v3345, 3
    %vm3347 = vcmp.lt.s32.totalorder %v3346, 2
    %vm3348 = vcmp.eq.s32.totalorder %v3346, 0
    %v3349 = vxor.u32 %v3343, 2147483648
    %v3350 = vsel %vm3348, %v3342, %v3349
    %vm3351 = vcmp.eq.s32.totalorder %v3346, 2
    %v3352 = vxor.u32 %v3342, 2147483648
    %v3353 = vsel %vm3351, %v3352, %v3343
    %v3354 = vsel %vm3347, %v3350, %v3353
    %v3355 = vsel %vm3344, nan, %v3354
    %v3356 = vand.u32 2147483647, %v1898
    %vm3357 = vcmp.le.f32.partialorder %v3356, 0.7853982
    %vm3358 = vcmp.lt.s32.totalorder %v1898, 0
    %v3359 = vand.u32 %v1898, 2139095040
    %v3360 = vshrl.u32 %v3359, 23
    %v3361 = vsub.s32 %v3360, 127
    %v3362 = vand.u32 2147483647, %v1898
    %v3363 = vand.u32 %v3362, 8388607
    %v3364 = vor.u32 %v3363, 8388608
    %v3365 = vsub.s32 0, %v3364
    %v3366 = vadd.s32 %v3361, 1
    %vm3367 = vcmp.gt.s32.totalorder %v3366, 0
    %v3368 = vsel %vm3367, %v3366, 0
    %v3369 = vshrl.u32 %v3368, 5
    %v3370 = vand.u32 %v3368, 31
    %v3371 = vsub.s32 32, %v3370
    %v3372 = vshrl.u32 683565275, %v3371
    %v3373 = vshll.u32 683565275, %v3370
    %v3374 = vshrl.u32 2475754826, %v3371
    %v3375 = vor.u32 %v3373, %v3374
    %v3376 = vshll.u32 2475754826, %v3370
    %v3377 = vshrl.u32 2131351028, %v3371
    %v3378 = vor.u32 %v3376, %v3377
    %v3379 = vshll.u32 2131351028, %v3370
    %v3380 = vshrl.u32 2102212464, %v3371
    %v3381 = vor.u32 %v3379, %v3380
    %v3382 = vshll.u32 2102212464, %v3370
    %v3383 = vshrl.u32 920167782, %v3371
    %v3384 = vor.u32 %v3382, %v3383
    %v3385 = vshll.u32 920167782, %v3370
    %v3386 = vshrl.u32 1326507024, %v3371
    %v3387 = vor.u32 %v3385, %v3386
    %vm3388 = vcmp.lt.s32.totalorder %v3369, 1
    %vm3389 = vcmp.lt.s32.totalorder %v3369, 2
    %vm3390 = vcmp.lt.s32.totalorder %v3369, 3
    %vm3391 = vcmp.lt.s32.totalorder %v3369, 4
    %v3392 = vsel %vm3388, %v3372, %v3375
    %v3393 = vsel %vm3391, %v3381, 2102212464
    %v3394 = vsel %vm3390, %v3378, %v3393
    %v3395 = vsel %vm3389, %v3392, %v3394
    %v3396 = vsel %vm3388, %v3375, %v3378
    %v3397 = vsel %vm3391, %v3384, 920167782
    %v3398 = vsel %vm3390, %v3381, %v3397
    %v3399 = vsel %vm3389, %v3396, %v3398
    %v3400 = vsel %vm3388, %v3378, %v3381
    %v3401 = vsel %vm3391, %v3387, 1326507024
    %v3402 = vsel %vm3390, %v3384, %v3401
    %v3403 = vsel %vm3389, %v3400, %v3402
    %v3404 = vshll.u32 %v3364, 8
    %v3405 = vmul.u32.u64.compose %v3404, %v3403
    %v3406 = vextract.low.u32 %v3405
    %v3407 = vextract.high.u32 %v3405
    %v3408 = vmul.u32.u64.compose %v3404, %v3399
    %v3409 = vextract.low.u32 %v3408
    %v3410 = vextract.high.u32 %v3408
    %v3411 = vmul.u32 %v3404, %v3395
    %v3412 = vadd.s32 %v3407, %v3409
    %vm3413 = vc.u32 %v3407, %v3409
    %v3414 = vadd.s32 %v3410, 1
    %v3415 = vsel %vm3413, %v3414, %v3410
    %v3416 = vadd.s32 %v3411, %v3415
    %v3417 = vadd.s32 %v3416, 536870912
    %v3418 = vshrl.u32 %v3417, 30
    %v3419 = vshll.u32 %v3418, 30
    %v3420 = vsub.s32 %v3416, %v3419
    %vm3421 = vcmp.lt.s32.totalorder %v3420, 0
    %v3422 = vsub.s32 0, %v3420
    %v3423 = vsel %vm3421, %v3422, %v3420
    %v3424 = vclz %v3423
    %v3425 = vsub.s32 %v3424, 2
    %vm3426 = vcmp.gt.s32.totalorder 0, %v3425
    %v3427 = vsel %vm3426, 0, %v3425
    %v3428 = vsub.s32 32, %v3427
    %v3429 = vshll.u32 %v3420, %v3427
    %v3430 = vshrl.u32 %v3412, %v3428
    %v3431 = vor.u32 %v3429, %v3430
    %v3432 = vsub.s32 4294967266, %v3427
    %v3433 = vadd.s32 %v3432, 127
    %v3434 = vshll.u32 %v3433, 23
    %v3435 = vor.u32 4788187, %v3434
    %v3436 = vand.u32 2147483647, %v3435
    %v3438 = vcvt.s32.f32 %v3431
    %v3439 = vmul.f32 %v3438, %v3436
    %v3440 = vxor.u32 %v3439, 2147483648
    %v3441 = vsel %vm3358, %v3440, %v3439
    %v3442 = vsub.s32 4, %v3418
    %v3443 = vsel %vm3358, %v3442, %v3418
    %v3444 = vsel %vm3357, %v1898, %v3441
    %v3445 = vsel %vm3357, 0, %v3443
    %v3446 = vcosq.f32.pop %v3444
    %v3447 = vsinq.f32.pop %v3444
    %vm3448 = vweird.f32 %v1898
    %v3449 = vadd.s32 %v3445, 3
    %v3450 = vand.u32 %v3449, 3
    %vm3451 = vcmp.lt.s32.totalorder %v3450, 2
    %vm3452 = vcmp.eq.s32.totalorder %v3450, 0
    %v3453 = vxor.u32 %v3447, 2147483648
    %v3454 = vsel %vm3452, %v3446, %v3453
    %vm3455 = vcmp.eq.s32.totalorder %v3450, 2
    %v3456 = vxor.u32 %v3446, 2147483648
    %v3457 = vsel %vm3455, %v3456, %v3447
    %v3458 = vsel %vm3451, %v3454, %v3457
    %v3459 = vsel %vm3448, nan, %v3458
    %v3460 = vand.u32 2147483647, %v1899
    %vm3461 = vcmp.le.f32.partialorder %v3460, 0.7853982
    %vm3462 = vcmp.lt.s32.totalorder %v1899, 0
    %v3463 = vand.u32 %v1899, 2139095040
    %v3464 = vshrl.u32 %v3463, 23
    %v3465 = vsub.s32 %v3464, 127
    %v3466 = vand.u32 2147483647, %v1899
    %v3467 = vand.u32 %v3466, 8388607
    %v3468 = vor.u32 %v3467, 8388608
    %v3469 = vsub.s32 0, %v3468
    %v3470 = vadd.s32 %v3465, 1
    %vm3471 = vcmp.gt.s32.totalorder %v3470, 0
    %v3472 = vsel %vm3471, %v3470, 0
    %v3473 = vshrl.u32 %v3472, 5
    %v3474 = vand.u32 %v3472, 31
    %v3475 = vsub.s32 32, %v3474
    %v3476 = vshrl.u32 683565275, %v3475
    %v3477 = vshll.u32 683565275, %v3474
    %v3478 = vshrl.u32 2475754826, %v3475
    %v3479 = vor.u32 %v3477, %v3478
    %v3480 = vshll.u32 2475754826, %v3474
    %v3481 = vshrl.u32 2131351028, %v3475
    %v3482 = vor.u32 %v3480, %v3481
    %v3483 = vshll.u32 2131351028, %v3474
    %v3484 = vshrl.u32 2102212464, %v3475
    %v3485 = vor.u32 %v3483, %v3484
    %v3486 = vshll.u32 2102212464, %v3474
    %v3487 = vshrl.u32 920167782, %v3475
    %v3488 = vor.u32 %v3486, %v3487
    %v3489 = vshll.u32 920167782, %v3474
    %v3490 = vshrl.u32 1326507024, %v3475
    %v3491 = vor.u32 %v3489, %v3490
    %vm3492 = vcmp.lt.s32.totalorder %v3473, 1
    %vm3493 = vcmp.lt.s32.totalorder %v3473, 2
    %vm3494 = vcmp.lt.s32.totalorder %v3473, 3
    %vm3495 = vcmp.lt.s32.totalorder %v3473, 4
    %v3496 = vsel %vm3492, %v3476, %v3479
    %v3497 = vsel %vm3495, %v3485, 2102212464
    %v3498 = vsel %vm3494, %v3482, %v3497
    %v3499 = vsel %vm3493, %v3496, %v3498
    %v3500 = vsel %vm3492, %v3479, %v3482
    %v3501 = vsel %vm3495, %v3488, 920167782
    %v3502 = vsel %vm3494, %v3485, %v3501
    %v3503 = vsel %vm3493, %v3500, %v3502
    %v3504 = vsel %vm3492, %v3482, %v3485
    %v3505 = vsel %vm3495, %v3491, 1326507024
    %v3506 = vsel %vm3494, %v3488, %v3505
    %v3507 = vsel %vm3493, %v3504, %v3506
    %v3508 = vshll.u32 %v3468, 8
    %v3509 = vmul.u32.u64.compose %v3508, %v3507
    %v3510 = vextract.low.u32 %v3509
    %v3511 = vextract.high.u32 %v3509
    %v3512 = vmul.u32.u64.compose %v3508, %v3503
    %v3513 = vextract.low.u32 %v3512
    %v3514 = vextract.high.u32 %v3512
    %v3515 = vmul.u32 %v3508, %v3499
    %v3516 = vadd.s32 %v3511, %v3513
    %vm3517 = vc.u32 %v3511, %v3513
    %v3518 = vadd.s32 %v3514, 1
    %v3519 = vsel %vm3517, %v3518, %v3514
    %v3520 = vadd.s32 %v3515, %v3519
    %v3521 = vadd.s32 %v3520, 536870912
    %v3522 = vshrl.u32 %v3521, 30
    %v3523 = vshll.u32 %v3522, 30
    %v3524 = vsub.s32 %v3520, %v3523
    %vm3525 = vcmp.lt.s32.totalorder %v3524, 0
    %v3526 = vsub.s32 0, %v3524
    %v3527 = vsel %vm3525, %v3526, %v3524
    %v3528 = vclz %v3527
    %v3529 = vsub.s32 %v3528, 2
    %vm3530 = vcmp.gt.s32.totalorder 0, %v3529
    %v3531 = vsel %vm3530, 0, %v3529
    %v3532 = vsub.s32 32, %v3531
    %v3533 = vshll.u32 %v3524, %v3531
    %v3534 = vshrl.u32 %v3516, %v3532
    %v3535 = vor.u32 %v3533, %v3534
    %v3536 = vsub.s32 4294967266, %v3531
    %v3537 = vadd.s32 %v3536, 127
    %v3538 = vshll.u32 %v3537, 23
    %v3539 = vor.u32 4788187, %v3538
    %v3540 = vand.u32 2147483647, %v3539
    %v3542 = vcvt.s32.f32 %v3535
    %v3543 = vmul.f32 %v3542, %v3540
    %v3544 = vxor.u32 %v3543, 2147483648
    %v3545 = vsel %vm3462, %v3544, %v3543
    %v3546 = vsub.s32 4, %v3522
    %v3547 = vsel %vm3462, %v3546, %v3522
    %v3548 = vsel %vm3461, %v1899, %v3545
    %v3549 = vsel %vm3461, 0, %v3547
    %v3550 = vcosq.f32.pop %v3548
    %v3551 = vsinq.f32.pop %v3548
    %vm3552 = vweird.f32 %v1899
    %v3553 = vadd.s32 %v3549, 3
    %v3554 = vand.u32 %v3553, 3
    %vm3555 = vcmp.lt.s32.totalorder %v3554, 2
    %vm3556 = vcmp.eq.s32.totalorder %v3554, 0
    %v3557 = vxor.u32 %v3551, 2147483648
    %v3558 = vsel %vm3556, %v3550, %v3557
    %vm3559 = vcmp.eq.s32.totalorder %v3554, 2
    %v3560 = vxor.u32 %v3550, 2147483648
    %v3561 = vsel %vm3559, %v3560, %v3551
    %v3562 = vsel %vm3555, %v3558, %v3561
    %v3563 = vsel %vm3552, nan, %v3562
    %s3564 = scalar_lea.vmem [#allocation5], 128
    %3565 = vst [vmem:[%s3564] sm:$0xff] %v2003
    %3566 = vst [vmem:[%s3564 + $0x8] sm:$0xff] %v2107
    %3567 = vst [vmem:[%s3564 + $0x10] sm:$0xff] %v2211
    %3568 = vst [vmem:[%s3564 + $0x18] sm:$0xff] %v2315
    %3569 = vst [vmem:[%s3564 + $0x20] sm:$0xff] %v2419
    %3570 = vst [vmem:[%s3564 + $0x28] sm:$0xff] %v2523
    %3571 = vst [vmem:[%s3564 + $0x30] sm:$0xff] %v2627
    %3572 = vst [vmem:[%s3564 + $0x38] sm:$0xff] %v2731
    %3573 = vst [vmem:[%s3564 + $0x40] sm:$0xff] %v2835
    %3574 = vst [vmem:[%s3564 + $0x48] sm:$0xff] %v2939
    %3575 = vst [vmem:[%s3564 + $0x50] sm:$0xff] %v3043
    %3576 = vst [vmem:[%s3564 + $0x58] sm:$0xff] %v3147
    %3577 = vst [vmem:[%s3564 + $0x60] sm:$0xff] %v3251
    %3578 = vst [vmem:[%s3564 + $0x68] sm:$0xff] %v3355
    %3579 = vst [vmem:[%s3564 + $0x70] sm:$0xff] %v3459
    %3580 = vst [vmem:[%s3564 + $0x78] sm:$0xff] %v3563
    // Predicated region
    $region10: #{tpu_custom_call.1} parent=1 // pred_check
      _
    $region11: #{tpu_custom_call.1} parent=1 // pred_check_branch
      %3582 = sbr.rel (0) target = $region13
    $region12: #{tpu_custom_call.1} parent=1 // pred_region
      %s3584 = ssub.s32 4096, 4096
      %3585 = vsyncadd [#allocation4], %s3584
      %s3586 = sshll.u32 [#allocation5], 4
      %s3587 = int_to_ptr.vmem [resolvable:$true] %s3586
      %3592 = dma.vmem_to_hbm [thread:$0]  %s3587, 4096, %s1, [#allocation4], 256, 256, 16
    $region13: #{tpu_custom_call.1} parent=1 // pred_fallthru
      _
    // Predicated region
    $region14: #{tpu_custom_call.1} parent=1 // pred_check
      _
    $region15: #{tpu_custom_call.1} parent=1 // pred_check_branch
      %3594 = sbr.rel (0) target = $region17
    $region16: #{tpu_custom_call.1} parent=1 // pred_region
      %3595 = dma.done [#allocation4], 4096
    $region17: #{tpu_custom_call.1} parent=1 // pred_fallthru
      _
    %3596 = vsyncpa [#allocation3], 1
    %3597 = vsyncpa [#allocation4], 1

</llo_original>
